<compile_context>
chip_gen: v5e
topology: v5e:2x2
jax: 0.10.0
libtpu: 0.0.40
codegen_flags: <defaults>
</compile_context>

<pallas_src>
import jax
import jax.numpy as jnp
from jax.experimental import pallas as pl
from jax.experimental.pallas import tpu as pltpu

IMG_SIZE = (1, 28, 28)
LATENT_DIM = 100
LATENT_PAD = 128               # latent zero-padded to lane width
IMG_FLAT = 1 * 28 * 28         # 784
IMG_FLAT_PAD = 896             # 7 * 128: lane-dense output width
BN_EPS = 0.8
LEAKY_SLOPE = 0.2

# Padded layer widths used by the kernel.
DIMS = (LATENT_PAD, 128, 256, 512, 1024, IMG_FLAT_PAD)


def _leaky_relu(h):
    return jnp.where(h > 0, h, LEAKY_SLOPE * h)


def _batchnorm_train(h, gamma, beta):
    # BatchNorm1d in training mode: batch mean / biased batch variance, f32 math.
    mu = jnp.mean(h, axis=0, keepdims=True)
    var = jnp.mean((h - mu) * (h - mu), axis=0, keepdims=True)
    return (h - mu) * jax.lax.rsqrt(var + BN_EPS) * gamma + beta


def generator_kernel(
    x_ref,
    w1_ref, b1_ref,
    w2_ref, b2_ref, g2_ref, be2_ref,
    w3_ref, b3_ref, g3_ref, be3_ref,
    w4_ref, b4_ref, g4_ref, be4_ref,
    w5_ref, b5_ref,
    out_ref,
):
    # x is bf16 with zero-padded latent columns; weights are bf16; biases,
    # BN affine params and all elementwise math are f32.
    x = x_ref[...]

    # block(latent_dim, 128, normalize=False)
    h = jnp.dot(x, w1_ref[...], preferred_element_type=jnp.float32) + b1_ref[...]
    h = _leaky_relu(h)

    # block(128, 256)
    h = jnp.dot(h.astype(jnp.bfloat16), w2_ref[...],
                preferred_element_type=jnp.float32) + b2_ref[...]
    h = _leaky_relu(_batchnorm_train(h, g2_ref[...], be2_ref[...]))

    # block(256, 512)
    h = jnp.dot(h.astype(jnp.bfloat16), w3_ref[...],
                preferred_element_type=jnp.float32) + b3_ref[...]
    h = _leaky_relu(_batchnorm_train(h, g3_ref[...], be3_ref[...]))

    # block(512, 1024)
    h = jnp.dot(h.astype(jnp.bfloat16), w4_ref[...],
                preferred_element_type=jnp.float32) + b4_ref[...]
    h = _leaky_relu(_batchnorm_train(h, g4_ref[...], be4_ref[...]))

    # Linear(1024, 784->896 padded) -> Tanh (f32)
    h = jnp.dot(h.astype(jnp.bfloat16), w5_ref[...],
                preferred_element_type=jnp.float32) + b5_ref[...]
    out_ref[...] = jnp.tanh(h)


def init_params(key):
    """Deterministic parameter init (PyTorch-Linear-like uniform fan-in scaling).

    Weights are stored (in, out), bf16, zero-padded to the lane-aligned DIMS.
    Biases / BN params stay f32 (added after the f32-accumulated matmul).
    """
    true_dims = [LATENT_DIM, 128, 256, 512, 1024, IMG_FLAT]
    params = {}
    keys = jax.random.split(key, 2 * (len(true_dims) - 1))
    for i in range(len(true_dims) - 1):
        fan_in, fan_out = true_dims[i], true_dims[i + 1]
        pad_in, pad_out = DIMS[i], DIMS[i + 1]
        bound = 1.0 / jnp.sqrt(fan_in)
        w = jax.random.uniform(keys[2 * i], (fan_in, fan_out),
                               jnp.float32, -bound, bound)
        b = jax.random.uniform(keys[2 * i + 1], (1, fan_out),
                               jnp.float32, -bound, bound)
        # Zero-pad to lane-aligned shapes (padding rows/cols contribute 0).
        w = jnp.pad(w, ((0, pad_in - fan_in), (0, pad_out - fan_out)))
        b = jnp.pad(b, ((0, 0), (0, pad_out - fan_out)))
        params[f"w{i + 1}"] = w.astype(jnp.bfloat16)
        params[f"b{i + 1}"] = b
    # BatchNorm affine params: PyTorch default init -> gamma=1, beta=0
    for i, f in zip((2, 3, 4), (256, 512, 1024)):
        params[f"g{i}"] = jnp.ones((1, f), jnp.float32)
        params[f"be{i}"] = jnp.zeros((1, f), jnp.float32)
    return params


def _nbytes(x):
    return x.size * jnp.dtype(x.dtype).itemsize


def generator_forward(x, params):
    B = x.shape[0]
    # Zero-pad latent 100 -> 128 and feed bf16 to the MXU.
    x_pad = jnp.pad(x, ((0, 0), (0, LATENT_PAD - LATENT_DIM))).astype(jnp.bfloat16)

    args = (
        x_pad,
        params["w1"], params["b1"],
        params["w2"], params["b2"], params["g2"], params["be2"],
        params["w3"], params["b3"], params["g3"], params["be3"],
        params["w4"], params["b4"], params["g4"], params["be4"],
        params["w5"], params["b5"],
    )

    # --- Resource accounting ----------------------------------------------
    param_bytes = sum(_nbytes(a) for a in args)
    # f32 activations (and their bf16 copies) for every layer + output slab.
    act_bytes = B * sum(DIMS) * 4 + B * sum(DIMS) * 2 + B * IMG_FLAT_PAD * 4
    # Double-buffered inputs + generous headroom, clamped to a v7x-safe 48 MiB.
    vmem_limit = min(max(2 * (param_bytes + act_bytes) + (8 << 20), 16 << 20),
                     48 << 20)

    flops = 2 * B * sum(DIMS[i] * DIMS[i + 1] for i in range(len(DIMS) - 1))
    transcendentals = B * IMG_FLAT_PAD + (256 + 512 + 1024)   # tanh + BN rsqrt
    bytes_accessed = param_bytes + _nbytes(x_pad) + B * IMG_FLAT_PAD * 4

    vmem_spec = pl.BlockSpec(memory_space=pltpu.MemorySpace.VMEM)
    out_flat = pl.pallas_call(
        generator_kernel,
        out_shape=jax.ShapeDtypeStruct((B, IMG_FLAT_PAD), jnp.float32),
        in_specs=[vmem_spec] * len(args),
        out_specs=vmem_spec,
        compiler_params=pltpu.CompilerParams(vmem_limit_bytes=vmem_limit),
        cost_estimate=pl.CostEstimate(
            flops=flops,
            transcendentals=transcendentals,
            bytes_accessed=bytes_accessed,
        ),
    )(*args)
    # Drop the lane padding, then reshape to NCHW like the PyTorch module.
    return out_flat[:, :IMG_FLAT].reshape(B, *IMG_SIZE)


if __name__ == "__main__":
    key = jax.random.PRNGKey(0)
    pkey, xkey = jax.random.split(key)
    params = init_params(pkey)

    batch = 8
    z = jax.random.normal(xkey, (batch, LATENT_DIM), jnp.float32)

    img = generator_forward(z, params)
    jax.block_until_ready(img)

    assert img.shape == (batch, 1, 28, 28), img.shape
    assert img.dtype == jnp.float32
    assert bool(jnp.all(jnp.isfinite(img)))
    print("KERNEL_OK")
</pallas_src>

<mosaic_0001>
module attributes {stable_mosaic.version = 11 : i64} {
  func.func @generator_kernel(%arg0: memref<8x128xbf16, #tpu.memory_space<vmem>>, %arg1: memref<128x128xbf16, #tpu.memory_space<vmem>>, %arg2: memref<1x128xf32, #tpu.memory_space<vmem>>, %arg3: memref<128x256xbf16, #tpu.memory_space<vmem>>, %arg4: memref<1x256xf32, #tpu.memory_space<vmem>>, %arg5: memref<1x256xf32, #tpu.memory_space<vmem>>, %arg6: memref<1x256xf32, #tpu.memory_space<vmem>>, %arg7: memref<256x512xbf16, #tpu.memory_space<vmem>>, %arg8: memref<1x512xf32, #tpu.memory_space<vmem>>, %arg9: memref<1x512xf32, #tpu.memory_space<vmem>>, %arg10: memref<1x512xf32, #tpu.memory_space<vmem>>, %arg11: memref<512x1024xbf16, #tpu.memory_space<vmem>>, %arg12: memref<1x1024xf32, #tpu.memory_space<vmem>>, %arg13: memref<1x1024xf32, #tpu.memory_space<vmem>>, %arg14: memref<1x1024xf32, #tpu.memory_space<vmem>>, %arg15: memref<1024x896xbf16, #tpu.memory_space<vmem>>, %arg16: memref<1x896xf32, #tpu.memory_space<vmem>>, %arg17: memref<8x896xf32, #tpu.memory_space<vmem>>) attributes {dimension_semantics = [], scalar_prefetch = 0 : i64, scratch_operands = 0 : i64, tpu.core_type = #tpu.core_type<tc>} {
    %c0 = arith.constant 0 : index
    %c0_0 = arith.constant 0 : index
    %0 = vector.load %arg0[%c0, %c0_0] : memref<8x128xbf16, #tpu.memory_space<vmem>>, vector<8x128xbf16>
    %c0_1 = arith.constant 0 : index
    %c0_2 = arith.constant 0 : index
    %1 = vector.load %arg1[%c0_1, %c0_2] : memref<128x128xbf16, #tpu.memory_space<vmem>>, vector<128x128xbf16>
    %cst = arith.constant dense<0.000000e+00> : vector<8x128xf32>
    %2 = tpu.matmul %0, %1, %cst {dimension_numbers = #tpu.dot_dimension_numbers<[1], [0], [0], [1], [0, 0, 1, 1], [], []>} : vector<8x128xbf16>, vector<128x128xbf16>, vector<8x128xf32> -> vector<8x128xf32>
    %c0_3 = arith.constant 0 : index
    %c0_4 = arith.constant 0 : index
    %3 = vector.load %arg2[%c0_3, %c0_4] : memref<1x128xf32, #tpu.memory_space<vmem>>, vector<1x128xf32>
    %4 = vector.broadcast %3 : vector<1x128xf32> to vector<8x128xf32>
    %5 = arith.addf %2, %4 : vector<8x128xf32>
    %cst_5 = arith.constant 0.000000e+00 : f32
    %6 = vector.broadcast %cst_5 : f32 to vector<8x128xf32>
    %7 = arith.cmpf ogt, %5, %6 : vector<8x128xf32>
    %cst_6 = arith.constant 2.000000e-01 : f32
    %8 = vector.broadcast %cst_6 : f32 to vector<8x128xf32>
    %9 = arith.mulf %8, %5 : vector<8x128xf32>
    %10 = arith.select %7, %5, %9 : vector<8x128xi1>, vector<8x128xf32>
    %11 = arith.truncf %10 : vector<8x128xf32> to vector<8x128xbf16>
    %c0_7 = arith.constant 0 : index
    %c0_8 = arith.constant 0 : index
    %12 = vector.load %arg3[%c0_7, %c0_8] : memref<128x256xbf16, #tpu.memory_space<vmem>>, vector<128x256xbf16>
    %cst_9 = arith.constant dense<0.000000e+00> : vector<8x256xf32>
    %13 = tpu.matmul %11, %12, %cst_9 {dimension_numbers = #tpu.dot_dimension_numbers<[1], [0], [0], [1], [0, 0, 1, 1], [], []>} : vector<8x128xbf16>, vector<128x256xbf16>, vector<8x256xf32> -> vector<8x256xf32>
    %c0_10 = arith.constant 0 : index
    %c0_11 = arith.constant 0 : index
    %14 = vector.load %arg4[%c0_10, %c0_11] : memref<1x256xf32, #tpu.memory_space<vmem>>, vector<1x256xf32>
    %15 = vector.broadcast %14 : vector<1x256xf32> to vector<8x256xf32>
    %16 = arith.addf %13, %15 : vector<8x256xf32>
    %c0_12 = arith.constant 0 : index
    %c0_13 = arith.constant 0 : index
    %17 = vector.load %arg5[%c0_12, %c0_13] : memref<1x256xf32, #tpu.memory_space<vmem>>, vector<1x256xf32>
    %c0_14 = arith.constant 0 : index
    %c0_15 = arith.constant 0 : index
    %18 = vector.load %arg6[%c0_14, %c0_15] : memref<1x256xf32, #tpu.memory_space<vmem>>, vector<1x256xf32>
    %cst_16 = arith.constant dense<0.000000e+00> : vector<256xf32>
    %19 = vector.multi_reduction <add>, %16, %cst_16 [0] : vector<8x256xf32> to vector<256xf32>
    %20 = vector.shape_cast %19 : vector<256xf32> to vector<1x256xf32>
    %cst_17 = arith.constant 8.000000e+00 : f32
    %21 = vector.broadcast %cst_17 : f32 to vector<1x256xf32>
    %22 = arith.divf %20, %21 : vector<1x256xf32>
    %23 = vector.broadcast %22 : vector<1x256xf32> to vector<8x256xf32>
    %24 = arith.subf %16, %23 : vector<8x256xf32>
    %25 = vector.broadcast %22 : vector<1x256xf32> to vector<8x256xf32>
    %26 = arith.subf %16, %25 : vector<8x256xf32>
    %27 = arith.mulf %24, %26 : vector<8x256xf32>
    %cst_18 = arith.constant dense<0.000000e+00> : vector<256xf32>
    %28 = vector.multi_reduction <add>, %27, %cst_18 [0] : vector<8x256xf32> to vector<256xf32>
    %29 = vector.shape_cast %28 : vector<256xf32> to vector<1x256xf32>
    %cst_19 = arith.constant 8.000000e+00 : f32
    %30 = vector.broadcast %cst_19 : f32 to vector<1x256xf32>
    %31 = arith.divf %29, %30 : vector<1x256xf32>
    %32 = vector.broadcast %22 : vector<1x256xf32> to vector<8x256xf32>
    %33 = arith.subf %16, %32 : vector<8x256xf32>
    %cst_20 = arith.constant 8.000000e-01 : f32
    %34 = vector.broadcast %cst_20 : f32 to vector<1x256xf32>
    %35 = arith.addf %31, %34 : vector<1x256xf32>
    %36 = math.rsqrt %35 : vector<1x256xf32>
    %37 = vector.broadcast %36 : vector<1x256xf32> to vector<8x256xf32>
    %38 = arith.mulf %33, %37 : vector<8x256xf32>
    %39 = vector.broadcast %17 : vector<1x256xf32> to vector<8x256xf32>
    %40 = arith.mulf %38, %39 : vector<8x256xf32>
    %41 = vector.broadcast %18 : vector<1x256xf32> to vector<8x256xf32>
    %42 = arith.addf %40, %41 : vector<8x256xf32>
    %cst_21 = arith.constant 0.000000e+00 : f32
    %43 = vector.broadcast %cst_21 : f32 to vector<8x256xf32>
    %44 = arith.cmpf ogt, %42, %43 : vector<8x256xf32>
    %cst_22 = arith.constant 2.000000e-01 : f32
    %45 = vector.broadcast %cst_22 : f32 to vector<8x256xf32>
    %46 = arith.mulf %45, %42 : vector<8x256xf32>
    %47 = arith.select %44, %42, %46 : vector<8x256xi1>, vector<8x256xf32>
    %48 = arith.truncf %47 : vector<8x256xf32> to vector<8x256xbf16>
    %c0_23 = arith.constant 0 : index
    %c0_24 = arith.constant 0 : index
    %49 = vector.load %arg7[%c0_23, %c0_24] : memref<256x512xbf16, #tpu.memory_space<vmem>>, vector<256x512xbf16>
    %cst_25 = arith.constant dense<0.000000e+00> : vector<8x512xf32>
    %50 = tpu.matmul %48, %49, %cst_25 {dimension_numbers = #tpu.dot_dimension_numbers<[1], [0], [0], [1], [0, 0, 1, 1], [], []>} : vector<8x256xbf16>, vector<256x512xbf16>, vector<8x512xf32> -> vector<8x512xf32>
    %c0_26 = arith.constant 0 : index
    %c0_27 = arith.constant 0 : index
    %51 = vector.load %arg8[%c0_26, %c0_27] : memref<1x512xf32, #tpu.memory_space<vmem>>, vector<1x512xf32>
    %52 = vector.broadcast %51 : vector<1x512xf32> to vector<8x512xf32>
    %53 = arith.addf %50, %52 : vector<8x512xf32>
    %c0_28 = arith.constant 0 : index
    %c0_29 = arith.constant 0 : index
    %54 = vector.load %arg9[%c0_28, %c0_29] : memref<1x512xf32, #tpu.memory_space<vmem>>, vector<1x512xf32>
    %c0_30 = arith.constant 0 : index
    %c0_31 = arith.constant 0 : index
    %55 = vector.load %arg10[%c0_30, %c0_31] : memref<1x512xf32, #tpu.memory_space<vmem>>, vector<1x512xf32>
    %cst_32 = arith.constant dense<0.000000e+00> : vector<512xf32>
    %56 = vector.multi_reduction <add>, %53, %cst_32 [0] : vector<8x512xf32> to vector<512xf32>
    %57 = vector.shape_cast %56 : vector<512xf32> to vector<1x512xf32>
    %cst_33 = arith.constant 8.000000e+00 : f32
    %58 = vector.broadcast %cst_33 : f32 to vector<1x512xf32>
    %59 = arith.divf %57, %58 : vector<1x512xf32>
    %60 = vector.broadcast %59 : vector<1x512xf32> to vector<8x512xf32>
    %61 = arith.subf %53, %60 : vector<8x512xf32>
    %62 = vector.broadcast %59 : vector<1x512xf32> to vector<8x512xf32>
    %63 = arith.subf %53, %62 : vector<8x512xf32>
    %64 = arith.mulf %61, %63 : vector<8x512xf32>
    %cst_34 = arith.constant dense<0.000000e+00> : vector<512xf32>
    %65 = vector.multi_reduction <add>, %64, %cst_34 [0] : vector<8x512xf32> to vector<512xf32>
    %66 = vector.shape_cast %65 : vector<512xf32> to vector<1x512xf32>
    %cst_35 = arith.constant 8.000000e+00 : f32
    %67 = vector.broadcast %cst_35 : f32 to vector<1x512xf32>
    %68 = arith.divf %66, %67 : vector<1x512xf32>
    %69 = vector.broadcast %59 : vector<1x512xf32> to vector<8x512xf32>
    %70 = arith.subf %53, %69 : vector<8x512xf32>
    %cst_36 = arith.constant 8.000000e-01 : f32
    %71 = vector.broadcast %cst_36 : f32 to vector<1x512xf32>
    %72 = arith.addf %68, %71 : vector<1x512xf32>
    %73 = math.rsqrt %72 : vector<1x512xf32>
    %74 = vector.broadcast %73 : vector<1x512xf32> to vector<8x512xf32>
    %75 = arith.mulf %70, %74 : vector<8x512xf32>
    %76 = vector.broadcast %54 : vector<1x512xf32> to vector<8x512xf32>
    %77 = arith.mulf %75, %76 : vector<8x512xf32>
    %78 = vector.broadcast %55 : vector<1x512xf32> to vector<8x512xf32>
    %79 = arith.addf %77, %78 : vector<8x512xf32>
    %cst_37 = arith.constant 0.000000e+00 : f32
    %80 = vector.broadcast %cst_37 : f32 to vector<8x512xf32>
    %81 = arith.cmpf ogt, %79, %80 : vector<8x512xf32>
    %cst_38 = arith.constant 2.000000e-01 : f32
    %82 = vector.broadcast %cst_38 : f32 to vector<8x512xf32>
    %83 = arith.mulf %82, %79 : vector<8x512xf32>
    %84 = arith.select %81, %79, %83 : vector<8x512xi1>, vector<8x512xf32>
    %85 = arith.truncf %84 : vector<8x512xf32> to vector<8x512xbf16>
    %c0_39 = arith.constant 0 : index
    %c0_40 = arith.constant 0 : index
    %86 = vector.load %arg11[%c0_39, %c0_40] : memref<512x1024xbf16, #tpu.memory_space<vmem>>, vector<512x1024xbf16>
    %cst_41 = arith.constant dense<0.000000e+00> : vector<8x1024xf32>
    %87 = tpu.matmul %85, %86, %cst_41 {dimension_numbers = #tpu.dot_dimension_numbers<[1], [0], [0], [1], [0, 0, 1, 1], [], []>} : vector<8x512xbf16>, vector<512x1024xbf16>, vector<8x1024xf32> -> vector<8x1024xf32>
    %c0_42 = arith.constant 0 : index
    %c0_43 = arith.constant 0 : index
    %88 = vector.load %arg12[%c0_42, %c0_43] : memref<1x1024xf32, #tpu.memory_space<vmem>>, vector<1x1024xf32>
    %89 = vector.broadcast %88 : vector<1x1024xf32> to vector<8x1024xf32>
    %90 = arith.addf %87, %89 : vector<8x1024xf32>
    %c0_44 = arith.constant 0 : index
    %c0_45 = arith.constant 0 : index
    %91 = vector.load %arg13[%c0_44, %c0_45] : memref<1x1024xf32, #tpu.memory_space<vmem>>, vector<1x1024xf32>
    %c0_46 = arith.constant 0 : index
    %c0_47 = arith.constant 0 : index
    %92 = vector.load %arg14[%c0_46, %c0_47] : memref<1x1024xf32, #tpu.memory_space<vmem>>, vector<1x1024xf32>
    %cst_48 = arith.constant dense<0.000000e+00> : vector<1024xf32>
    %93 = vector.multi_reduction <add>, %90, %cst_48 [0] : vector<8x1024xf32> to vector<1024xf32>
    %94 = vector.shape_cast %93 : vector<1024xf32> to vector<1x1024xf32>
    %cst_49 = arith.constant 8.000000e+00 : f32
    %95 = vector.broadcast %cst_49 : f32 to vector<1x1024xf32>
    %96 = arith.divf %94, %95 : vector<1x1024xf32>
    %97 = vector.broadcast %96 : vector<1x1024xf32> to vector<8x1024xf32>
    %98 = arith.subf %90, %97 : vector<8x1024xf32>
    %99 = vector.broadcast %96 : vector<1x1024xf32> to vector<8x1024xf32>
    %100 = arith.subf %90, %99 : vector<8x1024xf32>
    %101 = arith.mulf %98, %100 : vector<8x1024xf32>
    %cst_50 = arith.constant dense<0.000000e+00> : vector<1024xf32>
    %102 = vector.multi_reduction <add>, %101, %cst_50 [0] : vector<8x1024xf32> to vector<1024xf32>
    %103 = vector.shape_cast %102 : vector<1024xf32> to vector<1x1024xf32>
    %cst_51 = arith.constant 8.000000e+00 : f32
    %104 = vector.broadcast %cst_51 : f32 to vector<1x1024xf32>
    %105 = arith.divf %103, %104 : vector<1x1024xf32>
    %106 = vector.broadcast %96 : vector<1x1024xf32> to vector<8x1024xf32>
    %107 = arith.subf %90, %106 : vector<8x1024xf32>
    %cst_52 = arith.constant 8.000000e-01 : f32
    %108 = vector.broadcast %cst_52 : f32 to vector<1x1024xf32>
    %109 = arith.addf %105, %108 : vector<1x1024xf32>
    %110 = math.rsqrt %109 : vector<1x1024xf32>
    %111 = vector.broadcast %110 : vector<1x1024xf32> to vector<8x1024xf32>
    %112 = arith.mulf %107, %111 : vector<8x1024xf32>
    %113 = vector.broadcast %91 : vector<1x1024xf32> to vector<8x1024xf32>
    %114 = arith.mulf %112, %113 : vector<8x1024xf32>
    %115 = vector.broadcast %92 : vector<1x1024xf32> to vector<8x1024xf32>
    %116 = arith.addf %114, %115 : vector<8x1024xf32>
    %cst_53 = arith.constant 0.000000e+00 : f32
    %117 = vector.broadcast %cst_53 : f32 to vector<8x1024xf32>
    %118 = arith.cmpf ogt, %116, %117 : vector<8x1024xf32>
    %cst_54 = arith.constant 2.000000e-01 : f32
    %119 = vector.broadcast %cst_54 : f32 to vector<8x1024xf32>
    %120 = arith.mulf %119, %116 : vector<8x1024xf32>
    %121 = arith.select %118, %116, %120 : vector<8x1024xi1>, vector<8x1024xf32>
    %122 = arith.truncf %121 : vector<8x1024xf32> to vector<8x1024xbf16>
    %c0_55 = arith.constant 0 : index
    %c0_56 = arith.constant 0 : index
    %123 = vector.load %arg15[%c0_55, %c0_56] : memref<1024x896xbf16, #tpu.memory_space<vmem>>, vector<1024x896xbf16>
    %cst_57 = arith.constant dense<0.000000e+00> : vector<8x896xf32>
    %124 = tpu.matmul %122, %123, %cst_57 {dimension_numbers = #tpu.dot_dimension_numbers<[1], [0], [0], [1], [0, 0, 1, 1], [], []>} : vector<8x1024xbf16>, vector<1024x896xbf16>, vector<8x896xf32> -> vector<8x896xf32>
    %c0_58 = arith.constant 0 : index
    %c0_59 = arith.constant 0 : index
    %125 = vector.load %arg16[%c0_58, %c0_59] : memref<1x896xf32, #tpu.memory_space<vmem>>, vector<1x896xf32>
    %126 = vector.broadcast %125 : vector<1x896xf32> to vector<8x896xf32>
    %127 = arith.addf %124, %126 : vector<8x896xf32>
    %128 = math.tanh %127 : vector<8x896xf32>
    %c0_60 = arith.constant 0 : index
    %c0_61 = arith.constant 0 : index
    %129 = vector.load %arg17[%c0_60, %c0_61] : memref<8x896xf32, #tpu.memory_space<vmem>>, vector<8x896xf32>
    tpu.vector_store %arg17[%c0_60, %c0_61], %128 {strides = array<i32>} : memref<8x896xf32, #tpu.memory_space<vmem>>, vector<8x896xf32>,
    return
  }
}

</mosaic_0001>

<llo_original>
// kernel: tpu_custom_call.1
$region0: #{tpu_custom_call.1}
  #allocation0 [shape = 'u32[]', space=smem, size = 0x4, offset = 0x4, fixed_abs, tag = 'smem constant byte address 0x4 - core index']
  #allocation1 [shape = 'u32[72,128]{1,0:T(1,128)}', space=vmem, size = 0x9000, scoped, tag = 'internal scratch']
  %s0 = inlined_call_operand.hbm [shape: bf16[8,128], index: 0, kind: input, shape index: {}]
  %s1 = inlined_call_operand.hbm [shape: bf16[128,128], index: 1, kind: input, shape index: {}]
  %s2 = inlined_call_operand.hbm [shape: f32[1,128], index: 2, kind: input, shape index: {}]
  %s3 = inlined_call_operand.hbm [shape: bf16[128,256], index: 3, kind: input, shape index: {}]
  %s4 = inlined_call_operand.hbm [shape: f32[1,256], index: 4, kind: input, shape index: {}]
  %s5 = inlined_call_operand.hbm [shape: f32[1,256], index: 5, kind: input, shape index: {}]
  %s6 = inlined_call_operand.hbm [shape: f32[1,256], index: 6, kind: input, shape index: {}]
  %s7 = inlined_call_operand.hbm [shape: bf16[256,512], index: 7, kind: input, shape index: {}]
  %s8 = inlined_call_operand.hbm [shape: f32[1,512], index: 8, kind: input, shape index: {}]
  %s9 = inlined_call_operand.hbm [shape: f32[1,512], index: 9, kind: input, shape index: {}]
  %s10 = inlined_call_operand.hbm [shape: f32[1,512], index: 10, kind: input, shape index: {}]
  %s11 = inlined_call_operand.hbm [shape: bf16[512,1024], index: 11, kind: input, shape index: {}]
  %s12 = inlined_call_operand.hbm [shape: f32[1,1024], index: 12, kind: input, shape index: {}]
  %s13 = inlined_call_operand.hbm [shape: f32[1,1024], index: 13, kind: input, shape index: {}]
  %s14 = inlined_call_operand.hbm [shape: f32[1,1024], index: 14, kind: input, shape index: {}]
  %s15 = inlined_call_operand.hbm [shape: bf16[1024,896], index: 15, kind: input, shape index: {}]
  %s16 = inlined_call_operand.hbm [shape: f32[1,896], index: 16, kind: input, shape index: {}]
  %s17 = inlined_call_operand.hbm [shape: f32[8,896], index: 17, kind: output, shape index: {}]
  %s18 = sld [smem:[#allocation0]]
  $region146: #{tpu_custom_call.1} parent=0
    _
  %s20 = ssub.s32 1, %s18
  %s21 = scalar_select 0, %s20, %s18
  $region1: #{tpu_custom_call.1} parent=0
    #allocation2 [shape = 'u8[2048]{0}', space=vmem, size = 0x800, scoped, tag = 'input window, operand 0, single buffered']
    #allocation3 [shape = 's32[1]{0}', space=sflag, size = 0x4, scoped, tag = 'scoped memory for tpu_custom_call.1']
    #allocation4 [shape = 's32[1]{0}', space=sflag, size = 0x4, scoped, tag = 'scoped memory for tpu_custom_call.1']
    #allocation5 [shape = 'u8[32768]{0}', space=vmem, size = 0x8000, scoped, tag = 'input window, operand 1, single buffered']
    #allocation6 [shape = 's32[1]{0}', space=sflag, size = 0x4, scoped, tag = 'scoped memory for tpu_custom_call.1']
    #allocation7 [shape = 'u8[512]{0}', space=vmem, size = 0x400, scoped, tag = 'input window, operand 2, single buffered']
    #allocation8 [shape = 'u8[65536]{0}', space=vmem, size = 0x10000, scoped, tag = 'input window, operand 3, single buffered']
    #allocation9 [shape = 's32[1]{0}', space=sflag, size = 0x4, scoped, tag = 'scoped memory for tpu_custom_call.1']
    #allocation10 [shape = 'u8[1024]{0}', space=vmem, size = 0x400, scoped, tag = 'input window, operand 4, single buffered']
    #allocation11 [shape = 'u8[1024]{0}', space=vmem, size = 0x400, scoped, tag = 'input window, operand 5, single buffered']
    #allocation12 [shape = 's32[1]{0}', space=sflag, size = 0x4, scoped, tag = 'scoped memory for tpu_custom_call.1']
    #allocation13 [shape = 'u8[1024]{0}', space=vmem, size = 0x400, scoped, tag = 'input window, operand 6, single buffered']
    #allocation14 [shape = 'u8[262144]{0}', space=vmem, size = 0x40000, scoped, tag = 'input window, operand 7, single buffered']
    #allocation15 [shape = 's32[1]{0}', space=sflag, size = 0x4, scoped, tag = 'scoped memory for tpu_custom_call.1']
    #allocation16 [shape = 'u8[2048]{0}', space=vmem, size = 0x800, scoped, tag = 'input window, operand 8, single buffered']
    #allocation17 [shape = 'u8[2048]{0}', space=vmem, size = 0x800, scoped, tag = 'input window, operand 9, single buffered']
    #allocation18 [shape = 's32[1]{0}', space=sflag, size = 0x4, scoped, tag = 'scoped memory for tpu_custom_call.1']
    #allocation19 [shape = 'u8[2048]{0}', space=vmem, size = 0x800, scoped, tag = 'input window, operand 10, single buffered']
    #allocation20 [shape = 'u8[1048576]{0}', space=vmem, size = 0x100000, scoped, tag = 'input window, operand 11, single buffered']
    #allocation21 [shape = 's32[1]{0}', space=sflag, size = 0x4, scoped, tag = 'scoped memory for tpu_custom_call.1']
    #allocation22 [shape = 'u8[4096]{0}', space=vmem, size = 0x1000, scoped, tag = 'input window, operand 12, single buffered']
    #allocation23 [shape = 'u8[4096]{0}', space=vmem, size = 0x1000, scoped, tag = 'input window, operand 13, single buffered']
    #allocation24 [shape = 's32[1]{0}', space=sflag, size = 0x4, scoped, tag = 'scoped memory for tpu_custom_call.1']
    #allocation25 [shape = 'u8[4096]{0}', space=vmem, size = 0x1000, scoped, tag = 'input window, operand 14, single buffered']
    #allocation26 [shape = 'u8[1835008]{0}', space=vmem, size = 0x1c0000, scoped, tag = 'input window, operand 15, single buffered']
    #allocation27 [shape = 's32[1]{0}', space=sflag, size = 0x4, scoped, tag = 'scoped memory for tpu_custom_call.1']
    #allocation28 [shape = 'u8[3584]{0}', space=vmem, size = 0x1000, scoped, tag = 'input window, operand 16, single buffered']
    #allocation29 [shape = 'u8[28672]{0}', space=vmem, size = 0x7000, scoped, tag = 'output window, operand 0, single buffered']
    %22 = vsyncpa [#allocation3], 0
    %23 = vsyncpa [#allocation6], 0
    %24 = vsyncpa [#allocation9], 0
    %25 = vsyncpa [#allocation12], 0
    %26 = vsyncpa [#allocation15], 0
    %27 = vsyncpa [#allocation18], 0
    %28 = vsyncpa [#allocation21], 0
    %29 = vsyncpa [#allocation24], 0
    %30 = vsyncpa [#allocation27], 0
    %31 = vsyncpa [#allocation4], 0
    // Predicated region
    $region2: #{tpu_custom_call.1} parent=1 // pred_check
      _
    $region3: #{tpu_custom_call.1} parent=1 // pred_check_branch
      %33 = sbr.rel (0) target = $region5
    $region4: #{tpu_custom_call.1} parent=1 // pred_region
      %35 = vsyncadd [#allocation3], 0
      %s37 = sshll.u32 %s0, 4
      %s38 = int_to_ptr.hbm [resolvable:$true] %s37
      %s39 = sshll.u32 [#allocation2], 4
      %s40 = int_to_ptr.vmem [resolvable:$true] %s39
      %42 = dma.hbm_to_vmem [thread:$0]  %s38, 64, %s40, [#allocation3]
    $region5: #{tpu_custom_call.1} parent=1 // pred_fallthru
      _
    // Predicated region
    $region6: #{tpu_custom_call.1} parent=1 // pred_check
      _
    $region7: #{tpu_custom_call.1} parent=1 // pred_check_branch
      %44 = sbr.rel (0) target = $region9
    $region8: #{tpu_custom_call.1} parent=1 // pred_region
      %46 = vsyncadd [#allocation6], 0
      %s47 = sshll.u32 %s1, 4
      %s48 = int_to_ptr.hbm [resolvable:$true] %s47
      %s49 = sshll.u32 [#allocation5], 4
      %s50 = int_to_ptr.vmem [resolvable:$true] %s49
      %55 = dma.hbm_to_vmem [thread:$0]  %s48, 1024, %s50, [#allocation6], 64, 64, 4
    $region9: #{tpu_custom_call.1} parent=1 // pred_fallthru
      _
    // Predicated region
    $region10: #{tpu_custom_call.1} parent=1 // pred_check
      _
    $region11: #{tpu_custom_call.1} parent=1 // pred_check_branch
      %57 = sbr.rel (0) target = $region13
    $region12: #{tpu_custom_call.1} parent=1 // pred_region
      %59 = vsyncadd [#allocation6], 0
      %s61 = sshll.u32 %s2, 4
      %s62 = int_to_ptr.hbm [resolvable:$true] %s61
      %s63 = sshll.u32 [#allocation7], 4
      %s64 = int_to_ptr.vmem [resolvable:$true] %s63
      %66 = dma.hbm_to_vmem [thread:$0]  %s62, 16, %s64, [#allocation6]
    $region13: #{tpu_custom_call.1} parent=1 // pred_fallthru
      _
    // Predicated region
    $region14: #{tpu_custom_call.1} parent=1 // pred_check
      _
    $region15: #{tpu_custom_call.1} parent=1 // pred_check_branch
      %68 = sbr.rel (0) target = $region17
    $region16: #{tpu_custom_call.1} parent=1 // pred_region
      %70 = vsyncadd [#allocation9], 0
      %s71 = sshll.u32 %s3, 4
      %s72 = int_to_ptr.hbm [resolvable:$true] %s71
      %s73 = sshll.u32 [#allocation8], 4
      %s74 = int_to_ptr.vmem [resolvable:$true] %s73
      %79 = dma.hbm_to_vmem [thread:$0]  %s72, 2048, %s74, [#allocation9], 128, 128, 8
    $region17: #{tpu_custom_call.1} parent=1 // pred_fallthru
      _
    // Predicated region
    $region18: #{tpu_custom_call.1} parent=1 // pred_check
      _
    $region19: #{tpu_custom_call.1} parent=1 // pred_check_branch
      %81 = sbr.rel (0) target = $region21
    $region20: #{tpu_custom_call.1} parent=1 // pred_region
      %83 = vsyncadd [#allocation9], 0
      %s85 = sshll.u32 %s4, 4
      %s86 = int_to_ptr.hbm [resolvable:$true] %s85
      %s87 = sshll.u32 [#allocation10], 4
      %s88 = int_to_ptr.vmem [resolvable:$true] %s87
      %90 = dma.hbm_to_vmem [thread:$0]  %s86, 32, %s88, [#allocation9]
    $region21: #{tpu_custom_call.1} parent=1 // pred_fallthru
      _
    // Predicated region
    $region22: #{tpu_custom_call.1} parent=1 // pred_check
      _
    $region23: #{tpu_custom_call.1} parent=1 // pred_check_branch
      %92 = sbr.rel (0) target = $region25
    $region24: #{tpu_custom_call.1} parent=1 // pred_region
      %94 = vsyncadd [#allocation12], 0
      %s96 = sshll.u32 %s5, 4
      %s97 = int_to_ptr.hbm [resolvable:$true] %s96
      %s98 = sshll.u32 [#allocation11], 4
      %s99 = int_to_ptr.vmem [resolvable:$true] %s98
      %101 = dma.hbm_to_vmem [thread:$0]  %s97, 32, %s99, [#allocation12]
    $region25: #{tpu_custom_call.1} parent=1 // pred_fallthru
      _
    // Predicated region
    $region26: #{tpu_custom_call.1} parent=1 // pred_check
      _
    $region27: #{tpu_custom_call.1} parent=1 // pred_check_branch
      %103 = sbr.rel (0) target = $region29
    $region28: #{tpu_custom_call.1} parent=1 // pred_region
      %105 = vsyncadd [#allocation12], 0
      %s107 = sshll.u32 %s6, 4
      %s108 = int_to_ptr.hbm [resolvable:$true] %s107
      %s109 = sshll.u32 [#allocation13], 4
      %s110 = int_to_ptr.vmem [resolvable:$true] %s109
      %112 = dma.hbm_to_vmem [thread:$0]  %s108, 32, %s110, [#allocation12]
    $region29: #{tpu_custom_call.1} parent=1 // pred_fallthru
      _
    // Predicated region
    $region30: #{tpu_custom_call.1} parent=1 // pred_check
      _
    $region31: #{tpu_custom_call.1} parent=1 // pred_check_branch
      %114 = sbr.rel (0) target = $region33
    $region32: #{tpu_custom_call.1} parent=1 // pred_region
      %116 = vsyncadd [#allocation15], 0
      %s117 = sshll.u32 %s7, 4
      %s118 = int_to_ptr.hbm [resolvable:$true] %s117
      %s119 = sshll.u32 [#allocation14], 4
      %s120 = int_to_ptr.vmem [resolvable:$true] %s119
      %125 = dma.hbm_to_vmem [thread:$0]  %s118, 8192, %s120, [#allocation15], 256, 256, 16
    $region33: #{tpu_custom_call.1} parent=1 // pred_fallthru
      _
    // Predicated region
    $region34: #{tpu_custom_call.1} parent=1 // pred_check
      _
    $region35: #{tpu_custom_call.1} parent=1 // pred_check_branch
      %127 = sbr.rel (0) target = $region37
    $region36: #{tpu_custom_call.1} parent=1 // pred_region
      %129 = vsyncadd [#allocation15], 0
      %s131 = sshll.u32 %s8, 4
      %s132 = int_to_ptr.hbm [resolvable:$true] %s131
      %s133 = sshll.u32 [#allocation16], 4
      %s134 = int_to_ptr.vmem [resolvable:$true] %s133
      %136 = dma.hbm_to_vmem [thread:$0]  %s132, 64, %s134, [#allocation15]
    $region37: #{tpu_custom_call.1} parent=1 // pred_fallthru
      _
    // Predicated region
    $region38: #{tpu_custom_call.1} parent=1 // pred_check
      _
    $region39: #{tpu_custom_call.1} parent=1 // pred_check_branch
      %138 = sbr.rel (0) target = $region41
    $region40: #{tpu_custom_call.1} parent=1 // pred_region
      %140 = vsyncadd [#allocation18], 0
      %s142 = sshll.u32 %s9, 4
      %s143 = int_to_ptr.hbm [resolvable:$true] %s142
      %s144 = sshll.u32 [#allocation17], 4
      %s145 = int_to_ptr.vmem [resolvable:$true] %s144
      %147 = dma.hbm_to_vmem [thread:$0]  %s143, 64, %s145, [#allocation18]
    $region41: #{tpu_custom_call.1} parent=1 // pred_fallthru
      _
    // Predicated region
    $region42: #{tpu_custom_call.1} parent=1 // pred_check
      _
    $region43: #{tpu_custom_call.1} parent=1 // pred_check_branch
      %149 = sbr.rel (0) target = $region45
    $region44: #{tpu_custom_call.1} parent=1 // pred_region
      %151 = vsyncadd [#allocation18], 0
      %s153 = sshll.u32 %s10, 4
      %s154 = int_to_ptr.hbm [resolvable:$true] %s153
      %s155 = sshll.u32 [#allocation19], 4
      %s156 = int_to_ptr.vmem [resolvable:$true] %s155
      %158 = dma.hbm_to_vmem [thread:$0]  %s154, 64, %s156, [#allocation18]
    $region45: #{tpu_custom_call.1} parent=1 // pred_fallthru
      _
    // Predicated region
    $region46: #{tpu_custom_call.1} parent=1 // pred_check
      _
    $region47: #{tpu_custom_call.1} parent=1 // pred_check_branch
      %160 = sbr.rel (0) target = $region49
    $region48: #{tpu_custom_call.1} parent=1 // pred_region
      %162 = vsyncadd [#allocation21], 0
      %s163 = sshll.u32 %s11, 4
      %s164 = int_to_ptr.hbm [resolvable:$true] %s163
      %s165 = sshll.u32 [#allocation20], 4
      %s166 = int_to_ptr.vmem [resolvable:$true] %s165
      %171 = dma.hbm_to_vmem [thread:$0]  %s164, 32768, %s166, [#allocation21], 512, 512, 32
    $region49: #{tpu_custom_call.1} parent=1 // pred_fallthru
      _
    // Predicated region
    $region50: #{tpu_custom_call.1} parent=1 // pred_check
      _
    $region51: #{tpu_custom_call.1} parent=1 // pred_check_branch
      %173 = sbr.rel (0) target = $region53
    $region52: #{tpu_custom_call.1} parent=1 // pred_region
      %175 = vsyncadd [#allocation21], 0
      %s177 = sshll.u32 %s12, 4
      %s178 = int_to_ptr.hbm [resolvable:$true] %s177
      %s179 = sshll.u32 [#allocation22], 4
      %s180 = int_to_ptr.vmem [resolvable:$true] %s179
      %182 = dma.hbm_to_vmem [thread:$0]  %s178, 128, %s180, [#allocation21]
    $region53: #{tpu_custom_call.1} parent=1 // pred_fallthru
      _
    // Predicated region
    $region54: #{tpu_custom_call.1} parent=1 // pred_check
      _
    $region55: #{tpu_custom_call.1} parent=1 // pred_check_branch
      %184 = sbr.rel (0) target = $region57
    $region56: #{tpu_custom_call.1} parent=1 // pred_region
      %186 = vsyncadd [#allocation24], 0
      %s188 = sshll.u32 %s13, 4
      %s189 = int_to_ptr.hbm [resolvable:$true] %s188
      %s190 = sshll.u32 [#allocation23], 4
      %s191 = int_to_ptr.vmem [resolvable:$true] %s190
      %193 = dma.hbm_to_vmem [thread:$0]  %s189, 128, %s191, [#allocation24]
    $region57: #{tpu_custom_call.1} parent=1 // pred_fallthru
      _
    // Predicated region
    $region58: #{tpu_custom_call.1} parent=1 // pred_check
      _
    $region59: #{tpu_custom_call.1} parent=1 // pred_check_branch
      %195 = sbr.rel (0) target = $region61
    $region60: #{tpu_custom_call.1} parent=1 // pred_region
      %197 = vsyncadd [#allocation24], 0
      %s199 = sshll.u32 %s14, 4
      %s200 = int_to_ptr.hbm [resolvable:$true] %s199
      %s201 = sshll.u32 [#allocation25], 4
      %s202 = int_to_ptr.vmem [resolvable:$true] %s201
      %204 = dma.hbm_to_vmem [thread:$0]  %s200, 128, %s202, [#allocation24]
    $region61: #{tpu_custom_call.1} parent=1 // pred_fallthru
      _
    // Predicated region
    $region62: #{tpu_custom_call.1} parent=1 // pred_check
      _
    $region63: #{tpu_custom_call.1} parent=1 // pred_check_branch
      %206 = sbr.rel (0) target = $region65
    $region64: #{tpu_custom_call.1} parent=1 // pred_region
      %208 = vsyncadd [#allocation27], 0
      %s209 = sshll.u32 %s15, 4
      %s210 = int_to_ptr.hbm [resolvable:$true] %s209
      %s211 = sshll.u32 [#allocation26], 4
      %s212 = int_to_ptr.vmem [resolvable:$true] %s211
      %217 = dma.hbm_to_vmem [thread:$0]  %s210, 57344, %s212, [#allocation27], 448, 448, 28
    $region65: #{tpu_custom_call.1} parent=1 // pred_fallthru
      _
    // Predicated region
    $region66: #{tpu_custom_call.1} parent=1 // pred_check
      _
    $region67: #{tpu_custom_call.1} parent=1 // pred_check_branch
      %219 = sbr.rel (0) target = $region69
    $region68: #{tpu_custom_call.1} parent=1 // pred_region
      %221 = vsyncadd [#allocation27], 0
      %s223 = sshll.u32 %s16, 4
      %s224 = int_to_ptr.hbm [resolvable:$true] %s223
      %s225 = sshll.u32 [#allocation28], 4
      %s226 = int_to_ptr.vmem [resolvable:$true] %s225
      %228 = dma.hbm_to_vmem [thread:$0]  %s224, 112, %s226, [#allocation27]
    $region69: #{tpu_custom_call.1} parent=1 // pred_fallthru
      _
    // Predicated region
    $region70: #{tpu_custom_call.1} parent=1 // pred_check
      _
    $region71: #{tpu_custom_call.1} parent=1 // pred_check_branch
      %230 = sbr.rel (0) target = $region73
    $region72: #{tpu_custom_call.1} parent=1 // pred_region
      %232 = dma.done [#allocation3], 64
    $region73: #{tpu_custom_call.1} parent=1 // pred_fallthru
      _
    // Predicated region
    $region74: #{tpu_custom_call.1} parent=1 // pred_check
      _
    $region75: #{tpu_custom_call.1} parent=1 // pred_check_branch
      %234 = sbr.rel (0) target = $region77
    $region76: #{tpu_custom_call.1} parent=1 // pred_region
      %236 = dma.done [#allocation6], 1024
    $region77: #{tpu_custom_call.1} parent=1 // pred_fallthru
      _
    // Predicated region
    $region78: #{tpu_custom_call.1} parent=1 // pred_check
      _
    $region79: #{tpu_custom_call.1} parent=1 // pred_check_branch
      %238 = sbr.rel (0) target = $region81
    $region80: #{tpu_custom_call.1} parent=1 // pred_region
      %240 = dma.done [#allocation6], 16
    $region81: #{tpu_custom_call.1} parent=1 // pred_fallthru
      _
    // Predicated region
    $region82: #{tpu_custom_call.1} parent=1 // pred_check
      _
    $region83: #{tpu_custom_call.1} parent=1 // pred_check_branch
      %242 = sbr.rel (0) target = $region85
    $region84: #{tpu_custom_call.1} parent=1 // pred_region
      %244 = dma.done [#allocation9], 2048
    $region85: #{tpu_custom_call.1} parent=1 // pred_fallthru
      _
    // Predicated region
    $region86: #{tpu_custom_call.1} parent=1 // pred_check
      _
    $region87: #{tpu_custom_call.1} parent=1 // pred_check_branch
      %246 = sbr.rel (0) target = $region89
    $region88: #{tpu_custom_call.1} parent=1 // pred_region
      %248 = dma.done [#allocation9], 32
    $region89: #{tpu_custom_call.1} parent=1 // pred_fallthru
      _
    // Predicated region
    $region90: #{tpu_custom_call.1} parent=1 // pred_check
      _
    $region91: #{tpu_custom_call.1} parent=1 // pred_check_branch
      %250 = sbr.rel (0) target = $region93
    $region92: #{tpu_custom_call.1} parent=1 // pred_region
      %252 = dma.done [#allocation12], 32
    $region93: #{tpu_custom_call.1} parent=1 // pred_fallthru
      _
    // Predicated region
    $region94: #{tpu_custom_call.1} parent=1 // pred_check
      _
    $region95: #{tpu_custom_call.1} parent=1 // pred_check_branch
      %254 = sbr.rel (0) target = $region97
    $region96: #{tpu_custom_call.1} parent=1 // pred_region
      %256 = dma.done [#allocation12], 32
    $region97: #{tpu_custom_call.1} parent=1 // pred_fallthru
      _
    // Predicated region
    $region98: #{tpu_custom_call.1} parent=1 // pred_check
      _
    $region99: #{tpu_custom_call.1} parent=1 // pred_check_branch
      %258 = sbr.rel (0) target = $region101
    $region100: #{tpu_custom_call.1} parent=1 // pred_region
      %260 = dma.done [#allocation15], 8192
    $region101: #{tpu_custom_call.1} parent=1 // pred_fallthru
      _
    // Predicated region
    $region102: #{tpu_custom_call.1} parent=1 // pred_check
      _
    $region103: #{tpu_custom_call.1} parent=1 // pred_check_branch
      %262 = sbr.rel (0) target = $region105
    $region104: #{tpu_custom_call.1} parent=1 // pred_region
      %264 = dma.done [#allocation15], 64
    $region105: #{tpu_custom_call.1} parent=1 // pred_fallthru
      _
    // Predicated region
    $region106: #{tpu_custom_call.1} parent=1 // pred_check
      _
    $region107: #{tpu_custom_call.1} parent=1 // pred_check_branch
      %266 = sbr.rel (0) target = $region109
    $region108: #{tpu_custom_call.1} parent=1 // pred_region
      %268 = dma.done [#allocation18], 64
    $region109: #{tpu_custom_call.1} parent=1 // pred_fallthru
      _
    // Predicated region
    $region110: #{tpu_custom_call.1} parent=1 // pred_check
      _
    $region111: #{tpu_custom_call.1} parent=1 // pred_check_branch
      %270 = sbr.rel (0) target = $region113
    $region112: #{tpu_custom_call.1} parent=1 // pred_region
      %272 = dma.done [#allocation18], 64
    $region113: #{tpu_custom_call.1} parent=1 // pred_fallthru
      _
    // Predicated region
    $region114: #{tpu_custom_call.1} parent=1 // pred_check
      _
    $region115: #{tpu_custom_call.1} parent=1 // pred_check_branch
      %274 = sbr.rel (0) target = $region117
    $region116: #{tpu_custom_call.1} parent=1 // pred_region
      %276 = dma.done [#allocation21], 32768
    $region117: #{tpu_custom_call.1} parent=1 // pred_fallthru
      _
    // Predicated region
    $region118: #{tpu_custom_call.1} parent=1 // pred_check
      _
    $region119: #{tpu_custom_call.1} parent=1 // pred_check_branch
      %278 = sbr.rel (0) target = $region121
    $region120: #{tpu_custom_call.1} parent=1 // pred_region
      %280 = dma.done [#allocation21], 128
    $region121: #{tpu_custom_call.1} parent=1 // pred_fallthru
      _
    // Predicated region
    $region122: #{tpu_custom_call.1} parent=1 // pred_check
      _
    $region123: #{tpu_custom_call.1} parent=1 // pred_check_branch
      %282 = sbr.rel (0) target = $region125
    $region124: #{tpu_custom_call.1} parent=1 // pred_region
      %284 = dma.done [#allocation24], 128
    $region125: #{tpu_custom_call.1} parent=1 // pred_fallthru
      _
    // Predicated region
    $region126: #{tpu_custom_call.1} parent=1 // pred_check
      _
    $region127: #{tpu_custom_call.1} parent=1 // pred_check_branch
      %286 = sbr.rel (0) target = $region129
    $region128: #{tpu_custom_call.1} parent=1 // pred_region
      %288 = dma.done [#allocation24], 128
    $region129: #{tpu_custom_call.1} parent=1 // pred_fallthru
      _
    // Predicated region
    $region130: #{tpu_custom_call.1} parent=1 // pred_check
      _
    $region131: #{tpu_custom_call.1} parent=1 // pred_check_branch
      %290 = sbr.rel (0) target = $region133
    $region132: #{tpu_custom_call.1} parent=1 // pred_region
      %292 = dma.done [#allocation27], 57344
    $region133: #{tpu_custom_call.1} parent=1 // pred_fallthru
      _
    // Predicated region
    $region134: #{tpu_custom_call.1} parent=1 // pred_check
      _
    $region135: #{tpu_custom_call.1} parent=1 // pred_check_branch
      %294 = sbr.rel (0) target = $region137
    $region136: #{tpu_custom_call.1} parent=1 // pred_region
      %296 = dma.done [#allocation27], 112
    $region137: #{tpu_custom_call.1} parent=1 // pred_fallthru
      _
    %v297 = vld [vmem:[#allocation2] sm:$0xf]
    %v298 = vld [vmem:[#allocation5] sm:$0xf]
    %v299 = vld [vmem:[#allocation5 + $0x4] sm:$0xf]
    %v300 = vld [vmem:[#allocation5 + $0x8] sm:$0xf]
    %v301 = vld [vmem:[#allocation5 + $0xc] sm:$0xf]
    %v302 = vld [vmem:[#allocation5 + $0x10] sm:$0xf]
    %v303 = vld [vmem:[#allocation5 + $0x14] sm:$0xf]
    %v304 = vld [vmem:[#allocation5 + $0x18] sm:$0xf]
    %v305 = vld [vmem:[#allocation5 + $0x1c] sm:$0xf]
    %v306 = vld [vmem:[#allocation5 + $0x20] sm:$0xf]
    %v307 = vld [vmem:[#allocation5 + $0x24] sm:$0xf]
    %v308 = vld [vmem:[#allocation5 + $0x28] sm:$0xf]
    %v309 = vld [vmem:[#allocation5 + $0x2c] sm:$0xf]
    %v310 = vld [vmem:[#allocation5 + $0x30] sm:$0xf]
    %v311 = vld [vmem:[#allocation5 + $0x34] sm:$0xf]
    %v312 = vld [vmem:[#allocation5 + $0x38] sm:$0xf]
    %v313 = vld [vmem:[#allocation5 + $0x3c] sm:$0xf]
    %v314 = vld [vmem:[#allocation7] sm:$0x1]
    %v316 = vperm.slane %v314, 0
    %v334 = vunpack.c.l.b16 %v298
    %v335 = vunpack.c.l.b16 %v299
    %v336 = vunpack.c.l.b16 %v300
    %v337 = vunpack.c.l.b16 %v301
    %v338 = vunpack.c.l.b16 %v302
    %v339 = vunpack.c.l.b16 %v303
    %v340 = vunpack.c.l.b16 %v304
    %v341 = vunpack.c.l.b16 %v305
    %v342 = vunpack.c.l.b16 %v306
    %v343 = vunpack.c.l.b16 %v307
    %v344 = vunpack.c.l.b16 %v308
    %v345 = vunpack.c.l.b16 %v309
    %v346 = vunpack.c.l.b16 %v310
    %v347 = vunpack.c.l.b16 %v311
    %v348 = vunpack.c.l.b16 %v312
    %v349 = vunpack.c.l.b16 %v313
    %v350 = vpack.c.b16 %v335, %v334
    %v351 = vpack.c.b16 %v337, %v336
    %v352 = vpack.c.b16 %v339, %v338
    %v353 = vpack.c.b16 %v341, %v340
    %v354 = vpack.c.b16 %v343, %v342
    %v355 = vpack.c.b16 %v345, %v344
    %v356 = vpack.c.b16 %v347, %v346
    %v357 = vpack.c.b16 %v349, %v348
    %366 = vmatpush.bf16.msra.mxu0 %v357
    %367 = vmatpush.bf16.msra.mxu0 %v356
    %368 = vmatpush.bf16.msra.mxu0 %v355
    %369 = vmatpush.bf16.msra.mxu0 %v354
    %370 = vmatpush.bf16.msra.mxu0 %v353
    %371 = vmatpush.bf16.msra.mxu0 %v352
    %372 = vmatpush.bf16.msra.mxu0 %v351
    %373 = vmatpush.bf16.msra.mxu0 %v350
    %374 = vmatmul.bf16.gmra.mxu0 %v297
    %v375 = vpop.f32.mrf.mxu0
    %v376 = vadd.f32 %v316, %v375
    %v377 = vpop.f32.mrf.mxu0
    %378 = vdwg.mxu0
    %vm379 = vcmp.gt.f32.partialorder %v376, 0.0
    %v380 = vmul.f32 %v376, 0.2
    %v381 = vsel %vm379, %v376, %v380
    %v382 = vpack.c.bf16 %v381, %v381
    %v383 = vld [vmem:[#allocation8] sm:$0xff]
    %v384 = vld [vmem:[#allocation8 + $0x8] sm:$0xff]
    %v385 = vld [vmem:[#allocation8 + $0x10] sm:$0xff]
    %v386 = vld [vmem:[#allocation8 + $0x18] sm:$0xff]
    %v387 = vld [vmem:[#allocation8 + $0x20] sm:$0xff]
    %v388 = vld [vmem:[#allocation8 + $0x28] sm:$0xff]
    %v389 = vld [vmem:[#allocation8 + $0x30] sm:$0xff]
    %v390 = vld [vmem:[#allocation8 + $0x38] sm:$0xff]
    %v391 = vld [vmem:[#allocation8 + $0x40] sm:$0xff]
    %v392 = vld [vmem:[#allocation8 + $0x48] sm:$0xff]
    %v393 = vld [vmem:[#allocation8 + $0x50] sm:$0xff]
    %v394 = vld [vmem:[#allocation8 + $0x58] sm:$0xff]
    %v395 = vld [vmem:[#allocation8 + $0x60] sm:$0xff]
    %v396 = vld [vmem:[#allocation8 + $0x68] sm:$0xff]
    %v397 = vld [vmem:[#allocation8 + $0x70] sm:$0xff]
    %v398 = vld [vmem:[#allocation8 + $0x78] sm:$0xff]
    %v399 = vld [vmem:[#allocation10] sm:$0x3]
    %v401 = vperm.slane %v399, 0
    %v402 = vperm.slane %v399, 1
    %v421 = vunpack.c.l.b16 %v383
    %v422 = vunpack.c.h.b16 %v383
    %v423 = vunpack.c.l.b16 %v384
    %v424 = vunpack.c.h.b16 %v384
    %v425 = vunpack.c.l.b16 %v385
    %v426 = vunpack.c.h.b16 %v385
    %v427 = vunpack.c.l.b16 %v386
    %v428 = vunpack.c.h.b16 %v386
    %v429 = vunpack.c.l.b16 %v387
    %v430 = vunpack.c.h.b16 %v387
    %v431 = vunpack.c.l.b16 %v388
    %v432 = vunpack.c.h.b16 %v388
    %v433 = vunpack.c.l.b16 %v389
    %v434 = vunpack.c.h.b16 %v389
    %v435 = vunpack.c.l.b16 %v390
    %v436 = vunpack.c.h.b16 %v390
    %v437 = vunpack.c.l.b16 %v391
    %v438 = vunpack.c.h.b16 %v391
    %v439 = vunpack.c.l.b16 %v392
    %v440 = vunpack.c.h.b16 %v392
    %v441 = vunpack.c.l.b16 %v393
    %v442 = vunpack.c.h.b16 %v393
    %v443 = vunpack.c.l.b16 %v394
    %v444 = vunpack.c.h.b16 %v394
    %v445 = vunpack.c.l.b16 %v395
    %v446 = vunpack.c.h.b16 %v395
    %v447 = vunpack.c.l.b16 %v396
    %v448 = vunpack.c.h.b16 %v396
    %v449 = vunpack.c.l.b16 %v397
    %v450 = vunpack.c.h.b16 %v397
    %v451 = vunpack.c.l.b16 %v398
    %v452 = vunpack.c.h.b16 %v398
    %v453 = vpack.c.b16 %v423, %v421
    %v454 = vpack.c.b16 %v424, %v422
    %v455 = vpack.c.b16 %v427, %v425
    %v456 = vpack.c.b16 %v428, %v426
    %v457 = vpack.c.b16 %v431, %v429
    %v458 = vpack.c.b16 %v432, %v430
    %v459 = vpack.c.b16 %v435, %v433
    %v460 = vpack.c.b16 %v436, %v434
    %v461 = vpack.c.b16 %v439, %v437
    %v462 = vpack.c.b16 %v440, %v438
    %v463 = vpack.c.b16 %v443, %v441
    %v464 = vpack.c.b16 %v444, %v442
    %v465 = vpack.c.b16 %v447, %v445
    %v466 = vpack.c.b16 %v448, %v446
    %v467 = vpack.c.b16 %v451, %v449
    %v468 = vpack.c.b16 %v452, %v450
    %485 = vmatpush.bf16.msra.mxu0 %v467
    %486 = vmatpush.bf16.msra.mxu0 %v465
    %487 = vmatpush.bf16.msra.mxu0 %v463
    %488 = vmatpush.bf16.msra.mxu0 %v461
    %489 = vmatpush.bf16.msra.mxu0 %v459
    %490 = vmatpush.bf16.msra.mxu0 %v457
    %491 = vmatpush.bf16.msra.mxu0 %v455
    %492 = vmatpush.bf16.msra.mxu0 %v453
    %493 = vmatmul.bf16.gmra.mxu0 %v382
    %v494 = vpop.f32.mrf.mxu0
    %v495 = vadd.f32 %v401, %v494
    %v496 = vpop.f32.mrf.mxu0
    %497 = vdwg.mxu0
    %498 = vmatpush.bf16.msra.mxu0 %v468
    %499 = vmatpush.bf16.msra.mxu0 %v466
    %500 = vmatpush.bf16.msra.mxu0 %v464
    %501 = vmatpush.bf16.msra.mxu0 %v462
    %502 = vmatpush.bf16.msra.mxu0 %v460
    %503 = vmatpush.bf16.msra.mxu0 %v458
    %504 = vmatpush.bf16.msra.mxu0 %v456
    %505 = vmatpush.bf16.msra.mxu0 %v454
    %506 = vmatmul.bf16.gmra.mxu0 %v382
    %v507 = vpop.f32.mrf.mxu0
    %v508 = vadd.f32 %v402, %v507
    %v509 = vpop.f32.mrf.mxu0
    %510 = vdwg.mxu0
    %v511 = vld [vmem:[#allocation11] sm:$0x3]
    %v512 = vld [vmem:[#allocation13] sm:$0x3]
    %v513 = vrot.slane %v495, 4
    %v514 = vadd.f32 %v495, %v513
    %v515 = vrot.slane %v514, 2
    %v516 = vadd.f32 %v514, %v515
    %v517 = vrot.slane %v516, 1
    %v518 = vadd.f32 %v516, %v517
    %v519 = vrot.slane %v508, 4
    %v520 = vadd.f32 %v508, %v519
    %v521 = vrot.slane %v520, 2
    %v522 = vadd.f32 %v520, %v521
    %v523 = vrot.slane %v522, 1
    %v524 = vadd.f32 %v522, %v523
    %v525 = vrcp.pop 8.0
    %v526 = vmul.f32 8.0, %v525
    %v527 = vsub.f32 1.0, %v526
    %v528 = vmul.f32 %v525, %v527
    %v529 = vadd.f32 %v525, %v528
    %vm530 = vweird.f32 %v525
    %v531 = vsel %vm530, %v525, %v529
    %v532 = vmul.f32 %v518, %v531
    %v533 = vmul.f32 %v524, %v531
    %v534 = vsub.f32 %v495, %v532
    %v535 = vsub.f32 %v508, %v533
    %v536 = vmul.f32 %v534, %v534
    %v537 = vmul.f32 %v535, %v535
    %v538 = vrot.slane %v536, 4
    %v539 = vadd.f32 %v536, %v538
    %v540 = vrot.slane %v539, 2
    %v541 = vadd.f32 %v539, %v540
    %v542 = vrot.slane %v541, 1
    %v543 = vadd.f32 %v541, %v542
    %v544 = vrot.slane %v537, 4
    %v545 = vadd.f32 %v537, %v544
    %v546 = vrot.slane %v545, 2
    %v547 = vadd.f32 %v545, %v546
    %v548 = vrot.slane %v547, 1
    %v549 = vadd.f32 %v547, %v548
    %v550 = vmul.f32 %v543, %v531
    %v551 = vmul.f32 %v549, %v531
    %v552 = vadd.f32 %v550, 0.8
    %v553 = vadd.f32 %v551, 0.8
    %v554 = vrsqrt.pop %v552
    %v555 = vmul.f32 %v554, %v552
    %v556 = vmul.f32 %v555, %v554
    %v557 = vmul.f32 0.5, %v556
    %v558 = vsub.f32 1.5, %v557
    %v559 = vmul.f32 %v554, %v558
    %vm560 = vweird.f32 %v552
    %vm561 = vweird.f32 %v554
    %vm562 = vmor %vm560, %vm561
    %v563 = vsel %vm562, %v554, %v559
    %v564 = vrsqrt.pop %v553
    %v565 = vmul.f32 %v564, %v553
    %v566 = vmul.f32 %v565, %v564
    %v567 = vmul.f32 0.5, %v566
    %v568 = vsub.f32 1.5, %v567
    %v569 = vmul.f32 %v564, %v568
    %vm570 = vweird.f32 %v553
    %vm571 = vweird.f32 %v564
    %vm572 = vmor %vm570, %vm571
    %v573 = vsel %vm572, %v564, %v569
    %v574 = vmul.f32 %v534, %v563
    %v575 = vmul.f32 %v535, %v573
    %v577 = vperm.slane %v511, 0
    %v578 = vperm.slane %v511, 1
    %v581 = vmul.f32 %v574, %v577
    %v582 = vmul.f32 %v575, %v578
    %v584 = vperm.slane %v512, 0
    %v585 = vperm.slane %v512, 1
    %v588 = vadd.f32 %v581, %v584
    %v589 = vadd.f32 %v582, %v585
    %vm590 = vcmp.gt.f32.partialorder %v588, 0.0
    %vm591 = vcmp.gt.f32.partialorder %v589, 0.0
    %v592 = vmul.f32 %v588, 0.2
    %v593 = vmul.f32 %v589, 0.2
    %v594 = vsel %vm590, %v588, %v592
    %v595 = vsel %vm591, %v589, %v593
    %v596 = vpack.c.bf16 %v594, %v594
    %v597 = vpack.c.bf16 %v595, %v595
    %v598 = vld [vmem:[#allocation14] sm:$0xff]
    %v599 = vld [vmem:[#allocation14 + $0x8] sm:$0xff]
    %v600 = vld [vmem:[#allocation14 + $0x10] sm:$0xff]
    %v601 = vld [vmem:[#allocation14 + $0x18] sm:$0xff]
    %v602 = vld [vmem:[#allocation14 + $0x20] sm:$0xff]
    %v603 = vld [vmem:[#allocation14 + $0x28] sm:$0xff]
    %v604 = vld [vmem:[#allocation14 + $0x30] sm:$0xff]
    %v605 = vld [vmem:[#allocation14 + $0x38] sm:$0xff]
    %v606 = vld [vmem:[#allocation14 + $0x40] sm:$0xff]
    %v607 = vld [vmem:[#allocation14 + $0x48] sm:$0xff]
    %v608 = vld [vmem:[#allocation14 + $0x50] sm:$0xff]
    %v609 = vld [vmem:[#allocation14 + $0x58] sm:$0xff]
    %v610 = vld [vmem:[#allocation14 + $0x60] sm:$0xff]
    %v611 = vld [vmem:[#allocation14 + $0x68] sm:$0xff]
    %v612 = vld [vmem:[#allocation14 + $0x70] sm:$0xff]
    %v613 = vld [vmem:[#allocation14 + $0x78] sm:$0xff]
    %v614 = vld [vmem:[#allocation14 + $0x80] sm:$0xff]
    %v615 = vld [vmem:[#allocation14 + $0x88] sm:$0xff]
    %v616 = vld [vmem:[#allocation14 + $0x90] sm:$0xff]
    %v617 = vld [vmem:[#allocation14 + $0x98] sm:$0xff]
    %v618 = vld [vmem:[#allocation14 + $0xa0] sm:$0xff]
    %v619 = vld [vmem:[#allocation14 + $0xa8] sm:$0xff]
    %v620 = vld [vmem:[#allocation14 + $0xb0] sm:$0xff]
    %v621 = vld [vmem:[#allocation14 + $0xb8] sm:$0xff]
    %v622 = vld [vmem:[#allocation14 + $0xc0] sm:$0xff]
    %v623 = vld [vmem:[#allocation14 + $0xc8] sm:$0xff]
    %v624 = vld [vmem:[#allocation14 + $0xd0] sm:$0xff]
    %v625 = vld [vmem:[#allocation14 + $0xd8] sm:$0xff]
    %v626 = vld [vmem:[#allocation14 + $0xe0] sm:$0xff]
    %v627 = vld [vmem:[#allocation14 + $0xe8] sm:$0xff]
    %v628 = vld [vmem:[#allocation14 + $0xf0] sm:$0xff]
    %v629 = vld [vmem:[#allocation14 + $0xf8] sm:$0xff]
    %v630 = vld [vmem:[#allocation14 + $0x100] sm:$0xff]
    %v631 = vld [vmem:[#allocation14 + $0x108] sm:$0xff]
    %v632 = vld [vmem:[#allocation14 + $0x110] sm:$0xff]
    %v633 = vld [vmem:[#allocation14 + $0x118] sm:$0xff]
    %v634 = vld [vmem:[#allocation14 + $0x120] sm:$0xff]
    %v635 = vld [vmem:[#allocation14 + $0x128] sm:$0xff]
    %v636 = vld [vmem:[#allocation14 + $0x130] sm:$0xff]
    %v637 = vld [vmem:[#allocation14 + $0x138] sm:$0xff]
    %v638 = vld [vmem:[#allocation14 + $0x140] sm:$0xff]
    %v639 = vld [vmem:[#allocation14 + $0x148] sm:$0xff]
    %v640 = vld [vmem:[#allocation14 + $0x150] sm:$0xff]
    %v641 = vld [vmem:[#allocation14 + $0x158] sm:$0xff]
    %v642 = vld [vmem:[#allocation14 + $0x160] sm:$0xff]
    %v643 = vld [vmem:[#allocation14 + $0x168] sm:$0xff]
    %v644 = vld [vmem:[#allocation14 + $0x170] sm:$0xff]
    %v645 = vld [vmem:[#allocation14 + $0x178] sm:$0xff]
    %v646 = vld [vmem:[#allocation14 + $0x180] sm:$0xff]
    %v647 = vld [vmem:[#allocation14 + $0x188] sm:$0xff]
    %v648 = vld [vmem:[#allocation14 + $0x190] sm:$0xff]
    %v649 = vld [vmem:[#allocation14 + $0x198] sm:$0xff]
    %v650 = vld [vmem:[#allocation14 + $0x1a0] sm:$0xff]
    %v651 = vld [vmem:[#allocation14 + $0x1a8] sm:$0xff]
    %v652 = vld [vmem:[#allocation14 + $0x1b0] sm:$0xff]
    %v653 = vld [vmem:[#allocation14 + $0x1b8] sm:$0xff]
    %v654 = vld [vmem:[#allocation14 + $0x1c0] sm:$0xff]
    %v655 = vld [vmem:[#allocation14 + $0x1c8] sm:$0xff]
    %v656 = vld [vmem:[#allocation14 + $0x1d0] sm:$0xff]
    %v657 = vld [vmem:[#allocation14 + $0x1d8] sm:$0xff]
    %v658 = vld [vmem:[#allocation14 + $0x1e0] sm:$0xff]
    %v659 = vld [vmem:[#allocation14 + $0x1e8] sm:$0xff]
    %v660 = vld [vmem:[#allocation14 + $0x1f0] sm:$0xff]
    %v661 = vld [vmem:[#allocation14 + $0x1f8] sm:$0xff]
    %v662 = vld [vmem:[#allocation16] sm:$0xf]
    %v664 = vperm.slane %v662, 0
    %v665 = vperm.slane %v662, 1
    %v666 = vperm.slane %v662, 2
    %v667 = vperm.slane %v662, 3
    %v736 = vunpack.c.l.b16 %v598
    %v737 = vunpack.c.h.b16 %v598
    %v738 = vunpack.c.l.b16 %v599
    %v739 = vunpack.c.h.b16 %v599
    %v740 = vunpack.c.l.b16 %v600
    %v741 = vunpack.c.h.b16 %v600
    %v742 = vunpack.c.l.b16 %v601
    %v743 = vunpack.c.h.b16 %v601
    %v744 = vunpack.c.l.b16 %v602
    %v745 = vunpack.c.h.b16 %v602
    %v746 = vunpack.c.l.b16 %v603
    %v747 = vunpack.c.h.b16 %v603
    %v748 = vunpack.c.l.b16 %v604
    %v749 = vunpack.c.h.b16 %v604
    %v750 = vunpack.c.l.b16 %v605
    %v751 = vunpack.c.h.b16 %v605
    %v752 = vunpack.c.l.b16 %v606
    %v753 = vunpack.c.h.b16 %v606
    %v754 = vunpack.c.l.b16 %v607
    %v755 = vunpack.c.h.b16 %v607
    %v756 = vunpack.c.l.b16 %v608
    %v757 = vunpack.c.h.b16 %v608
    %v758 = vunpack.c.l.b16 %v609
    %v759 = vunpack.c.h.b16 %v609
    %v760 = vunpack.c.l.b16 %v610
    %v761 = vunpack.c.h.b16 %v610
    %v762 = vunpack.c.l.b16 %v611
    %v763 = vunpack.c.h.b16 %v611
    %v764 = vunpack.c.l.b16 %v612
    %v765 = vunpack.c.h.b16 %v612
    %v766 = vunpack.c.l.b16 %v613
    %v767 = vunpack.c.h.b16 %v613
    %v768 = vunpack.c.l.b16 %v614
    %v769 = vunpack.c.h.b16 %v614
    %v770 = vunpack.c.l.b16 %v615
    %v771 = vunpack.c.h.b16 %v615
    %v772 = vunpack.c.l.b16 %v616
    %v773 = vunpack.c.h.b16 %v616
    %v774 = vunpack.c.l.b16 %v617
    %v775 = vunpack.c.h.b16 %v617
    %v776 = vunpack.c.l.b16 %v618
    %v777 = vunpack.c.h.b16 %v618
    %v778 = vunpack.c.l.b16 %v619
    %v779 = vunpack.c.h.b16 %v619
    %v780 = vunpack.c.l.b16 %v620
    %v781 = vunpack.c.h.b16 %v620
    %v782 = vunpack.c.l.b16 %v621
    %v783 = vunpack.c.h.b16 %v621
    %v784 = vunpack.c.l.b16 %v622
    %v785 = vunpack.c.h.b16 %v622
    %v786 = vunpack.c.l.b16 %v623
    %v787 = vunpack.c.h.b16 %v623
    %v788 = vunpack.c.l.b16 %v624
    %v789 = vunpack.c.h.b16 %v624
    %v790 = vunpack.c.l.b16 %v625
    %v791 = vunpack.c.h.b16 %v625
    %v792 = vunpack.c.l.b16 %v626
    %v793 = vunpack.c.h.b16 %v626
    %v794 = vunpack.c.l.b16 %v627
    %v795 = vunpack.c.h.b16 %v627
    %v796 = vunpack.c.l.b16 %v628
    %v797 = vunpack.c.h.b16 %v628
    %v798 = vunpack.c.l.b16 %v629
    %v799 = vunpack.c.h.b16 %v629
    %v800 = vunpack.c.l.b16 %v630
    %v801 = vunpack.c.h.b16 %v630
    %v802 = vunpack.c.l.b16 %v631
    %v803 = vunpack.c.h.b16 %v631
    %v804 = vunpack.c.l.b16 %v632
    %v805 = vunpack.c.h.b16 %v632
    %v806 = vunpack.c.l.b16 %v633
    %v807 = vunpack.c.h.b16 %v633
    %v808 = vunpack.c.l.b16 %v634
    %v809 = vunpack.c.h.b16 %v634
    %v810 = vunpack.c.l.b16 %v635
    %v811 = vunpack.c.h.b16 %v635
    %v812 = vunpack.c.l.b16 %v636
    %v813 = vunpack.c.h.b16 %v636
    %v814 = vunpack.c.l.b16 %v637
    %v815 = vunpack.c.h.b16 %v637
    %v816 = vunpack.c.l.b16 %v638
    %v817 = vunpack.c.h.b16 %v638
    %v818 = vunpack.c.l.b16 %v639
    %v819 = vunpack.c.h.b16 %v639
    %v820 = vunpack.c.l.b16 %v640
    %v821 = vunpack.c.h.b16 %v640
    %v822 = vunpack.c.l.b16 %v641
    %v823 = vunpack.c.h.b16 %v641
    %v824 = vunpack.c.l.b16 %v642
    %v825 = vunpack.c.h.b16 %v642
    %v826 = vunpack.c.l.b16 %v643
    %v827 = vunpack.c.h.b16 %v643
    %v828 = vunpack.c.l.b16 %v644
    %v829 = vunpack.c.h.b16 %v644
    %v830 = vunpack.c.l.b16 %v645
    %v831 = vunpack.c.h.b16 %v645
    %v832 = vunpack.c.l.b16 %v646
    %v833 = vunpack.c.h.b16 %v646
    %v834 = vunpack.c.l.b16 %v647
    %v835 = vunpack.c.h.b16 %v647
    %v836 = vunpack.c.l.b16 %v648
    %v837 = vunpack.c.h.b16 %v648
    %v838 = vunpack.c.l.b16 %v649
    %v839 = vunpack.c.h.b16 %v649
    %v840 = vunpack.c.l.b16 %v650
    %v841 = vunpack.c.h.b16 %v650
    %v842 = vunpack.c.l.b16 %v651
    %v843 = vunpack.c.h.b16 %v651
    %v844 = vunpack.c.l.b16 %v652
    %v845 = vunpack.c.h.b16 %v652
    %v846 = vunpack.c.l.b16 %v653
    %v847 = vunpack.c.h.b16 %v653
    %v848 = vunpack.c.l.b16 %v654
    %v849 = vunpack.c.h.b16 %v654
    %v850 = vunpack.c.l.b16 %v655
    %v851 = vunpack.c.h.b16 %v655
    %v852 = vunpack.c.l.b16 %v656
    %v853 = vunpack.c.h.b16 %v656
    %v854 = vunpack.c.l.b16 %v657
    %v855 = vunpack.c.h.b16 %v657
    %v856 = vunpack.c.l.b16 %v658
    %v857 = vunpack.c.h.b16 %v658
    %v858 = vunpack.c.l.b16 %v659
    %v859 = vunpack.c.h.b16 %v659
    %v860 = vunpack.c.l.b16 %v660
    %v861 = vunpack.c.h.b16 %v660
    %v862 = vunpack.c.l.b16 %v661
    %v863 = vunpack.c.h.b16 %v661
    %v864 = vpack.c.b16 %v740, %v736
    %v865 = vpack.c.b16 %v741, %v737
    %v866 = vpack.c.b16 %v742, %v738
    %v867 = vpack.c.b16 %v743, %v739
    %v868 = vpack.c.b16 %v748, %v744
    %v869 = vpack.c.b16 %v749, %v745
    %v870 = vpack.c.b16 %v750, %v746
    %v871 = vpack.c.b16 %v751, %v747
    %v872 = vpack.c.b16 %v756, %v752
    %v873 = vpack.c.b16 %v757, %v753
    %v874 = vpack.c.b16 %v758, %v754
    %v875 = vpack.c.b16 %v759, %v755
    %v876 = vpack.c.b16 %v764, %v760
    %v877 = vpack.c.b16 %v765, %v761
    %v878 = vpack.c.b16 %v766, %v762
    %v879 = vpack.c.b16 %v767, %v763
    %v880 = vpack.c.b16 %v772, %v768
    %v881 = vpack.c.b16 %v773, %v769
    %v882 = vpack.c.b16 %v774, %v770
    %v883 = vpack.c.b16 %v775, %v771
    %v884 = vpack.c.b16 %v780, %v776
    %v885 = vpack.c.b16 %v781, %v777
    %v886 = vpack.c.b16 %v782, %v778
    %v887 = vpack.c.b16 %v783, %v779
    %v888 = vpack.c.b16 %v788, %v784
    %v889 = vpack.c.b16 %v789, %v785
    %v890 = vpack.c.b16 %v790, %v786
    %v891 = vpack.c.b16 %v791, %v787
    %v892 = vpack.c.b16 %v796, %v792
    %v893 = vpack.c.b16 %v797, %v793
    %v894 = vpack.c.b16 %v798, %v794
    %v895 = vpack.c.b16 %v799, %v795
    %v896 = vpack.c.b16 %v804, %v800
    %v897 = vpack.c.b16 %v805, %v801
    %v898 = vpack.c.b16 %v806, %v802
    %v899 = vpack.c.b16 %v807, %v803
    %v900 = vpack.c.b16 %v812, %v808
    %v901 = vpack.c.b16 %v813, %v809
    %v902 = vpack.c.b16 %v814, %v810
    %v903 = vpack.c.b16 %v815, %v811
    %v904 = vpack.c.b16 %v820, %v816
    %v905 = vpack.c.b16 %v821, %v817
    %v906 = vpack.c.b16 %v822, %v818
    %v907 = vpack.c.b16 %v823, %v819
    %v908 = vpack.c.b16 %v828, %v824
    %v909 = vpack.c.b16 %v829, %v825
    %v910 = vpack.c.b16 %v830, %v826
    %v911 = vpack.c.b16 %v831, %v827
    %v912 = vpack.c.b16 %v836, %v832
    %v913 = vpack.c.b16 %v837, %v833
    %v914 = vpack.c.b16 %v838, %v834
    %v915 = vpack.c.b16 %v839, %v835
    %v916 = vpack.c.b16 %v844, %v840
    %v917 = vpack.c.b16 %v845, %v841
    %v918 = vpack.c.b16 %v846, %v842
    %v919 = vpack.c.b16 %v847, %v843
    %v920 = vpack.c.b16 %v852, %v848
    %v921 = vpack.c.b16 %v853, %v849
    %v922 = vpack.c.b16 %v854, %v850
    %v923 = vpack.c.b16 %v855, %v851
    %v924 = vpack.c.b16 %v860, %v856
    %v925 = vpack.c.b16 %v861, %v857
    %v926 = vpack.c.b16 %v862, %v858
    %v927 = vpack.c.b16 %v863, %v859
    %992 = vmatpush.bf16.msra.mxu0 %v892
    %993 = vmatpush.bf16.msra.mxu0 %v888
    %994 = vmatpush.bf16.msra.mxu0 %v884
    %995 = vmatpush.bf16.msra.mxu0 %v880
    %996 = vmatpush.bf16.msra.mxu0 %v876
    %997 = vmatpush.bf16.msra.mxu0 %v872
    %998 = vmatpush.bf16.msra.mxu0 %v868
    %999 = vmatpush.bf16.msra.mxu0 %v864
    %1000 = vmatmul.bf16.gmra.mxu0 %v596
    %v1001 = vpop.f32.mrf.mxu0
    %v1002 = vadd.f32 %v664, %v1001
    %v1003 = vpop.f32.mrf.mxu0
    %1004 = vdwg.mxu0
    %1005 = vmatpush.bf16.msra.mxu0 %v924
    %1006 = vmatpush.bf16.msra.mxu0 %v920
    %1007 = vmatpush.bf16.msra.mxu0 %v916
    %1008 = vmatpush.bf16.msra.mxu0 %v912
    %1009 = vmatpush.bf16.msra.mxu0 %v908
    %1010 = vmatpush.bf16.msra.mxu0 %v904
    %1011 = vmatpush.bf16.msra.mxu0 %v900
    %1012 = vmatpush.bf16.msra.mxu0 %v896
    %1013 = vmatmul.bf16.gmra.mxu0 %v597
    %v1014 = vpop.f32.mrf.mxu0
    %v1015 = vadd.f32 %v1002, %v1014
    %v1016 = vpop.f32.mrf.mxu0
    %1017 = vdwg.mxu0
    %1018 = vmatpush.bf16.msra.mxu0 %v893
    %1019 = vmatpush.bf16.msra.mxu0 %v889
    %1020 = vmatpush.bf16.msra.mxu0 %v885
    %1021 = vmatpush.bf16.msra.mxu0 %v881
    %1022 = vmatpush.bf16.msra.mxu0 %v877
    %1023 = vmatpush.bf16.msra.mxu0 %v873
    %1024 = vmatpush.bf16.msra.mxu0 %v869
    %1025 = vmatpush.bf16.msra.mxu0 %v865
    %1026 = vmatmul.bf16.gmra.mxu0 %v596
    %v1027 = vpop.f32.mrf.mxu0
    %v1028 = vadd.f32 %v665, %v1027
    %v1029 = vpop.f32.mrf.mxu0
    %1030 = vdwg.mxu0
    %1031 = vmatpush.bf16.msra.mxu0 %v925
    %1032 = vmatpush.bf16.msra.mxu0 %v921
    %1033 = vmatpush.bf16.msra.mxu0 %v917
    %1034 = vmatpush.bf16.msra.mxu0 %v913
    %1035 = vmatpush.bf16.msra.mxu0 %v909
    %1036 = vmatpush.bf16.msra.mxu0 %v905
    %1037 = vmatpush.bf16.msra.mxu0 %v901
    %1038 = vmatpush.bf16.msra.mxu0 %v897
    %1039 = vmatmul.bf16.gmra.mxu0 %v597
    %v1040 = vpop.f32.mrf.mxu0
    %v1041 = vadd.f32 %v1028, %v1040
    %v1042 = vpop.f32.mrf.mxu0
    %1043 = vdwg.mxu0
    %1044 = vmatpush.bf16.msra.mxu0 %v894
    %1045 = vmatpush.bf16.msra.mxu0 %v890
    %1046 = vmatpush.bf16.msra.mxu0 %v886
    %1047 = vmatpush.bf16.msra.mxu0 %v882
    %1048 = vmatpush.bf16.msra.mxu0 %v878
    %1049 = vmatpush.bf16.msra.mxu0 %v874
    %1050 = vmatpush.bf16.msra.mxu0 %v870
    %1051 = vmatpush.bf16.msra.mxu0 %v866
    %1052 = vmatmul.bf16.gmra.mxu0 %v596
    %v1053 = vpop.f32.mrf.mxu0
    %v1054 = vadd.f32 %v666, %v1053
    %v1055 = vpop.f32.mrf.mxu0
    %1056 = vdwg.mxu0
    %1057 = vmatpush.bf16.msra.mxu0 %v926
    %1058 = vmatpush.bf16.msra.mxu0 %v922
    %1059 = vmatpush.bf16.msra.mxu0 %v918
    %1060 = vmatpush.bf16.msra.mxu0 %v914
    %1061 = vmatpush.bf16.msra.mxu0 %v910
    %1062 = vmatpush.bf16.msra.mxu0 %v906
    %1063 = vmatpush.bf16.msra.mxu0 %v902
    %1064 = vmatpush.bf16.msra.mxu0 %v898
    %1065 = vmatmul.bf16.gmra.mxu0 %v597
    %v1066 = vpop.f32.mrf.mxu0
    %v1067 = vadd.f32 %v1054, %v1066
    %v1068 = vpop.f32.mrf.mxu0
    %1069 = vdwg.mxu0
    %1070 = vmatpush.bf16.msra.mxu0 %v895
    %1071 = vmatpush.bf16.msra.mxu0 %v891
    %1072 = vmatpush.bf16.msra.mxu0 %v887
    %1073 = vmatpush.bf16.msra.mxu0 %v883
    %1074 = vmatpush.bf16.msra.mxu0 %v879
    %1075 = vmatpush.bf16.msra.mxu0 %v875
    %1076 = vmatpush.bf16.msra.mxu0 %v871
    %1077 = vmatpush.bf16.msra.mxu0 %v867
    %1078 = vmatmul.bf16.gmra.mxu0 %v596
    %v1079 = vpop.f32.mrf.mxu0
    %v1080 = vadd.f32 %v667, %v1079
    %v1081 = vpop.f32.mrf.mxu0
    %1082 = vdwg.mxu0
    %1083 = vmatpush.bf16.msra.mxu0 %v927
    %1084 = vmatpush.bf16.msra.mxu0 %v923
    %1085 = vmatpush.bf16.msra.mxu0 %v919
    %1086 = vmatpush.bf16.msra.mxu0 %v915
    %1087 = vmatpush.bf16.msra.mxu0 %v911
    %1088 = vmatpush.bf16.msra.mxu0 %v907
    %1089 = vmatpush.bf16.msra.mxu0 %v903
    %1090 = vmatpush.bf16.msra.mxu0 %v899
    %1091 = vmatmul.bf16.gmra.mxu0 %v597
    %v1092 = vpop.f32.mrf.mxu0
    %v1093 = vadd.f32 %v1080, %v1092
    %v1094 = vpop.f32.mrf.mxu0
    %1095 = vdwg.mxu0
    %v1096 = vld [vmem:[#allocation17] sm:$0xf]
    %v1097 = vld [vmem:[#allocation19] sm:$0xf]
    %v1098 = vrot.slane %v1015, 4
    %v1099 = vadd.f32 %v1015, %v1098
    %v1100 = vrot.slane %v1099, 2
    %v1101 = vadd.f32 %v1099, %v1100
    %v1102 = vrot.slane %v1101, 1
    %v1103 = vadd.f32 %v1101, %v1102
    %v1104 = vrot.slane %v1041, 4
    %v1105 = vadd.f32 %v1041, %v1104
    %v1106 = vrot.slane %v1105, 2
    %v1107 = vadd.f32 %v1105, %v1106
    %v1108 = vrot.slane %v1107, 1
    %v1109 = vadd.f32 %v1107, %v1108
    %v1110 = vrot.slane %v1067, 4
    %v1111 = vadd.f32 %v1067, %v1110
    %v1112 = vrot.slane %v1111, 2
    %v1113 = vadd.f32 %v1111, %v1112
    %v1114 = vrot.slane %v1113, 1
    %v1115 = vadd.f32 %v1113, %v1114
    %v1116 = vrot.slane %v1093, 4
    %v1117 = vadd.f32 %v1093, %v1116
    %v1118 = vrot.slane %v1117, 2
    %v1119 = vadd.f32 %v1117, %v1118
    %v1120 = vrot.slane %v1119, 1
    %v1121 = vadd.f32 %v1119, %v1120
    %v1122 = vmul.f32 %v1103, %v531
    %v1123 = vmul.f32 %v1109, %v531
    %v1124 = vmul.f32 %v1115, %v531
    %v1125 = vmul.f32 %v1121, %v531
    %v1126 = vsub.f32 %v1015, %v1122
    %v1127 = vsub.f32 %v1041, %v1123
    %v1128 = vsub.f32 %v1067, %v1124
    %v1129 = vsub.f32 %v1093, %v1125
    %v1130 = vmul.f32 %v1126, %v1126
    %v1131 = vmul.f32 %v1127, %v1127
    %v1132 = vmul.f32 %v1128, %v1128
    %v1133 = vmul.f32 %v1129, %v1129
    %v1134 = vrot.slane %v1130, 4
    %v1135 = vadd.f32 %v1130, %v1134
    %v1136 = vrot.slane %v1135, 2
    %v1137 = vadd.f32 %v1135, %v1136
    %v1138 = vrot.slane %v1137, 1
    %v1139 = vadd.f32 %v1137, %v1138
    %v1140 = vrot.slane %v1131, 4
    %v1141 = vadd.f32 %v1131, %v1140
    %v1142 = vrot.slane %v1141, 2
    %v1143 = vadd.f32 %v1141, %v1142
    %v1144 = vrot.slane %v1143, 1
    %v1145 = vadd.f32 %v1143, %v1144
    %v1146 = vrot.slane %v1132, 4
    %v1147 = vadd.f32 %v1132, %v1146
    %v1148 = vrot.slane %v1147, 2
    %v1149 = vadd.f32 %v1147, %v1148
    %v1150 = vrot.slane %v1149, 1
    %v1151 = vadd.f32 %v1149, %v1150
    %v1152 = vrot.slane %v1133, 4
    %v1153 = vadd.f32 %v1133, %v1152
    %v1154 = vrot.slane %v1153, 2
    %v1155 = vadd.f32 %v1153, %v1154
    %v1156 = vrot.slane %v1155, 1
    %v1157 = vadd.f32 %v1155, %v1156
    %v1158 = vmul.f32 %v1139, %v531
    %v1159 = vmul.f32 %v1145, %v531
    %v1160 = vmul.f32 %v1151, %v531
    %v1161 = vmul.f32 %v1157, %v531
    %v1162 = vadd.f32 %v1158, 0.8
    %v1163 = vadd.f32 %v1159, 0.8
    %v1164 = vadd.f32 %v1160, 0.8
    %v1165 = vadd.f32 %v1161, 0.8
    %v1166 = vrsqrt.pop %v1162
    %v1167 = vmul.f32 %v1166, %v1162
    %v1168 = vmul.f32 %v1167, %v1166
    %v1169 = vmul.f32 0.5, %v1168
    %v1170 = vsub.f32 1.5, %v1169
    %v1171 = vmul.f32 %v1166, %v1170
    %vm1172 = vweird.f32 %v1162
    %vm1173 = vweird.f32 %v1166
    %vm1174 = vmor %vm1172, %vm1173
    %v1175 = vsel %vm1174, %v1166, %v1171
    %v1176 = vrsqrt.pop %v1163
    %v1177 = vmul.f32 %v1176, %v1163
    %v1178 = vmul.f32 %v1177, %v1176
    %v1179 = vmul.f32 0.5, %v1178
    %v1180 = vsub.f32 1.5, %v1179
    %v1181 = vmul.f32 %v1176, %v1180
    %vm1182 = vweird.f32 %v1163
    %vm1183 = vweird.f32 %v1176
    %vm1184 = vmor %vm1182, %vm1183
    %v1185 = vsel %vm1184, %v1176, %v1181
    %v1186 = vrsqrt.pop %v1164
    %v1187 = vmul.f32 %v1186, %v1164
    %v1188 = vmul.f32 %v1187, %v1186
    %v1189 = vmul.f32 0.5, %v1188
    %v1190 = vsub.f32 1.5, %v1189
    %v1191 = vmul.f32 %v1186, %v1190
    %vm1192 = vweird.f32 %v1164
    %vm1193 = vweird.f32 %v1186
    %vm1194 = vmor %vm1192, %vm1193
    %v1195 = vsel %vm1194, %v1186, %v1191
    %v1196 = vrsqrt.pop %v1165
    %v1197 = vmul.f32 %v1196, %v1165
    %v1198 = vmul.f32 %v1197, %v1196
    %v1199 = vmul.f32 0.5, %v1198
    %v1200 = vsub.f32 1.5, %v1199
    %v1201 = vmul.f32 %v1196, %v1200
    %vm1202 = vweird.f32 %v1165
    %vm1203 = vweird.f32 %v1196
    %vm1204 = vmor %vm1202, %vm1203
    %v1205 = vsel %vm1204, %v1196, %v1201
    %v1206 = vmul.f32 %v1126, %v1175
    %v1207 = vmul.f32 %v1127, %v1185
    %v1208 = vmul.f32 %v1128, %v1195
    %v1209 = vmul.f32 %v1129, %v1205
    %v1211 = vperm.slane %v1096, 0
    %v1212 = vperm.slane %v1096, 1
    %v1213 = vperm.slane %v1096, 2
    %v1214 = vperm.slane %v1096, 3
    %v1219 = vmul.f32 %v1206, %v1211
    %v1220 = vmul.f32 %v1207, %v1212
    %v1221 = vmul.f32 %v1208, %v1213
    %v1222 = vmul.f32 %v1209, %v1214
    %v1224 = vperm.slane %v1097, 0
    %v1225 = vperm.slane %v1097, 1
    %v1226 = vperm.slane %v1097, 2
    %v1227 = vperm.slane %v1097, 3
    %v1232 = vadd.f32 %v1219, %v1224
    %v1233 = vadd.f32 %v1220, %v1225
    %v1234 = vadd.f32 %v1221, %v1226
    %v1235 = vadd.f32 %v1222, %v1227
    %vm1236 = vcmp.gt.f32.partialorder %v1232, 0.0
    %vm1237 = vcmp.gt.f32.partialorder %v1233, 0.0
    %vm1238 = vcmp.gt.f32.partialorder %v1234, 0.0
    %vm1239 = vcmp.gt.f32.partialorder %v1235, 0.0
    %v1240 = vmul.f32 %v1232, 0.2
    %v1241 = vmul.f32 %v1233, 0.2
    %v1242 = vmul.f32 %v1234, 0.2
    %v1243 = vmul.f32 %v1235, 0.2
    %v1244 = vsel %vm1236, %v1232, %v1240
    %v1245 = vsel %vm1237, %v1233, %v1241
    %v1246 = vsel %vm1238, %v1234, %v1242
    %v1247 = vsel %vm1239, %v1235, %v1243
    %v1248 = vpack.c.bf16 %v1244, %v1244
    %v1249 = vpack.c.bf16 %v1245, %v1245
    %v1250 = vpack.c.bf16 %v1246, %v1246
    %v1251 = vpack.c.bf16 %v1247, %v1247
    %v1252 = vld [vmem:[#allocation20] sm:$0xff]
    %v1253 = vld [vmem:[#allocation20 + $0x8] sm:$0xff]
    %v1254 = vld [vmem:[#allocation20 + $0x10] sm:$0xff]
    %v1255 = vld [vmem:[#allocation20 + $0x18] sm:$0xff]
    %v1256 = vld [vmem:[#allocation20 + $0x20] sm:$0xff]
    %v1257 = vld [vmem:[#allocation20 + $0x28] sm:$0xff]
    %v1258 = vld [vmem:[#allocation20 + $0x30] sm:$0xff]
    %v1259 = vld [vmem:[#allocation20 + $0x38] sm:$0xff]
    %v1260 = vld [vmem:[#allocation20 + $0x40] sm:$0xff]
    %v1261 = vld [vmem:[#allocation20 + $0x48] sm:$0xff]
    %v1262 = vld [vmem:[#allocation20 + $0x50] sm:$0xff]
    %v1263 = vld [vmem:[#allocation20 + $0x58] sm:$0xff]
    %v1264 = vld [vmem:[#allocation20 + $0x60] sm:$0xff]
    %v1265 = vld [vmem:[#allocation20 + $0x68] sm:$0xff]
    %v1266 = vld [vmem:[#allocation20 + $0x70] sm:$0xff]
    %v1267 = vld [vmem:[#allocation20 + $0x78] sm:$0xff]
    %v1268 = vld [vmem:[#allocation20 + $0x80] sm:$0xff]
    %v1269 = vld [vmem:[#allocation20 + $0x88] sm:$0xff]
    %v1270 = vld [vmem:[#allocation20 + $0x90] sm:$0xff]
    %v1271 = vld [vmem:[#allocation20 + $0x98] sm:$0xff]
    %v1272 = vld [vmem:[#allocation20 + $0xa0] sm:$0xff]
    %v1273 = vld [vmem:[#allocation20 + $0xa8] sm:$0xff]
    %v1274 = vld [vmem:[#allocation20 + $0xb0] sm:$0xff]
    %v1275 = vld [vmem:[#allocation20 + $0xb8] sm:$0xff]
    %v1276 = vld [vmem:[#allocation20 + $0xc0] sm:$0xff]
    %v1277 = vld [vmem:[#allocation20 + $0xc8] sm:$0xff]
    %v1278 = vld [vmem:[#allocation20 + $0xd0] sm:$0xff]
    %v1279 = vld [vmem:[#allocation20 + $0xd8] sm:$0xff]
    %v1280 = vld [vmem:[#allocation20 + $0xe0] sm:$0xff]
    %v1281 = vld [vmem:[#allocation20 + $0xe8] sm:$0xff]
    %v1282 = vld [vmem:[#allocation20 + $0xf0] sm:$0xff]
    %v1283 = vld [vmem:[#allocation20 + $0xf8] sm:$0xff]
    %v1284 = vld [vmem:[#allocation20 + $0x100] sm:$0xff]
    %v1285 = vld [vmem:[#allocation20 + $0x108] sm:$0xff]
    %v1286 = vld [vmem:[#allocation20 + $0x110] sm:$0xff]
    %v1287 = vld [vmem:[#allocation20 + $0x118] sm:$0xff]
    %v1288 = vld [vmem:[#allocation20 + $0x120] sm:$0xff]
    %v1289 = vld [vmem:[#allocation20 + $0x128] sm:$0xff]
    %v1290 = vld [vmem:[#allocation20 + $0x130] sm:$0xff]
    %v1291 = vld [vmem:[#allocation20 + $0x138] sm:$0xff]
    %v1292 = vld [vmem:[#allocation20 + $0x140] sm:$0xff]
    %v1293 = vld [vmem:[#allocation20 + $0x148] sm:$0xff]
    %v1294 = vld [vmem:[#allocation20 + $0x150] sm:$0xff]
    %v1295 = vld [vmem:[#allocation20 + $0x158] sm:$0xff]
    %v1296 = vld [vmem:[#allocation20 + $0x160] sm:$0xff]
    %v1297 = vld [vmem:[#allocation20 + $0x168] sm:$0xff]
    %v1298 = vld [vmem:[#allocation20 + $0x170] sm:$0xff]
    %v1299 = vld [vmem:[#allocation20 + $0x178] sm:$0xff]
    %v1300 = vld [vmem:[#allocation20 + $0x180] sm:$0xff]
    %v1301 = vld [vmem:[#allocation20 + $0x188] sm:$0xff]
    %v1302 = vld [vmem:[#allocation20 + $0x190] sm:$0xff]
    %v1303 = vld [vmem:[#allocation20 + $0x198] sm:$0xff]
    %v1304 = vld [vmem:[#allocation20 + $0x1a0] sm:$0xff]
    %v1305 = vld [vmem:[#allocation20 + $0x1a8] sm:$0xff]
    %v1306 = vld [vmem:[#allocation20 + $0x1b0] sm:$0xff]
    %v1307 = vld [vmem:[#allocation20 + $0x1b8] sm:$0xff]
    %v1308 = vld [vmem:[#allocation20 + $0x1c0] sm:$0xff]
    %v1309 = vld [vmem:[#allocation20 + $0x1c8] sm:$0xff]
    %v1310 = vld [vmem:[#allocation20 + $0x1d0] sm:$0xff]
    %v1311 = vld [vmem:[#allocation20 + $0x1d8] sm:$0xff]
    %v1312 = vld [vmem:[#allocation20 + $0x1e0] sm:$0xff]
    %v1313 = vld [vmem:[#allocation20 + $0x1e8] sm:$0xff]
    %v1314 = vld [vmem:[#allocation20 + $0x1f0] sm:$0xff]
    %v1315 = vld [vmem:[#allocation20 + $0x1f8] sm:$0xff]
    %v1316 = vld [vmem:[#allocation20 + $0x200] sm:$0xff]
    %v1317 = vld [vmem:[#allocation20 + $0x208] sm:$0xff]
    %v1318 = vld [vmem:[#allocation20 + $0x210] sm:$0xff]
    %v1319 = vld [vmem:[#allocation20 + $0x218] sm:$0xff]
    %v1320 = vld [vmem:[#allocation20 + $0x220] sm:$0xff]
    %v1321 = vld [vmem:[#allocation20 + $0x228] sm:$0xff]
    %v1322 = vld [vmem:[#allocation20 + $0x230] sm:$0xff]
    %v1323 = vld [vmem:[#allocation20 + $0x238] sm:$0xff]
    %v1324 = vld [vmem:[#allocation20 + $0x240] sm:$0xff]
    %v1325 = vld [vmem:[#allocation20 + $0x248] sm:$0xff]
    %v1326 = vld [vmem:[#allocation20 + $0x250] sm:$0xff]
    %v1327 = vld [vmem:[#allocation20 + $0x258] sm:$0xff]
    %v1328 = vld [vmem:[#allocation20 + $0x260] sm:$0xff]
    %v1329 = vld [vmem:[#allocation20 + $0x268] sm:$0xff]
    %v1330 = vld [vmem:[#allocation20 + $0x270] sm:$0xff]
    %v1331 = vld [vmem:[#allocation20 + $0x278] sm:$0xff]
    %v1332 = vld [vmem:[#allocation20 + $0x280] sm:$0xff]
    %v1333 = vld [vmem:[#allocation20 + $0x288] sm:$0xff]
    %v1334 = vld [vmem:[#allocation20 + $0x290] sm:$0xff]
    %v1335 = vld [vmem:[#allocation20 + $0x298] sm:$0xff]
    %v1336 = vld [vmem:[#allocation20 + $0x2a0] sm:$0xff]
    %v1337 = vld [vmem:[#allocation20 + $0x2a8] sm:$0xff]
    %v1338 = vld [vmem:[#allocation20 + $0x2b0] sm:$0xff]
    %v1339 = vld [vmem:[#allocation20 + $0x2b8] sm:$0xff]
    %v1340 = vld [vmem:[#allocation20 + $0x2c0] sm:$0xff]
    %v1341 = vld [vmem:[#allocation20 + $0x2c8] sm:$0xff]
    %v1342 = vld [vmem:[#allocation20 + $0x2d0] sm:$0xff]
    %v1343 = vld [vmem:[#allocation20 + $0x2d8] sm:$0xff]
    %v1344 = vld [vmem:[#allocation20 + $0x2e0] sm:$0xff]
    %v1345 = vld [vmem:[#allocation20 + $0x2e8] sm:$0xff]
    %v1346 = vld [vmem:[#allocation20 + $0x2f0] sm:$0xff]
    %v1347 = vld [vmem:[#allocation20 + $0x2f8] sm:$0xff]
    %v1348 = vld [vmem:[#allocation20 + $0x300] sm:$0xff]
    %v1349 = vld [vmem:[#allocation20 + $0x308] sm:$0xff]
    %v1350 = vld [vmem:[#allocation20 + $0x310] sm:$0xff]
    %v1351 = vld [vmem:[#allocation20 + $0x318] sm:$0xff]
    %v1352 = vld [vmem:[#allocation20 + $0x320] sm:$0xff]
    %v1353 = vld [vmem:[#allocation20 + $0x328] sm:$0xff]
    %v1354 = vld [vmem:[#allocation20 + $0x330] sm:$0xff]
    %v1355 = vld [vmem:[#allocation20 + $0x338] sm:$0xff]
    %v1356 = vld [vmem:[#allocation20 + $0x340] sm:$0xff]
    %v1357 = vld [vmem:[#allocation20 + $0x348] sm:$0xff]
    %v1358 = vld [vmem:[#allocation20 + $0x350] sm:$0xff]
    %v1359 = vld [vmem:[#allocation20 + $0x358] sm:$0xff]
    %v1360 = vld [vmem:[#allocation20 + $0x360] sm:$0xff]
    %v1361 = vld [vmem:[#allocation20 + $0x368] sm:$0xff]
    %v1362 = vld [vmem:[#allocation20 + $0x370] sm:$0xff]
    %v1363 = vld [vmem:[#allocation20 + $0x378] sm:$0xff]
    %v1364 = vld [vmem:[#allocation20 + $0x380] sm:$0xff]
    %v1365 = vld [vmem:[#allocation20 + $0x388] sm:$0xff]
    %v1366 = vld [vmem:[#allocation20 + $0x390] sm:$0xff]
    %v1367 = vld [vmem:[#allocation20 + $0x398] sm:$0xff]
    %v1368 = vld [vmem:[#allocation20 + $0x3a0] sm:$0xff]
    %v1369 = vld [vmem:[#allocation20 + $0x3a8] sm:$0xff]
    %v1370 = vld [vmem:[#allocation20 + $0x3b0] sm:$0xff]
    %v1371 = vld [vmem:[#allocation20 + $0x3b8] sm:$0xff]
    %v1372 = vld [vmem:[#allocation20 + $0x3c0] sm:$0xff]
    %v1373 = vld [vmem:[#allocation20 + $0x3c8] sm:$0xff]
    %v1374 = vld [vmem:[#allocation20 + $0x3d0] sm:$0xff]
    %v1375 = vld [vmem:[#allocation20 + $0x3d8] sm:$0xff]
    %v1376 = vld [vmem:[#allocation20 + $0x3e0] sm:$0xff]
    %v1377 = vld [vmem:[#allocation20 + $0x3e8] sm:$0xff]
    %v1378 = vld [vmem:[#allocation20 + $0x3f0] sm:$0xff]
    %v1379 = vld [vmem:[#allocation20 + $0x3f8] sm:$0xff]
    %v1380 = vld [vmem:[#allocation20 + $0x400] sm:$0xff]
    %v1381 = vld [vmem:[#allocation20 + $0x408] sm:$0xff]
    %v1382 = vld [vmem:[#allocation20 + $0x410] sm:$0xff]
    %v1383 = vld [vmem:[#allocation20 + $0x418] sm:$0xff]
    %v1384 = vld [vmem:[#allocation20 + $0x420] sm:$0xff]
    %v1385 = vld [vmem:[#allocation20 + $0x428] sm:$0xff]
    %v1386 = vld [vmem:[#allocation20 + $0x430] sm:$0xff]
    %v1387 = vld [vmem:[#allocation20 + $0x438] sm:$0xff]
    %v1388 = vld [vmem:[#allocation20 + $0x440] sm:$0xff]
    %v1389 = vld [vmem:[#allocation20 + $0x448] sm:$0xff]
    %v1390 = vld [vmem:[#allocation20 + $0x450] sm:$0xff]
    %v1391 = vld [vmem:[#allocation20 + $0x458] sm:$0xff]
    %v1392 = vld [vmem:[#allocation20 + $0x460] sm:$0xff]
    %v1393 = vld [vmem:[#allocation20 + $0x468] sm:$0xff]
    %v1394 = vld [vmem:[#allocation20 + $0x470] sm:$0xff]
    %v1395 = vld [vmem:[#allocation20 + $0x478] sm:$0xff]
    %v1396 = vld [vmem:[#allocation20 + $0x480] sm:$0xff]
    %v1397 = vld [vmem:[#allocation20 + $0x488] sm:$0xff]
    %v1398 = vld [vmem:[#allocation20 + $0x490] sm:$0xff]
    %v1399 = vld [vmem:[#allocation20 + $0x498] sm:$0xff]
    %v1400 = vld [vmem:[#allocation20 + $0x4a0] sm:$0xff]
    %v1401 = vld [vmem:[#allocation20 + $0x4a8] sm:$0xff]
    %v1402 = vld [vmem:[#allocation20 + $0x4b0] sm:$0xff]
    %v1403 = vld [vmem:[#allocation20 + $0x4b8] sm:$0xff]
    %v1404 = vld [vmem:[#allocation20 + $0x4c0] sm:$0xff]
    %v1405 = vld [vmem:[#allocation20 + $0x4c8] sm:$0xff]
    %v1406 = vld [vmem:[#allocation20 + $0x4d0] sm:$0xff]
    %v1407 = vld [vmem:[#allocation20 + $0x4d8] sm:$0xff]
    %v1408 = vld [vmem:[#allocation20 + $0x4e0] sm:$0xff]
    %v1409 = vld [vmem:[#allocation20 + $0x4e8] sm:$0xff]
    %v1410 = vld [vmem:[#allocation20 + $0x4f0] sm:$0xff]
    %v1411 = vld [vmem:[#allocation20 + $0x4f8] sm:$0xff]
    %v1412 = vld [vmem:[#allocation20 + $0x500] sm:$0xff]
    %v1413 = vld [vmem:[#allocation20 + $0x508] sm:$0xff]
    %v1414 = vld [vmem:[#allocation20 + $0x510] sm:$0xff]
    %v1415 = vld [vmem:[#allocation20 + $0x518] sm:$0xff]
    %v1416 = vld [vmem:[#allocation20 + $0x520] sm:$0xff]
    %v1417 = vld [vmem:[#allocation20 + $0x528] sm:$0xff]
    %v1418 = vld [vmem:[#allocation20 + $0x530] sm:$0xff]
    %v1419 = vld [vmem:[#allocation20 + $0x538] sm:$0xff]
    %v1420 = vld [vmem:[#allocation20 + $0x540] sm:$0xff]
    %v1421 = vld [vmem:[#allocation20 + $0x548] sm:$0xff]
    %v1422 = vld [vmem:[#allocation20 + $0x550] sm:$0xff]
    %v1423 = vld [vmem:[#allocation20 + $0x558] sm:$0xff]
    %v1424 = vld [vmem:[#allocation20 + $0x560] sm:$0xff]
    %v1425 = vld [vmem:[#allocation20 + $0x568] sm:$0xff]
    %v1426 = vld [vmem:[#allocation20 + $0x570] sm:$0xff]
    %v1427 = vld [vmem:[#allocation20 + $0x578] sm:$0xff]
    %v1428 = vld [vmem:[#allocation20 + $0x580] sm:$0xff]
    %v1429 = vld [vmem:[#allocation20 + $0x588] sm:$0xff]
    %v1430 = vld [vmem:[#allocation20 + $0x590] sm:$0xff]
    %v1431 = vld [vmem:[#allocation20 + $0x598] sm:$0xff]
    %v1432 = vld [vmem:[#allocation20 + $0x5a0] sm:$0xff]
    %v1433 = vld [vmem:[#allocation20 + $0x5a8] sm:$0xff]
    %v1434 = vld [vmem:[#allocation20 + $0x5b0] sm:$0xff]
    %v1435 = vld [vmem:[#allocation20 + $0x5b8] sm:$0xff]
    %v1436 = vld [vmem:[#allocation20 + $0x5c0] sm:$0xff]
    %v1437 = vld [vmem:[#allocation20 + $0x5c8] sm:$0xff]
    %v1438 = vld [vmem:[#allocation20 + $0x5d0] sm:$0xff]
    %v1439 = vld [vmem:[#allocation20 + $0x5d8] sm:$0xff]
    %v1440 = vld [vmem:[#allocation20 + $0x5e0] sm:$0xff]
    %v1441 = vld [vmem:[#allocation20 + $0x5e8] sm:$0xff]
    %v1442 = vld [vmem:[#allocation20 + $0x5f0] sm:$0xff]
    %v1443 = vld [vmem:[#allocation20 + $0x5f8] sm:$0xff]
    %v1444 = vld [vmem:[#allocation20 + $0x600] sm:$0xff]
    %v1445 = vld [vmem:[#allocation20 + $0x608] sm:$0xff]
    %v1446 = vld [vmem:[#allocation20 + $0x610] sm:$0xff]
    %v1447 = vld [vmem:[#allocation20 + $0x618] sm:$0xff]
    %v1448 = vld [vmem:[#allocation20 + $0x620] sm:$0xff]
    %v1449 = vld [vmem:[#allocation20 + $0x628] sm:$0xff]
    %v1450 = vld [vmem:[#allocation20 + $0x630] sm:$0xff]
    %v1451 = vld [vmem:[#allocation20 + $0x638] sm:$0xff]
    %v1452 = vld [vmem:[#allocation20 + $0x640] sm:$0xff]
    %v1453 = vld [vmem:[#allocation20 + $0x648] sm:$0xff]
    %v1454 = vld [vmem:[#allocation20 + $0x650] sm:$0xff]
    %v1455 = vld [vmem:[#allocation20 + $0x658] sm:$0xff]
    %v1456 = vld [vmem:[#allocation20 + $0x660] sm:$0xff]
    %v1457 = vld [vmem:[#allocation20 + $0x668] sm:$0xff]
    %v1458 = vld [vmem:[#allocation20 + $0x670] sm:$0xff]
    %v1459 = vld [vmem:[#allocation20 + $0x678] sm:$0xff]
    %v1460 = vld [vmem:[#allocation20 + $0x680] sm:$0xff]
    %v1461 = vld [vmem:[#allocation20 + $0x688] sm:$0xff]
    %v1462 = vld [vmem:[#allocation20 + $0x690] sm:$0xff]
    %v1463 = vld [vmem:[#allocation20 + $0x698] sm:$0xff]
    %v1464 = vld [vmem:[#allocation20 + $0x6a0] sm:$0xff]
    %v1465 = vld [vmem:[#allocation20 + $0x6a8] sm:$0xff]
    %v1466 = vld [vmem:[#allocation20 + $0x6b0] sm:$0xff]
    %v1467 = vld [vmem:[#allocation20 + $0x6b8] sm:$0xff]
    %v1468 = vld [vmem:[#allocation20 + $0x6c0] sm:$0xff]
    %v1469 = vld [vmem:[#allocation20 + $0x6c8] sm:$0xff]
    %v1470 = vld [vmem:[#allocation20 + $0x6d0] sm:$0xff]
    %v1471 = vld [vmem:[#allocation20 + $0x6d8] sm:$0xff]
    %v1472 = vld [vmem:[#allocation20 + $0x6e0] sm:$0xff]
    %v1473 = vld [vmem:[#allocation20 + $0x6e8] sm:$0xff]
    %v1474 = vld [vmem:[#allocation20 + $0x6f0] sm:$0xff]
    %v1475 = vld [vmem:[#allocation20 + $0x6f8] sm:$0xff]
    %v1476 = vld [vmem:[#allocation20 + $0x700] sm:$0xff]
    %v1477 = vld [vmem:[#allocation20 + $0x708] sm:$0xff]
    %v1478 = vld [vmem:[#allocation20 + $0x710] sm:$0xff]
    %v1479 = vld [vmem:[#allocation20 + $0x718] sm:$0xff]
    %v1480 = vld [vmem:[#allocation20 + $0x720] sm:$0xff]
    %v1481 = vld [vmem:[#allocation20 + $0x728] sm:$0xff]
    %v1482 = vld [vmem:[#allocation20 + $0x730] sm:$0xff]
    %v1483 = vld [vmem:[#allocation20 + $0x738] sm:$0xff]
    %v1484 = vld [vmem:[#allocation20 + $0x740] sm:$0xff]
    %v1485 = vld [vmem:[#allocation20 + $0x748] sm:$0xff]
    %v1486 = vld [vmem:[#allocation20 + $0x750] sm:$0xff]
    %v1487 = vld [vmem:[#allocation20 + $0x758] sm:$0xff]
    %v1488 = vld [vmem:[#allocation20 + $0x760] sm:$0xff]
    %v1489 = vld [vmem:[#allocation20 + $0x768] sm:$0xff]
    %v1490 = vld [vmem:[#allocation20 + $0x770] sm:$0xff]
    %v1491 = vld [vmem:[#allocation20 + $0x778] sm:$0xff]
    %v1492 = vld [vmem:[#allocation20 + $0x780] sm:$0xff]
    %v1493 = vld [vmem:[#allocation20 + $0x788] sm:$0xff]
    %v1494 = vld [vmem:[#allocation20 + $0x790] sm:$0xff]
    %v1495 = vld [vmem:[#allocation20 + $0x798] sm:$0xff]
    %v1496 = vld [vmem:[#allocation20 + $0x7a0] sm:$0xff]
    %v1497 = vld [vmem:[#allocation20 + $0x7a8] sm:$0xff]
    %v1498 = vld [vmem:[#allocation20 + $0x7b0] sm:$0xff]
    %v1499 = vld [vmem:[#allocation20 + $0x7b8] sm:$0xff]
    %v1500 = vld [vmem:[#allocation20 + $0x7c0] sm:$0xff]
    %v1501 = vld [vmem:[#allocation20 + $0x7c8] sm:$0xff]
    %v1502 = vld [vmem:[#allocation20 + $0x7d0] sm:$0xff]
    %v1503 = vld [vmem:[#allocation20 + $0x7d8] sm:$0xff]
    %v1504 = vld [vmem:[#allocation20 + $0x7e0] sm:$0xff]
    %v1505 = vld [vmem:[#allocation20 + $0x7e8] sm:$0xff]
    %v1506 = vld [vmem:[#allocation20 + $0x7f0] sm:$0xff]
    %v1507 = vld [vmem:[#allocation20 + $0x7f8] sm:$0xff]
    %v1508 = vld [vmem:[#allocation22] sm:$0xff]
    %v1510 = vperm.slane %v1508, 0
    %v1511 = vperm.slane %v1508, 1
    %v1512 = vperm.slane %v1508, 2
    %v1513 = vperm.slane %v1508, 3
    %v1514 = vperm.slane %v1508, 4
    %v1515 = vperm.slane %v1508, 5
    %v1516 = vperm.slane %v1508, 6
    %v1517 = vperm.slane %v1508, 7
    %v1782 = vunpack.c.l.b16 %v1252
    %v1783 = vunpack.c.h.b16 %v1252
    %v1784 = vunpack.c.l.b16 %v1253
    %v1785 = vunpack.c.h.b16 %v1253
    %v1786 = vunpack.c.l.b16 %v1254
    %v1787 = vunpack.c.h.b16 %v1254
    %v1788 = vunpack.c.l.b16 %v1255
    %v1789 = vunpack.c.h.b16 %v1255
    %v1790 = vunpack.c.l.b16 %v1256
    %v1791 = vunpack.c.h.b16 %v1256
    %v1792 = vunpack.c.l.b16 %v1257
    %v1793 = vunpack.c.h.b16 %v1257
    %v1794 = vunpack.c.l.b16 %v1258
    %v1795 = vunpack.c.h.b16 %v1258
    %v1796 = vunpack.c.l.b16 %v1259
    %v1797 = vunpack.c.h.b16 %v1259
    %v1798 = vunpack.c.l.b16 %v1260
    %v1799 = vunpack.c.h.b16 %v1260
    %v1800 = vunpack.c.l.b16 %v1261
    %v1801 = vunpack.c.h.b16 %v1261
    %v1802 = vunpack.c.l.b16 %v1262
    %v1803 = vunpack.c.h.b16 %v1262
    %v1804 = vunpack.c.l.b16 %v1263
    %v1805 = vunpack.c.h.b16 %v1263
    %v1806 = vunpack.c.l.b16 %v1264
    %v1807 = vunpack.c.h.b16 %v1264
    %v1808 = vunpack.c.l.b16 %v1265
    %v1809 = vunpack.c.h.b16 %v1265
    %v1810 = vunpack.c.l.b16 %v1266
    %v1811 = vunpack.c.h.b16 %v1266
    %v1812 = vunpack.c.l.b16 %v1267
    %v1813 = vunpack.c.h.b16 %v1267
    %v1814 = vunpack.c.l.b16 %v1268
    %v1815 = vunpack.c.h.b16 %v1268
    %v1816 = vunpack.c.l.b16 %v1269
    %v1817 = vunpack.c.h.b16 %v1269
    %v1818 = vunpack.c.l.b16 %v1270
    %v1819 = vunpack.c.h.b16 %v1270
    %v1820 = vunpack.c.l.b16 %v1271
    %v1821 = vunpack.c.h.b16 %v1271
    %v1822 = vunpack.c.l.b16 %v1272
    %v1823 = vunpack.c.h.b16 %v1272
    %v1824 = vunpack.c.l.b16 %v1273
    %v1825 = vunpack.c.h.b16 %v1273
    %v1826 = vunpack.c.l.b16 %v1274
    %v1827 = vunpack.c.h.b16 %v1274
    %v1828 = vunpack.c.l.b16 %v1275
    %v1829 = vunpack.c.h.b16 %v1275
    %v1830 = vunpack.c.l.b16 %v1276
    %v1831 = vunpack.c.h.b16 %v1276
    %v1832 = vunpack.c.l.b16 %v1277
    %v1833 = vunpack.c.h.b16 %v1277
    %v1834 = vunpack.c.l.b16 %v1278
    %v1835 = vunpack.c.h.b16 %v1278
    %v1836 = vunpack.c.l.b16 %v1279
    %v1837 = vunpack.c.h.b16 %v1279
    %v1838 = vunpack.c.l.b16 %v1280
    %v1839 = vunpack.c.h.b16 %v1280
    %v1840 = vunpack.c.l.b16 %v1281
    %v1841 = vunpack.c.h.b16 %v1281
    %v1842 = vunpack.c.l.b16 %v1282
    %v1843 = vunpack.c.h.b16 %v1282
    %v1844 = vunpack.c.l.b16 %v1283
    %v1845 = vunpack.c.h.b16 %v1283
    %v1846 = vunpack.c.l.b16 %v1284
    %v1847 = vunpack.c.h.b16 %v1284
    %v1848 = vunpack.c.l.b16 %v1285
    %v1849 = vunpack.c.h.b16 %v1285
    %v1850 = vunpack.c.l.b16 %v1286
    %v1851 = vunpack.c.h.b16 %v1286
    %v1852 = vunpack.c.l.b16 %v1287
    %v1853 = vunpack.c.h.b16 %v1287
    %v1854 = vunpack.c.l.b16 %v1288
    %v1855 = vunpack.c.h.b16 %v1288
    %v1856 = vunpack.c.l.b16 %v1289
    %v1857 = vunpack.c.h.b16 %v1289
    %v1858 = vunpack.c.l.b16 %v1290
    %v1859 = vunpack.c.h.b16 %v1290
    %v1860 = vunpack.c.l.b16 %v1291
    %v1861 = vunpack.c.h.b16 %v1291
    %v1862 = vunpack.c.l.b16 %v1292
    %v1863 = vunpack.c.h.b16 %v1292
    %v1864 = vunpack.c.l.b16 %v1293
    %v1865 = vunpack.c.h.b16 %v1293
    %v1866 = vunpack.c.l.b16 %v1294
    %v1867 = vunpack.c.h.b16 %v1294
    %v1868 = vunpack.c.l.b16 %v1295
    %v1869 = vunpack.c.h.b16 %v1295
    %v1870 = vunpack.c.l.b16 %v1296
    %v1871 = vunpack.c.h.b16 %v1296
    %v1872 = vunpack.c.l.b16 %v1297
    %v1873 = vunpack.c.h.b16 %v1297
    %v1874 = vunpack.c.l.b16 %v1298
    %v1875 = vunpack.c.h.b16 %v1298
    %v1876 = vunpack.c.l.b16 %v1299
    %v1877 = vunpack.c.h.b16 %v1299
    %v1878 = vunpack.c.l.b16 %v1300
    %v1879 = vunpack.c.h.b16 %v1300
    %v1880 = vunpack.c.l.b16 %v1301
    %v1881 = vunpack.c.h.b16 %v1301
    %v1882 = vunpack.c.l.b16 %v1302
    %v1883 = vunpack.c.h.b16 %v1302
    %v1884 = vunpack.c.l.b16 %v1303
    %v1885 = vunpack.c.h.b16 %v1303
    %v1886 = vunpack.c.l.b16 %v1304
    %v1887 = vunpack.c.h.b16 %v1304
    %v1888 = vunpack.c.l.b16 %v1305
    %v1889 = vunpack.c.h.b16 %v1305
    %v1890 = vunpack.c.l.b16 %v1306
    %v1891 = vunpack.c.h.b16 %v1306
    %v1892 = vunpack.c.l.b16 %v1307
    %v1893 = vunpack.c.h.b16 %v1307
    %v1894 = vunpack.c.l.b16 %v1308
    %v1895 = vunpack.c.h.b16 %v1308
    %v1896 = vunpack.c.l.b16 %v1309
    %v1897 = vunpack.c.h.b16 %v1309
    %v1898 = vunpack.c.l.b16 %v1310
    %v1899 = vunpack.c.h.b16 %v1310
    %v1900 = vunpack.c.l.b16 %v1311
    %v1901 = vunpack.c.h.b16 %v1311
    %v1902 = vunpack.c.l.b16 %v1312
    %v1903 = vunpack.c.h.b16 %v1312
    %v1904 = vunpack.c.l.b16 %v1313
    %v1905 = vunpack.c.h.b16 %v1313
    %v1906 = vunpack.c.l.b16 %v1314
    %v1907 = vunpack.c.h.b16 %v1314
    %v1908 = vunpack.c.l.b16 %v1315
    %v1909 = vunpack.c.h.b16 %v1315
    %v1910 = vunpack.c.l.b16 %v1316
    %v1911 = vunpack.c.h.b16 %v1316
    %v1912 = vunpack.c.l.b16 %v1317
    %v1913 = vunpack.c.h.b16 %v1317
    %v1914 = vunpack.c.l.b16 %v1318
    %v1915 = vunpack.c.h.b16 %v1318
    %v1916 = vunpack.c.l.b16 %v1319
    %v1917 = vunpack.c.h.b16 %v1319
    %v1918 = vunpack.c.l.b16 %v1320
    %v1919 = vunpack.c.h.b16 %v1320
    %v1920 = vunpack.c.l.b16 %v1321
    %v1921 = vunpack.c.h.b16 %v1321
    %v1922 = vunpack.c.l.b16 %v1322
    %v1923 = vunpack.c.h.b16 %v1322
    %v1924 = vunpack.c.l.b16 %v1323
    %v1925 = vunpack.c.h.b16 %v1323
    %v1926 = vunpack.c.l.b16 %v1324
    %v1927 = vunpack.c.h.b16 %v1324
    %v1928 = vunpack.c.l.b16 %v1325
    %v1929 = vunpack.c.h.b16 %v1325
    %v1930 = vunpack.c.l.b16 %v1326
    %v1931 = vunpack.c.h.b16 %v1326
    %v1932 = vunpack.c.l.b16 %v1327
    %v1933 = vunpack.c.h.b16 %v1327
    %v1934 = vunpack.c.l.b16 %v1328
    %v1935 = vunpack.c.h.b16 %v1328
    %v1936 = vunpack.c.l.b16 %v1329
    %v1937 = vunpack.c.h.b16 %v1329
    %v1938 = vunpack.c.l.b16 %v1330
    %v1939 = vunpack.c.h.b16 %v1330
    %v1940 = vunpack.c.l.b16 %v1331
    %v1941 = vunpack.c.h.b16 %v1331
    %v1942 = vunpack.c.l.b16 %v1332
    %v1943 = vunpack.c.h.b16 %v1332
    %v1944 = vunpack.c.l.b16 %v1333
    %v1945 = vunpack.c.h.b16 %v1333
    %v1946 = vunpack.c.l.b16 %v1334
    %v1947 = vunpack.c.h.b16 %v1334
    %v1948 = vunpack.c.l.b16 %v1335
    %v1949 = vunpack.c.h.b16 %v1335
    %v1950 = vunpack.c.l.b16 %v1336
    %v1951 = vunpack.c.h.b16 %v1336
    %v1952 = vunpack.c.l.b16 %v1337
    %v1953 = vunpack.c.h.b16 %v1337
    %v1954 = vunpack.c.l.b16 %v1338
    %v1955 = vunpack.c.h.b16 %v1338
    %v1956 = vunpack.c.l.b16 %v1339
    %v1957 = vunpack.c.h.b16 %v1339
    %v1958 = vunpack.c.l.b16 %v1340
    %v1959 = vunpack.c.h.b16 %v1340
    %v1960 = vunpack.c.l.b16 %v1341
    %v1961 = vunpack.c.h.b16 %v1341
    %v1962 = vunpack.c.l.b16 %v1342
    %v1963 = vunpack.c.h.b16 %v1342
    %v1964 = vunpack.c.l.b16 %v1343
    %v1965 = vunpack.c.h.b16 %v1343
    %v1966 = vunpack.c.l.b16 %v1344
    %v1967 = vunpack.c.h.b16 %v1344
    %v1968 = vunpack.c.l.b16 %v1345
    %v1969 = vunpack.c.h.b16 %v1345
    %v1970 = vunpack.c.l.b16 %v1346
    %v1971 = vunpack.c.h.b16 %v1346
    %v1972 = vunpack.c.l.b16 %v1347
    %v1973 = vunpack.c.h.b16 %v1347
    %v1974 = vunpack.c.l.b16 %v1348
    %v1975 = vunpack.c.h.b16 %v1348
    %v1976 = vunpack.c.l.b16 %v1349
    %v1977 = vunpack.c.h.b16 %v1349
    %v1978 = vunpack.c.l.b16 %v1350
    %v1979 = vunpack.c.h.b16 %v1350
    %v1980 = vunpack.c.l.b16 %v1351
    %v1981 = vunpack.c.h.b16 %v1351
    %v1982 = vunpack.c.l.b16 %v1352
    %v1983 = vunpack.c.h.b16 %v1352
    %v1984 = vunpack.c.l.b16 %v1353
    %v1985 = vunpack.c.h.b16 %v1353
    %v1986 = vunpack.c.l.b16 %v1354
    %v1987 = vunpack.c.h.b16 %v1354
    %v1988 = vunpack.c.l.b16 %v1355
    %v1989 = vunpack.c.h.b16 %v1355
    %v1990 = vunpack.c.l.b16 %v1356
    %v1991 = vunpack.c.h.b16 %v1356
    %v1992 = vunpack.c.l.b16 %v1357
    %v1993 = vunpack.c.h.b16 %v1357
    %v1994 = vunpack.c.l.b16 %v1358
    %v1995 = vunpack.c.h.b16 %v1358
    %v1996 = vunpack.c.l.b16 %v1359
    %v1997 = vunpack.c.h.b16 %v1359
    %v1998 = vunpack.c.l.b16 %v1360
    %v1999 = vunpack.c.h.b16 %v1360
    %v2000 = vunpack.c.l.b16 %v1361
    %v2001 = vunpack.c.h.b16 %v1361
    %v2002 = vunpack.c.l.b16 %v1362
    %v2003 = vunpack.c.h.b16 %v1362
    %v2004 = vunpack.c.l.b16 %v1363
    %v2005 = vunpack.c.h.b16 %v1363
    %v2006 = vunpack.c.l.b16 %v1364
    %v2007 = vunpack.c.h.b16 %v1364
    %v2008 = vunpack.c.l.b16 %v1365
    %v2009 = vunpack.c.h.b16 %v1365
    %v2010 = vunpack.c.l.b16 %v1366
    %v2011 = vunpack.c.h.b16 %v1366
    %v2012 = vunpack.c.l.b16 %v1367
    %v2013 = vunpack.c.h.b16 %v1367
    %v2014 = vunpack.c.l.b16 %v1368
    %v2015 = vunpack.c.h.b16 %v1368
    %v2016 = vunpack.c.l.b16 %v1369
    %v2017 = vunpack.c.h.b16 %v1369
    %v2018 = vunpack.c.l.b16 %v1370
    %v2019 = vunpack.c.h.b16 %v1370
    %v2020 = vunpack.c.l.b16 %v1371
    %v2021 = vunpack.c.h.b16 %v1371
    %v2022 = vunpack.c.l.b16 %v1372
    %v2023 = vunpack.c.h.b16 %v1372
    %v2024 = vunpack.c.l.b16 %v1373
    %v2025 = vunpack.c.h.b16 %v1373
    %v2026 = vunpack.c.l.b16 %v1374
    %v2027 = vunpack.c.h.b16 %v1374
    %v2028 = vunpack.c.l.b16 %v1375
    %v2029 = vunpack.c.h.b16 %v1375
    %v2030 = vunpack.c.l.b16 %v1376
    %v2031 = vunpack.c.h.b16 %v1376
    %v2032 = vunpack.c.l.b16 %v1377
    %v2033 = vunpack.c.h.b16 %v1377
    %v2034 = vunpack.c.l.b16 %v1378
    %v2035 = vunpack.c.h.b16 %v1378
    %v2036 = vunpack.c.l.b16 %v1379
    %v2037 = vunpack.c.h.b16 %v1379
    %v2038 = vunpack.c.l.b16 %v1380
    %v2039 = vunpack.c.h.b16 %v1380
    %v2040 = vunpack.c.l.b16 %v1381
    %v2041 = vunpack.c.h.b16 %v1381
    %v2042 = vunpack.c.l.b16 %v1382
    %v2043 = vunpack.c.h.b16 %v1382
    %v2044 = vunpack.c.l.b16 %v1383
    %v2045 = vunpack.c.h.b16 %v1383
    %v2046 = vunpack.c.l.b16 %v1384
    %v2047 = vunpack.c.h.b16 %v1384
    %v2048 = vunpack.c.l.b16 %v1385
    %v2049 = vunpack.c.h.b16 %v1385
    %v2050 = vunpack.c.l.b16 %v1386
    %v2051 = vunpack.c.h.b16 %v1386
    %v2052 = vunpack.c.l.b16 %v1387
    %v2053 = vunpack.c.h.b16 %v1387
    %v2054 = vunpack.c.l.b16 %v1388
    %v2055 = vunpack.c.h.b16 %v1388
    %v2056 = vunpack.c.l.b16 %v1389
    %v2057 = vunpack.c.h.b16 %v1389
    %v2058 = vunpack.c.l.b16 %v1390
    %v2059 = vunpack.c.h.b16 %v1390
    %v2060 = vunpack.c.l.b16 %v1391
    %v2061 = vunpack.c.h.b16 %v1391
    %v2062 = vunpack.c.l.b16 %v1392
    %v2063 = vunpack.c.h.b16 %v1392
    %v2064 = vunpack.c.l.b16 %v1393
    %v2065 = vunpack.c.h.b16 %v1393
    %v2066 = vunpack.c.l.b16 %v1394
    %v2067 = vunpack.c.h.b16 %v1394
    %v2068 = vunpack.c.l.b16 %v1395
    %v2069 = vunpack.c.h.b16 %v1395
    %v2070 = vunpack.c.l.b16 %v1396
    %v2071 = vunpack.c.h.b16 %v1396
    %v2072 = vunpack.c.l.b16 %v1397
    %v2073 = vunpack.c.h.b16 %v1397
    %v2074 = vunpack.c.l.b16 %v1398
    %v2075 = vunpack.c.h.b16 %v1398
    %v2076 = vunpack.c.l.b16 %v1399
    %v2077 = vunpack.c.h.b16 %v1399
    %v2078 = vunpack.c.l.b16 %v1400
    %v2079 = vunpack.c.h.b16 %v1400
    %v2080 = vunpack.c.l.b16 %v1401
    %v2081 = vunpack.c.h.b16 %v1401
    %v2082 = vunpack.c.l.b16 %v1402
    %v2083 = vunpack.c.h.b16 %v1402
    %v2084 = vunpack.c.l.b16 %v1403
    %v2085 = vunpack.c.h.b16 %v1403
    %v2086 = vunpack.c.l.b16 %v1404
    %v2087 = vunpack.c.h.b16 %v1404
    %v2088 = vunpack.c.l.b16 %v1405
    %v2089 = vunpack.c.h.b16 %v1405
    %v2090 = vunpack.c.l.b16 %v1406
    %v2091 = vunpack.c.h.b16 %v1406
    %v2092 = vunpack.c.l.b16 %v1407
    %v2093 = vunpack.c.h.b16 %v1407
    %v2094 = vunpack.c.l.b16 %v1408
    %v2095 = vunpack.c.h.b16 %v1408
    %v2096 = vunpack.c.l.b16 %v1409
    %v2097 = vunpack.c.h.b16 %v1409
    %v2098 = vunpack.c.l.b16 %v1410
    %v2099 = vunpack.c.h.b16 %v1410
    %v2100 = vunpack.c.l.b16 %v1411
    %v2101 = vunpack.c.h.b16 %v1411
    %v2102 = vunpack.c.l.b16 %v1412
    %v2103 = vunpack.c.h.b16 %v1412
    %v2104 = vunpack.c.l.b16 %v1413
    %v2105 = vunpack.c.h.b16 %v1413
    %v2106 = vunpack.c.l.b16 %v1414
    %v2107 = vunpack.c.h.b16 %v1414
    %v2108 = vunpack.c.l.b16 %v1415
    %v2109 = vunpack.c.h.b16 %v1415
    %v2110 = vunpack.c.l.b16 %v1416
    %v2111 = vunpack.c.h.b16 %v1416
    %v2112 = vunpack.c.l.b16 %v1417
    %v2113 = vunpack.c.h.b16 %v1417
    %v2114 = vunpack.c.l.b16 %v1418
    %v2115 = vunpack.c.h.b16 %v1418
    %v2116 = vunpack.c.l.b16 %v1419
    %v2117 = vunpack.c.h.b16 %v1419
    %v2118 = vunpack.c.l.b16 %v1420
    %v2119 = vunpack.c.h.b16 %v1420
    %v2120 = vunpack.c.l.b16 %v1421
    %v2121 = vunpack.c.h.b16 %v1421
    %v2122 = vunpack.c.l.b16 %v1422
    %v2123 = vunpack.c.h.b16 %v1422
    %v2124 = vunpack.c.l.b16 %v1423
    %v2125 = vunpack.c.h.b16 %v1423
    %v2126 = vunpack.c.l.b16 %v1424
    %v2127 = vunpack.c.h.b16 %v1424
    %v2128 = vunpack.c.l.b16 %v1425
    %v2129 = vunpack.c.h.b16 %v1425
    %v2130 = vunpack.c.l.b16 %v1426
    %v2131 = vunpack.c.h.b16 %v1426
    %v2132 = vunpack.c.l.b16 %v1427
    %v2133 = vunpack.c.h.b16 %v1427
    %v2134 = vunpack.c.l.b16 %v1428
    %v2135 = vunpack.c.h.b16 %v1428
    %v2136 = vunpack.c.l.b16 %v1429
    %v2137 = vunpack.c.h.b16 %v1429
    %v2138 = vunpack.c.l.b16 %v1430
    %v2139 = vunpack.c.h.b16 %v1430
    %v2140 = vunpack.c.l.b16 %v1431
    %v2141 = vunpack.c.h.b16 %v1431
    %v2142 = vunpack.c.l.b16 %v1432
    %v2143 = vunpack.c.h.b16 %v1432
    %v2144 = vunpack.c.l.b16 %v1433
    %v2145 = vunpack.c.h.b16 %v1433
    %v2146 = vunpack.c.l.b16 %v1434
    %v2147 = vunpack.c.h.b16 %v1434
    %v2148 = vunpack.c.l.b16 %v1435
    %v2149 = vunpack.c.h.b16 %v1435
    %v2150 = vunpack.c.l.b16 %v1436
    %v2151 = vunpack.c.h.b16 %v1436
    %v2152 = vunpack.c.l.b16 %v1437
    %v2153 = vunpack.c.h.b16 %v1437
    %v2154 = vunpack.c.l.b16 %v1438
    %v2155 = vunpack.c.h.b16 %v1438
    %v2156 = vunpack.c.l.b16 %v1439
    %v2157 = vunpack.c.h.b16 %v1439
    %v2158 = vunpack.c.l.b16 %v1440
    %v2159 = vunpack.c.h.b16 %v1440
    %v2160 = vunpack.c.l.b16 %v1441
    %v2161 = vunpack.c.h.b16 %v1441
    %v2162 = vunpack.c.l.b16 %v1442
    %v2163 = vunpack.c.h.b16 %v1442
    %v2164 = vunpack.c.l.b16 %v1443
    %v2165 = vunpack.c.h.b16 %v1443
    %v2166 = vunpack.c.l.b16 %v1444
    %v2167 = vunpack.c.h.b16 %v1444
    %v2168 = vunpack.c.l.b16 %v1445
    %v2169 = vunpack.c.h.b16 %v1445
    %v2170 = vunpack.c.l.b16 %v1446
    %v2171 = vunpack.c.h.b16 %v1446
    %v2172 = vunpack.c.l.b16 %v1447
    %v2173 = vunpack.c.h.b16 %v1447
    %v2174 = vunpack.c.l.b16 %v1448
    %v2175 = vunpack.c.h.b16 %v1448
    %v2176 = vunpack.c.l.b16 %v1449
    %v2177 = vunpack.c.h.b16 %v1449
    %v2178 = vunpack.c.l.b16 %v1450
    %v2179 = vunpack.c.h.b16 %v1450
    %v2180 = vunpack.c.l.b16 %v1451
    %v2181 = vunpack.c.h.b16 %v1451
    %v2182 = vunpack.c.l.b16 %v1452
    %v2183 = vunpack.c.h.b16 %v1452
    %v2184 = vunpack.c.l.b16 %v1453
    %v2185 = vunpack.c.h.b16 %v1453
    %v2186 = vunpack.c.l.b16 %v1454
    %v2187 = vunpack.c.h.b16 %v1454
    %v2188 = vunpack.c.l.b16 %v1455
    %v2189 = vunpack.c.h.b16 %v1455
    %v2190 = vunpack.c.l.b16 %v1456
    %v2191 = vunpack.c.h.b16 %v1456
    %v2192 = vunpack.c.l.b16 %v1457
    %v2193 = vunpack.c.h.b16 %v1457
    %v2194 = vunpack.c.l.b16 %v1458
    %v2195 = vunpack.c.h.b16 %v1458
    %v2196 = vunpack.c.l.b16 %v1459
    %v2197 = vunpack.c.h.b16 %v1459
    %v2198 = vunpack.c.l.b16 %v1460
    %v2199 = vunpack.c.h.b16 %v1460
    %v2200 = vunpack.c.l.b16 %v1461
    %v2201 = vunpack.c.h.b16 %v1461
    %v2202 = vunpack.c.l.b16 %v1462
    %v2203 = vunpack.c.h.b16 %v1462
    %v2204 = vunpack.c.l.b16 %v1463
    %v2205 = vunpack.c.h.b16 %v1463
    %v2206 = vunpack.c.l.b16 %v1464
    %v2207 = vunpack.c.h.b16 %v1464
    %v2208 = vunpack.c.l.b16 %v1465
    %v2209 = vunpack.c.h.b16 %v1465
    %v2210 = vunpack.c.l.b16 %v1466
    %v2211 = vunpack.c.h.b16 %v1466
    %v2212 = vunpack.c.l.b16 %v1467
    %v2213 = vunpack.c.h.b16 %v1467
    %v2214 = vunpack.c.l.b16 %v1468
    %v2215 = vunpack.c.h.b16 %v1468
    %v2216 = vunpack.c.l.b16 %v1469
    %v2217 = vunpack.c.h.b16 %v1469
    %v2218 = vunpack.c.l.b16 %v1470
    %v2219 = vunpack.c.h.b16 %v1470
    %v2220 = vunpack.c.l.b16 %v1471
    %v2221 = vunpack.c.h.b16 %v1471
    %v2222 = vunpack.c.l.b16 %v1472
    %v2223 = vunpack.c.h.b16 %v1472
    %v2224 = vunpack.c.l.b16 %v1473
    %v2225 = vunpack.c.h.b16 %v1473
    %v2226 = vunpack.c.l.b16 %v1474
    %v2227 = vunpack.c.h.b16 %v1474
    %v2228 = vunpack.c.l.b16 %v1475
    %v2229 = vunpack.c.h.b16 %v1475
    %v2230 = vunpack.c.l.b16 %v1476
    %v2231 = vunpack.c.h.b16 %v1476
    %v2232 = vunpack.c.l.b16 %v1477
    %v2233 = vunpack.c.h.b16 %v1477
    %v2234 = vunpack.c.l.b16 %v1478
    %v2235 = vunpack.c.h.b16 %v1478
    %v2236 = vunpack.c.l.b16 %v1479
    %v2237 = vunpack.c.h.b16 %v1479
    %v2238 = vunpack.c.l.b16 %v1480
    %v2239 = vunpack.c.h.b16 %v1480
    %v2240 = vunpack.c.l.b16 %v1481
    %v2241 = vunpack.c.h.b16 %v1481
    %v2242 = vunpack.c.l.b16 %v1482
    %v2243 = vunpack.c.h.b16 %v1482
    %v2244 = vunpack.c.l.b16 %v1483
    %v2245 = vunpack.c.h.b16 %v1483
    %v2246 = vunpack.c.l.b16 %v1484
    %v2247 = vunpack.c.h.b16 %v1484
    %v2248 = vunpack.c.l.b16 %v1485
    %v2249 = vunpack.c.h.b16 %v1485
    %v2250 = vunpack.c.l.b16 %v1486
    %v2251 = vunpack.c.h.b16 %v1486
    %v2252 = vunpack.c.l.b16 %v1487
    %v2253 = vunpack.c.h.b16 %v1487
    %v2254 = vunpack.c.l.b16 %v1488
    %v2255 = vunpack.c.h.b16 %v1488
    %v2256 = vunpack.c.l.b16 %v1489
    %v2257 = vunpack.c.h.b16 %v1489
    %v2258 = vunpack.c.l.b16 %v1490
    %v2259 = vunpack.c.h.b16 %v1490
    %v2260 = vunpack.c.l.b16 %v1491
    %v2261 = vunpack.c.h.b16 %v1491
    %v2262 = vunpack.c.l.b16 %v1492
    %v2263 = vunpack.c.h.b16 %v1492
    %v2264 = vunpack.c.l.b16 %v1493
    %v2265 = vunpack.c.h.b16 %v1493
    %v2266 = vunpack.c.l.b16 %v1494
    %v2267 = vunpack.c.h.b16 %v1494
    %v2268 = vunpack.c.l.b16 %v1495
    %v2269 = vunpack.c.h.b16 %v1495
    %v2270 = vunpack.c.l.b16 %v1496
    %v2271 = vunpack.c.h.b16 %v1496
    %v2272 = vunpack.c.l.b16 %v1497
    %v2273 = vunpack.c.h.b16 %v1497
    %v2274 = vunpack.c.l.b16 %v1498
    %v2275 = vunpack.c.h.b16 %v1498
    %v2276 = vunpack.c.l.b16 %v1499
    %v2277 = vunpack.c.h.b16 %v1499
    %v2278 = vunpack.c.l.b16 %v1500
    %v2279 = vunpack.c.h.b16 %v1500
    %v2280 = vunpack.c.l.b16 %v1501
    %v2281 = vunpack.c.h.b16 %v1501
    %v2282 = vunpack.c.l.b16 %v1502
    %v2283 = vunpack.c.h.b16 %v1502
    %v2284 = vunpack.c.l.b16 %v1503
    %v2285 = vunpack.c.h.b16 %v1503
    %v2286 = vunpack.c.l.b16 %v1504
    %v2287 = vunpack.c.h.b16 %v1504
    %v2288 = vunpack.c.l.b16 %v1505
    %v2289 = vunpack.c.h.b16 %v1505
    %v2290 = vunpack.c.l.b16 %v1506
    %v2291 = vunpack.c.h.b16 %v1506
    %v2292 = vunpack.c.l.b16 %v1507
    %v2293 = vunpack.c.h.b16 %v1507
    %v2294 = vpack.c.b16 %v1790, %v1782
    %v2295 = vpack.c.b16 %v1791, %v1783
    %v2296 = vpack.c.b16 %v1792, %v1784
    %v2297 = vpack.c.b16 %v1793, %v1785
    %v2298 = vpack.c.b16 %v1794, %v1786
    %v2299 = vpack.c.b16 %v1795, %v1787
    %v2300 = vpack.c.b16 %v1796, %v1788
    %v2301 = vpack.c.b16 %v1797, %v1789
    %v2302 = vpack.c.b16 %v1806, %v1798
    %v2303 = vpack.c.b16 %v1807, %v1799
    %v2304 = vpack.c.b16 %v1808, %v1800
    %v2305 = vpack.c.b16 %v1809, %v1801
    %v2306 = vpack.c.b16 %v1810, %v1802
    %v2307 = vpack.c.b16 %v1811, %v1803
    %v2308 = vpack.c.b16 %v1812, %v1804
    %v2309 = vpack.c.b16 %v1813, %v1805
    %v2310 = vpack.c.b16 %v1822, %v1814
    %v2311 = vpack.c.b16 %v1823, %v1815
    %v2312 = vpack.c.b16 %v1824, %v1816
    %v2313 = vpack.c.b16 %v1825, %v1817
    %v2314 = vpack.c.b16 %v1826, %v1818
    %v2315 = vpack.c.b16 %v1827, %v1819
    %v2316 = vpack.c.b16 %v1828, %v1820
    %v2317 = vpack.c.b16 %v1829, %v1821
    %v2318 = vpack.c.b16 %v1838, %v1830
    %v2319 = vpack.c.b16 %v1839, %v1831
    %v2320 = vpack.c.b16 %v1840, %v1832
    %v2321 = vpack.c.b16 %v1841, %v1833
    %v2322 = vpack.c.b16 %v1842, %v1834
    %v2323 = vpack.c.b16 %v1843, %v1835
    %v2324 = vpack.c.b16 %v1844, %v1836
    %v2325 = vpack.c.b16 %v1845, %v1837
    %v2326 = vpack.c.b16 %v1854, %v1846
    %v2327 = vpack.c.b16 %v1855, %v1847
    %v2328 = vpack.c.b16 %v1856, %v1848
    %v2329 = vpack.c.b16 %v1857, %v1849
    %v2330 = vpack.c.b16 %v1858, %v1850
    %v2331 = vpack.c.b16 %v1859, %v1851
    %v2332 = vpack.c.b16 %v1860, %v1852
    %v2333 = vpack.c.b16 %v1861, %v1853
    %v2334 = vpack.c.b16 %v1870, %v1862
    %v2335 = vpack.c.b16 %v1871, %v1863
    %v2336 = vpack.c.b16 %v1872, %v1864
    %v2337 = vpack.c.b16 %v1873, %v1865
    %v2338 = vpack.c.b16 %v1874, %v1866
    %v2339 = vpack.c.b16 %v1875, %v1867
    %v2340 = vpack.c.b16 %v1876, %v1868
    %v2341 = vpack.c.b16 %v1877, %v1869
    %v2342 = vpack.c.b16 %v1886, %v1878
    %v2343 = vpack.c.b16 %v1887, %v1879
    %v2344 = vpack.c.b16 %v1888, %v1880
    %v2345 = vpack.c.b16 %v1889, %v1881
    %v2346 = vpack.c.b16 %v1890, %v1882
    %v2347 = vpack.c.b16 %v1891, %v1883
    %v2348 = vpack.c.b16 %v1892, %v1884
    %v2349 = vpack.c.b16 %v1893, %v1885
    %v2350 = vpack.c.b16 %v1902, %v1894
    %v2351 = vpack.c.b16 %v1903, %v1895
    %v2352 = vpack.c.b16 %v1904, %v1896
    %v2353 = vpack.c.b16 %v1905, %v1897
    %v2354 = vpack.c.b16 %v1906, %v1898
    %v2355 = vpack.c.b16 %v1907, %v1899
    %v2356 = vpack.c.b16 %v1908, %v1900
    %v2357 = vpack.c.b16 %v1909, %v1901
    %v2358 = vpack.c.b16 %v1918, %v1910
    %v2359 = vpack.c.b16 %v1919, %v1911
    %v2360 = vpack.c.b16 %v1920, %v1912
    %v2361 = vpack.c.b16 %v1921, %v1913
    %v2362 = vpack.c.b16 %v1922, %v1914
    %v2363 = vpack.c.b16 %v1923, %v1915
    %v2364 = vpack.c.b16 %v1924, %v1916
    %v2365 = vpack.c.b16 %v1925, %v1917
    %v2366 = vpack.c.b16 %v1934, %v1926
    %v2367 = vpack.c.b16 %v1935, %v1927
    %v2368 = vpack.c.b16 %v1936, %v1928
    %v2369 = vpack.c.b16 %v1937, %v1929
    %v2370 = vpack.c.b16 %v1938, %v1930
    %v2371 = vpack.c.b16 %v1939, %v1931
    %v2372 = vpack.c.b16 %v1940, %v1932
    %v2373 = vpack.c.b16 %v1941, %v1933
    %v2374 = vpack.c.b16 %v1950, %v1942
    %v2375 = vpack.c.b16 %v1951, %v1943
    %v2376 = vpack.c.b16 %v1952, %v1944
    %v2377 = vpack.c.b16 %v1953, %v1945
    %v2378 = vpack.c.b16 %v1954, %v1946
    %v2379 = vpack.c.b16 %v1955, %v1947
    %v2380 = vpack.c.b16 %v1956, %v1948
    %v2381 = vpack.c.b16 %v1957, %v1949
    %v2382 = vpack.c.b16 %v1966, %v1958
    %v2383 = vpack.c.b16 %v1967, %v1959
    %v2384 = vpack.c.b16 %v1968, %v1960
    %v2385 = vpack.c.b16 %v1969, %v1961
    %v2386 = vpack.c.b16 %v1970, %v1962
    %v2387 = vpack.c.b16 %v1971, %v1963
    %v2388 = vpack.c.b16 %v1972, %v1964
    %v2389 = vpack.c.b16 %v1973, %v1965
    %v2390 = vpack.c.b16 %v1982, %v1974
    %v2391 = vpack.c.b16 %v1983, %v1975
    %v2392 = vpack.c.b16 %v1984, %v1976
    %v2393 = vpack.c.b16 %v1985, %v1977
    %v2394 = vpack.c.b16 %v1986, %v1978
    %v2395 = vpack.c.b16 %v1987, %v1979
    %v2396 = vpack.c.b16 %v1988, %v1980
    %v2397 = vpack.c.b16 %v1989, %v1981
    %v2398 = vpack.c.b16 %v1998, %v1990
    %v2399 = vpack.c.b16 %v1999, %v1991
    %v2400 = vpack.c.b16 %v2000, %v1992
    %v2401 = vpack.c.b16 %v2001, %v1993
    %v2402 = vpack.c.b16 %v2002, %v1994
    %v2403 = vpack.c.b16 %v2003, %v1995
    %v2404 = vpack.c.b16 %v2004, %v1996
    %v2405 = vpack.c.b16 %v2005, %v1997
    %v2406 = vpack.c.b16 %v2014, %v2006
    %v2407 = vpack.c.b16 %v2015, %v2007
    %v2408 = vpack.c.b16 %v2016, %v2008
    %v2409 = vpack.c.b16 %v2017, %v2009
    %v2410 = vpack.c.b16 %v2018, %v2010
    %v2411 = vpack.c.b16 %v2019, %v2011
    %v2412 = vpack.c.b16 %v2020, %v2012
    %v2413 = vpack.c.b16 %v2021, %v2013
    %v2414 = vpack.c.b16 %v2030, %v2022
    %v2415 = vpack.c.b16 %v2031, %v2023
    %v2416 = vpack.c.b16 %v2032, %v2024
    %v2417 = vpack.c.b16 %v2033, %v2025
    %v2418 = vpack.c.b16 %v2034, %v2026
    %v2419 = vpack.c.b16 %v2035, %v2027
    %v2420 = vpack.c.b16 %v2036, %v2028
    %v2421 = vpack.c.b16 %v2037, %v2029
    %v2422 = vpack.c.b16 %v2046, %v2038
    %v2423 = vpack.c.b16 %v2047, %v2039
    %v2424 = vpack.c.b16 %v2048, %v2040
    %v2425 = vpack.c.b16 %v2049, %v2041
    %v2426 = vpack.c.b16 %v2050, %v2042
    %v2427 = vpack.c.b16 %v2051, %v2043
    %v2428 = vpack.c.b16 %v2052, %v2044
    %v2429 = vpack.c.b16 %v2053, %v2045
    %v2430 = vpack.c.b16 %v2062, %v2054
    %v2431 = vpack.c.b16 %v2063, %v2055
    %v2432 = vpack.c.b16 %v2064, %v2056
    %v2433 = vpack.c.b16 %v2065, %v2057
    %v2434 = vpack.c.b16 %v2066, %v2058
    %v2435 = vpack.c.b16 %v2067, %v2059
    %v2436 = vpack.c.b16 %v2068, %v2060
    %v2437 = vpack.c.b16 %v2069, %v2061
    %v2438 = vpack.c.b16 %v2078, %v2070
    %v2439 = vpack.c.b16 %v2079, %v2071
    %v2440 = vpack.c.b16 %v2080, %v2072
    %v2441 = vpack.c.b16 %v2081, %v2073
    %v2442 = vpack.c.b16 %v2082, %v2074
    %v2443 = vpack.c.b16 %v2083, %v2075
    %v2444 = vpack.c.b16 %v2084, %v2076
    %v2445 = vpack.c.b16 %v2085, %v2077
    %v2446 = vpack.c.b16 %v2094, %v2086
    %v2447 = vpack.c.b16 %v2095, %v2087
    %v2448 = vpack.c.b16 %v2096, %v2088
    %v2449 = vpack.c.b16 %v2097, %v2089
    %v2450 = vpack.c.b16 %v2098, %v2090
    %v2451 = vpack.c.b16 %v2099, %v2091
    %v2452 = vpack.c.b16 %v2100, %v2092
    %v2453 = vpack.c.b16 %v2101, %v2093
    %v2454 = vpack.c.b16 %v2110, %v2102
    %v2455 = vpack.c.b16 %v2111, %v2103
    %v2456 = vpack.c.b16 %v2112, %v2104
    %v2457 = vpack.c.b16 %v2113, %v2105
    %v2458 = vpack.c.b16 %v2114, %v2106
    %v2459 = vpack.c.b16 %v2115, %v2107
    %v2460 = vpack.c.b16 %v2116, %v2108
    %v2461 = vpack.c.b16 %v2117, %v2109
    %v2462 = vpack.c.b16 %v2126, %v2118
    %v2463 = vpack.c.b16 %v2127, %v2119
    %v2464 = vpack.c.b16 %v2128, %v2120
    %v2465 = vpack.c.b16 %v2129, %v2121
    %v2466 = vpack.c.b16 %v2130, %v2122
    %v2467 = vpack.c.b16 %v2131, %v2123
    %v2468 = vpack.c.b16 %v2132, %v2124
    %v2469 = vpack.c.b16 %v2133, %v2125
    %v2470 = vpack.c.b16 %v2142, %v2134
    %v2471 = vpack.c.b16 %v2143, %v2135
    %v2472 = vpack.c.b16 %v2144, %v2136
    %v2473 = vpack.c.b16 %v2145, %v2137
    %v2474 = vpack.c.b16 %v2146, %v2138
    %v2475 = vpack.c.b16 %v2147, %v2139
    %v2476 = vpack.c.b16 %v2148, %v2140
    %v2477 = vpack.c.b16 %v2149, %v2141
    %v2478 = vpack.c.b16 %v2158, %v2150
    %v2479 = vpack.c.b16 %v2159, %v2151
    %v2480 = vpack.c.b16 %v2160, %v2152
    %v2481 = vpack.c.b16 %v2161, %v2153
    %v2482 = vpack.c.b16 %v2162, %v2154
    %v2483 = vpack.c.b16 %v2163, %v2155
    %v2484 = vpack.c.b16 %v2164, %v2156
    %v2485 = vpack.c.b16 %v2165, %v2157
    %v2486 = vpack.c.b16 %v2174, %v2166
    %v2487 = vpack.c.b16 %v2175, %v2167
    %v2488 = vpack.c.b16 %v2176, %v2168
    %v2489 = vpack.c.b16 %v2177, %v2169
    %v2490 = vpack.c.b16 %v2178, %v2170
    %v2491 = vpack.c.b16 %v2179, %v2171
    %v2492 = vpack.c.b16 %v2180, %v2172
    %v2493 = vpack.c.b16 %v2181, %v2173
    %v2494 = vpack.c.b16 %v2190, %v2182
    %v2495 = vpack.c.b16 %v2191, %v2183
    %v2496 = vpack.c.b16 %v2192, %v2184
    %v2497 = vpack.c.b16 %v2193, %v2185
    %v2498 = vpack.c.b16 %v2194, %v2186
    %v2499 = vpack.c.b16 %v2195, %v2187
    %v2500 = vpack.c.b16 %v2196, %v2188
    %v2501 = vpack.c.b16 %v2197, %v2189
    %v2502 = vpack.c.b16 %v2206, %v2198
    %v2503 = vpack.c.b16 %v2207, %v2199
    %v2504 = vpack.c.b16 %v2208, %v2200
    %v2505 = vpack.c.b16 %v2209, %v2201
    %v2506 = vpack.c.b16 %v2210, %v2202
    %v2507 = vpack.c.b16 %v2211, %v2203
    %v2508 = vpack.c.b16 %v2212, %v2204
    %v2509 = vpack.c.b16 %v2213, %v2205
    %v2510 = vpack.c.b16 %v2222, %v2214
    %v2511 = vpack.c.b16 %v2223, %v2215
    %v2512 = vpack.c.b16 %v2224, %v2216
    %v2513 = vpack.c.b16 %v2225, %v2217
    %v2514 = vpack.c.b16 %v2226, %v2218
    %v2515 = vpack.c.b16 %v2227, %v2219
    %v2516 = vpack.c.b16 %v2228, %v2220
    %v2517 = vpack.c.b16 %v2229, %v2221
    %v2518 = vpack.c.b16 %v2238, %v2230
    %v2519 = vpack.c.b16 %v2239, %v2231
    %v2520 = vpack.c.b16 %v2240, %v2232
    %v2521 = vpack.c.b16 %v2241, %v2233
    %v2522 = vpack.c.b16 %v2242, %v2234
    %v2523 = vpack.c.b16 %v2243, %v2235
    %v2524 = vpack.c.b16 %v2244, %v2236
    %v2525 = vpack.c.b16 %v2245, %v2237
    %v2526 = vpack.c.b16 %v2254, %v2246
    %v2527 = vpack.c.b16 %v2255, %v2247
    %v2528 = vpack.c.b16 %v2256, %v2248
    %v2529 = vpack.c.b16 %v2257, %v2249
    %v2530 = vpack.c.b16 %v2258, %v2250
    %v2531 = vpack.c.b16 %v2259, %v2251
    %v2532 = vpack.c.b16 %v2260, %v2252
    %v2533 = vpack.c.b16 %v2261, %v2253
    %v2534 = vpack.c.b16 %v2270, %v2262
    %v2535 = vpack.c.b16 %v2271, %v2263
    %v2536 = vpack.c.b16 %v2272, %v2264
    %v2537 = vpack.c.b16 %v2273, %v2265
    %v2538 = vpack.c.b16 %v2274, %v2266
    %v2539 = vpack.c.b16 %v2275, %v2267
    %v2540 = vpack.c.b16 %v2276, %v2268
    %v2541 = vpack.c.b16 %v2277, %v2269
    %v2542 = vpack.c.b16 %v2286, %v2278
    %v2543 = vpack.c.b16 %v2287, %v2279
    %v2544 = vpack.c.b16 %v2288, %v2280
    %v2545 = vpack.c.b16 %v2289, %v2281
    %v2546 = vpack.c.b16 %v2290, %v2282
    %v2547 = vpack.c.b16 %v2291, %v2283
    %v2548 = vpack.c.b16 %v2292, %v2284
    %v2549 = vpack.c.b16 %v2293, %v2285
    %2806 = vmatpush.bf16.msra.mxu0 %v2350
    %2807 = vmatpush.bf16.msra.mxu0 %v2342
    %2808 = vmatpush.bf16.msra.mxu0 %v2334
    %2809 = vmatpush.bf16.msra.mxu0 %v2326
    %2810 = vmatpush.bf16.msra.mxu0 %v2318
    %2811 = vmatpush.bf16.msra.mxu0 %v2310
    %2812 = vmatpush.bf16.msra.mxu0 %v2302
    %2813 = vmatpush.bf16.msra.mxu0 %v2294
    %2814 = vmatmul.bf16.gmra.mxu0 %v1248
    %v2815 = vpop.f32.mrf.mxu0
    %v2816 = vadd.f32 %v1510, %v2815
    %v2817 = vpop.f32.mrf.mxu0
    %2818 = vdwg.mxu0
    %2819 = vmatpush.bf16.msra.mxu0 %v2414
    %2820 = vmatpush.bf16.msra.mxu0 %v2406
    %2821 = vmatpush.bf16.msra.mxu0 %v2398
    %2822 = vmatpush.bf16.msra.mxu0 %v2390
    %2823 = vmatpush.bf16.msra.mxu0 %v2382
    %2824 = vmatpush.bf16.msra.mxu0 %v2374
    %2825 = vmatpush.bf16.msra.mxu0 %v2366
    %2826 = vmatpush.bf16.msra.mxu0 %v2358
    %2827 = vmatmul.bf16.gmra.mxu0 %v1249
    %v2828 = vpop.f32.mrf.mxu0
    %v2829 = vadd.f32 %v2816, %v2828
    %v2830 = vpop.f32.mrf.mxu0
    %2831 = vdwg.mxu0
    %2832 = vmatpush.bf16.msra.mxu0 %v2478
    %2833 = vmatpush.bf16.msra.mxu0 %v2470
    %2834 = vmatpush.bf16.msra.mxu0 %v2462
    %2835 = vmatpush.bf16.msra.mxu0 %v2454
    %2836 = vmatpush.bf16.msra.mxu0 %v2446
    %2837 = vmatpush.bf16.msra.mxu0 %v2438
    %2838 = vmatpush.bf16.msra.mxu0 %v2430
    %2839 = vmatpush.bf16.msra.mxu0 %v2422
    %2840 = vmatmul.bf16.gmra.mxu0 %v1250
    %v2841 = vpop.f32.mrf.mxu0
    %v2842 = vadd.f32 %v2829, %v2841
    %v2843 = vpop.f32.mrf.mxu0
    %2844 = vdwg.mxu0
    %2845 = vmatpush.bf16.msra.mxu0 %v2542
    %2846 = vmatpush.bf16.msra.mxu0 %v2534
    %2847 = vmatpush.bf16.msra.mxu0 %v2526
    %2848 = vmatpush.bf16.msra.mxu0 %v2518
    %2849 = vmatpush.bf16.msra.mxu0 %v2510
    %2850 = vmatpush.bf16.msra.mxu0 %v2502
    %2851 = vmatpush.bf16.msra.mxu0 %v2494
    %2852 = vmatpush.bf16.msra.mxu0 %v2486
    %2853 = vmatmul.bf16.gmra.mxu0 %v1251
    %v2854 = vpop.f32.mrf.mxu0
    %v2855 = vadd.f32 %v2842, %v2854
    %v2856 = vpop.f32.mrf.mxu0
    %2857 = vdwg.mxu0
    %2858 = vmatpush.bf16.msra.mxu0 %v2351
    %2859 = vmatpush.bf16.msra.mxu0 %v2343
    %2860 = vmatpush.bf16.msra.mxu0 %v2335
    %2861 = vmatpush.bf16.msra.mxu0 %v2327
    %2862 = vmatpush.bf16.msra.mxu0 %v2319
    %2863 = vmatpush.bf16.msra.mxu0 %v2311
    %2864 = vmatpush.bf16.msra.mxu0 %v2303
    %2865 = vmatpush.bf16.msra.mxu0 %v2295
    %2866 = vmatmul.bf16.gmra.mxu0 %v1248
    %v2867 = vpop.f32.mrf.mxu0
    %v2868 = vadd.f32 %v1511, %v2867
    %v2869 = vpop.f32.mrf.mxu0
    %2870 = vdwg.mxu0
    %2871 = vmatpush.bf16.msra.mxu0 %v2415
    %2872 = vmatpush.bf16.msra.mxu0 %v2407
    %2873 = vmatpush.bf16.msra.mxu0 %v2399
    %2874 = vmatpush.bf16.msra.mxu0 %v2391
    %2875 = vmatpush.bf16.msra.mxu0 %v2383
    %2876 = vmatpush.bf16.msra.mxu0 %v2375
    %2877 = vmatpush.bf16.msra.mxu0 %v2367
    %2878 = vmatpush.bf16.msra.mxu0 %v2359
    %2879 = vmatmul.bf16.gmra.mxu0 %v1249
    %v2880 = vpop.f32.mrf.mxu0
    %v2881 = vadd.f32 %v2868, %v2880
    %v2882 = vpop.f32.mrf.mxu0
    %2883 = vdwg.mxu0
    %2884 = vmatpush.bf16.msra.mxu0 %v2479
    %2885 = vmatpush.bf16.msra.mxu0 %v2471
    %2886 = vmatpush.bf16.msra.mxu0 %v2463
    %2887 = vmatpush.bf16.msra.mxu0 %v2455
    %2888 = vmatpush.bf16.msra.mxu0 %v2447
    %2889 = vmatpush.bf16.msra.mxu0 %v2439
    %2890 = vmatpush.bf16.msra.mxu0 %v2431
    %2891 = vmatpush.bf16.msra.mxu0 %v2423
    %2892 = vmatmul.bf16.gmra.mxu0 %v1250
    %v2893 = vpop.f32.mrf.mxu0
    %v2894 = vadd.f32 %v2881, %v2893
    %v2895 = vpop.f32.mrf.mxu0
    %2896 = vdwg.mxu0
    %2897 = vmatpush.bf16.msra.mxu0 %v2543
    %2898 = vmatpush.bf16.msra.mxu0 %v2535
    %2899 = vmatpush.bf16.msra.mxu0 %v2527
    %2900 = vmatpush.bf16.msra.mxu0 %v2519
    %2901 = vmatpush.bf16.msra.mxu0 %v2511
    %2902 = vmatpush.bf16.msra.mxu0 %v2503
    %2903 = vmatpush.bf16.msra.mxu0 %v2495
    %2904 = vmatpush.bf16.msra.mxu0 %v2487
    %2905 = vmatmul.bf16.gmra.mxu0 %v1251
    %v2906 = vpop.f32.mrf.mxu0
    %v2907 = vadd.f32 %v2894, %v2906
    %v2908 = vpop.f32.mrf.mxu0
    %2909 = vdwg.mxu0
    %2910 = vmatpush.bf16.msra.mxu0 %v2352
    %2911 = vmatpush.bf16.msra.mxu0 %v2344
    %2912 = vmatpush.bf16.msra.mxu0 %v2336
    %2913 = vmatpush.bf16.msra.mxu0 %v2328
    %2914 = vmatpush.bf16.msra.mxu0 %v2320
    %2915 = vmatpush.bf16.msra.mxu0 %v2312
    %2916 = vmatpush.bf16.msra.mxu0 %v2304
    %2917 = vmatpush.bf16.msra.mxu0 %v2296
    %2918 = vmatmul.bf16.gmra.mxu0 %v1248
    %v2919 = vpop.f32.mrf.mxu0
    %v2920 = vadd.f32 %v1512, %v2919
    %v2921 = vpop.f32.mrf.mxu0
    %2922 = vdwg.mxu0
    %2923 = vmatpush.bf16.msra.mxu0 %v2416
    %2924 = vmatpush.bf16.msra.mxu0 %v2408
    %2925 = vmatpush.bf16.msra.mxu0 %v2400
    %2926 = vmatpush.bf16.msra.mxu0 %v2392
    %2927 = vmatpush.bf16.msra.mxu0 %v2384
    %2928 = vmatpush.bf16.msra.mxu0 %v2376
    %2929 = vmatpush.bf16.msra.mxu0 %v2368
    %2930 = vmatpush.bf16.msra.mxu0 %v2360
    %2931 = vmatmul.bf16.gmra.mxu0 %v1249
    %v2932 = vpop.f32.mrf.mxu0
    %v2933 = vadd.f32 %v2920, %v2932
    %v2934 = vpop.f32.mrf.mxu0
    %2935 = vdwg.mxu0
    %2936 = vmatpush.bf16.msra.mxu0 %v2480
    %2937 = vmatpush.bf16.msra.mxu0 %v2472
    %2938 = vmatpush.bf16.msra.mxu0 %v2464
    %2939 = vmatpush.bf16.msra.mxu0 %v2456
    %2940 = vmatpush.bf16.msra.mxu0 %v2448
    %2941 = vmatpush.bf16.msra.mxu0 %v2440
    %2942 = vmatpush.bf16.msra.mxu0 %v2432
    %2943 = vmatpush.bf16.msra.mxu0 %v2424
    %2944 = vmatmul.bf16.gmra.mxu0 %v1250
    %v2945 = vpop.f32.mrf.mxu0
    %v2946 = vadd.f32 %v2933, %v2945
    %v2947 = vpop.f32.mrf.mxu0
    %2948 = vdwg.mxu0
    %2949 = vmatpush.bf16.msra.mxu0 %v2544
    %2950 = vmatpush.bf16.msra.mxu0 %v2536
    %2951 = vmatpush.bf16.msra.mxu0 %v2528
    %2952 = vmatpush.bf16.msra.mxu0 %v2520
    %2953 = vmatpush.bf16.msra.mxu0 %v2512
    %2954 = vmatpush.bf16.msra.mxu0 %v2504
    %2955 = vmatpush.bf16.msra.mxu0 %v2496
    %2956 = vmatpush.bf16.msra.mxu0 %v2488
    %2957 = vmatmul.bf16.gmra.mxu0 %v1251
    %v2958 = vpop.f32.mrf.mxu0
    %v2959 = vadd.f32 %v2946, %v2958
    %v2960 = vpop.f32.mrf.mxu0
    %2961 = vdwg.mxu0
    %2962 = vmatpush.bf16.msra.mxu0 %v2353
    %2963 = vmatpush.bf16.msra.mxu0 %v2345
    %2964 = vmatpush.bf16.msra.mxu0 %v2337
    %2965 = vmatpush.bf16.msra.mxu0 %v2329
    %2966 = vmatpush.bf16.msra.mxu0 %v2321
    %2967 = vmatpush.bf16.msra.mxu0 %v2313
    %2968 = vmatpush.bf16.msra.mxu0 %v2305
    %2969 = vmatpush.bf16.msra.mxu0 %v2297
    %2970 = vmatmul.bf16.gmra.mxu0 %v1248
    %v2971 = vpop.f32.mrf.mxu0
    %v2972 = vadd.f32 %v1513, %v2971
    %v2973 = vpop.f32.mrf.mxu0
    %2974 = vdwg.mxu0
    %2975 = vmatpush.bf16.msra.mxu0 %v2417
    %2976 = vmatpush.bf16.msra.mxu0 %v2409
    %2977 = vmatpush.bf16.msra.mxu0 %v2401
    %2978 = vmatpush.bf16.msra.mxu0 %v2393
    %2979 = vmatpush.bf16.msra.mxu0 %v2385
    %2980 = vmatpush.bf16.msra.mxu0 %v2377
    %2981 = vmatpush.bf16.msra.mxu0 %v2369
    %2982 = vmatpush.bf16.msra.mxu0 %v2361
    %2983 = vmatmul.bf16.gmra.mxu0 %v1249
    %v2984 = vpop.f32.mrf.mxu0
    %v2985 = vadd.f32 %v2972, %v2984
    %v2986 = vpop.f32.mrf.mxu0
    %2987 = vdwg.mxu0
    %2988 = vmatpush.bf16.msra.mxu0 %v2481
    %2989 = vmatpush.bf16.msra.mxu0 %v2473
    %2990 = vmatpush.bf16.msra.mxu0 %v2465
    %2991 = vmatpush.bf16.msra.mxu0 %v2457
    %2992 = vmatpush.bf16.msra.mxu0 %v2449
    %2993 = vmatpush.bf16.msra.mxu0 %v2441
    %2994 = vmatpush.bf16.msra.mxu0 %v2433
    %2995 = vmatpush.bf16.msra.mxu0 %v2425
    %2996 = vmatmul.bf16.gmra.mxu0 %v1250
    %v2997 = vpop.f32.mrf.mxu0
    %v2998 = vadd.f32 %v2985, %v2997
    %v2999 = vpop.f32.mrf.mxu0
    %3000 = vdwg.mxu0
    %3001 = vmatpush.bf16.msra.mxu0 %v2545
    %3002 = vmatpush.bf16.msra.mxu0 %v2537
    %3003 = vmatpush.bf16.msra.mxu0 %v2529
    %3004 = vmatpush.bf16.msra.mxu0 %v2521
    %3005 = vmatpush.bf16.msra.mxu0 %v2513
    %3006 = vmatpush.bf16.msra.mxu0 %v2505
    %3007 = vmatpush.bf16.msra.mxu0 %v2497
    %3008 = vmatpush.bf16.msra.mxu0 %v2489
    %3009 = vmatmul.bf16.gmra.mxu0 %v1251
    %v3010 = vpop.f32.mrf.mxu0
    %v3011 = vadd.f32 %v2998, %v3010
    %v3012 = vpop.f32.mrf.mxu0
    %3013 = vdwg.mxu0
    %3014 = vmatpush.bf16.msra.mxu0 %v2354
    %3015 = vmatpush.bf16.msra.mxu0 %v2346
    %3016 = vmatpush.bf16.msra.mxu0 %v2338
    %3017 = vmatpush.bf16.msra.mxu0 %v2330
    %3018 = vmatpush.bf16.msra.mxu0 %v2322
    %3019 = vmatpush.bf16.msra.mxu0 %v2314
    %3020 = vmatpush.bf16.msra.mxu0 %v2306
    %3021 = vmatpush.bf16.msra.mxu0 %v2298
    %3022 = vmatmul.bf16.gmra.mxu0 %v1248
    %v3023 = vpop.f32.mrf.mxu0
    %v3024 = vadd.f32 %v1514, %v3023
    %v3025 = vpop.f32.mrf.mxu0
    %3026 = vdwg.mxu0
    %3027 = vmatpush.bf16.msra.mxu0 %v2418
    %3028 = vmatpush.bf16.msra.mxu0 %v2410
    %3029 = vmatpush.bf16.msra.mxu0 %v2402
    %3030 = vmatpush.bf16.msra.mxu0 %v2394
    %3031 = vmatpush.bf16.msra.mxu0 %v2386
    %3032 = vmatpush.bf16.msra.mxu0 %v2378
    %3033 = vmatpush.bf16.msra.mxu0 %v2370
    %3034 = vmatpush.bf16.msra.mxu0 %v2362
    %3035 = vmatmul.bf16.gmra.mxu0 %v1249
    %v3036 = vpop.f32.mrf.mxu0
    %v3037 = vadd.f32 %v3024, %v3036
    %v3038 = vpop.f32.mrf.mxu0
    %3039 = vdwg.mxu0
    %3040 = vmatpush.bf16.msra.mxu0 %v2482
    %3041 = vmatpush.bf16.msra.mxu0 %v2474
    %3042 = vmatpush.bf16.msra.mxu0 %v2466
    %3043 = vmatpush.bf16.msra.mxu0 %v2458
    %3044 = vmatpush.bf16.msra.mxu0 %v2450
    %3045 = vmatpush.bf16.msra.mxu0 %v2442
    %3046 = vmatpush.bf16.msra.mxu0 %v2434
    %3047 = vmatpush.bf16.msra.mxu0 %v2426
    %3048 = vmatmul.bf16.gmra.mxu0 %v1250
    %v3049 = vpop.f32.mrf.mxu0
    %v3050 = vadd.f32 %v3037, %v3049
    %v3051 = vpop.f32.mrf.mxu0
    %3052 = vdwg.mxu0
    %3053 = vmatpush.bf16.msra.mxu0 %v2546
    %3054 = vmatpush.bf16.msra.mxu0 %v2538
    %3055 = vmatpush.bf16.msra.mxu0 %v2530
    %3056 = vmatpush.bf16.msra.mxu0 %v2522
    %3057 = vmatpush.bf16.msra.mxu0 %v2514
    %3058 = vmatpush.bf16.msra.mxu0 %v2506
    %3059 = vmatpush.bf16.msra.mxu0 %v2498
    %3060 = vmatpush.bf16.msra.mxu0 %v2490
    %3061 = vmatmul.bf16.gmra.mxu0 %v1251
    %v3062 = vpop.f32.mrf.mxu0
    %v3063 = vadd.f32 %v3050, %v3062
    %v3064 = vpop.f32.mrf.mxu0
    %3065 = vdwg.mxu0
    %3066 = vmatpush.bf16.msra.mxu0 %v2355
    %3067 = vmatpush.bf16.msra.mxu0 %v2347
    %3068 = vmatpush.bf16.msra.mxu0 %v2339
    %3069 = vmatpush.bf16.msra.mxu0 %v2331
    %3070 = vmatpush.bf16.msra.mxu0 %v2323
    %3071 = vmatpush.bf16.msra.mxu0 %v2315
    %3072 = vmatpush.bf16.msra.mxu0 %v2307
    %3073 = vmatpush.bf16.msra.mxu0 %v2299
    %3074 = vmatmul.bf16.gmra.mxu0 %v1248
    %v3075 = vpop.f32.mrf.mxu0
    %v3076 = vadd.f32 %v1515, %v3075
    %v3077 = vpop.f32.mrf.mxu0
    %3078 = vdwg.mxu0
    %3079 = vmatpush.bf16.msra.mxu0 %v2419
    %3080 = vmatpush.bf16.msra.mxu0 %v2411
    %3081 = vmatpush.bf16.msra.mxu0 %v2403
    %3082 = vmatpush.bf16.msra.mxu0 %v2395
    %3083 = vmatpush.bf16.msra.mxu0 %v2387
    %3084 = vmatpush.bf16.msra.mxu0 %v2379
    %3085 = vmatpush.bf16.msra.mxu0 %v2371
    %3086 = vmatpush.bf16.msra.mxu0 %v2363
    %3087 = vmatmul.bf16.gmra.mxu0 %v1249
    %v3088 = vpop.f32.mrf.mxu0
    %v3089 = vadd.f32 %v3076, %v3088
    %v3090 = vpop.f32.mrf.mxu0
    %3091 = vdwg.mxu0
    %3092 = vmatpush.bf16.msra.mxu0 %v2483
    %3093 = vmatpush.bf16.msra.mxu0 %v2475
    %3094 = vmatpush.bf16.msra.mxu0 %v2467
    %3095 = vmatpush.bf16.msra.mxu0 %v2459
    %3096 = vmatpush.bf16.msra.mxu0 %v2451
    %3097 = vmatpush.bf16.msra.mxu0 %v2443
    %3098 = vmatpush.bf16.msra.mxu0 %v2435
    %3099 = vmatpush.bf16.msra.mxu0 %v2427
    %3100 = vmatmul.bf16.gmra.mxu0 %v1250
    %v3101 = vpop.f32.mrf.mxu0
    %v3102 = vadd.f32 %v3089, %v3101
    %v3103 = vpop.f32.mrf.mxu0
    %3104 = vdwg.mxu0
    %3105 = vmatpush.bf16.msra.mxu0 %v2547
    %3106 = vmatpush.bf16.msra.mxu0 %v2539
    %3107 = vmatpush.bf16.msra.mxu0 %v2531
    %3108 = vmatpush.bf16.msra.mxu0 %v2523
    %3109 = vmatpush.bf16.msra.mxu0 %v2515
    %3110 = vmatpush.bf16.msra.mxu0 %v2507
    %3111 = vmatpush.bf16.msra.mxu0 %v2499
    %3112 = vmatpush.bf16.msra.mxu0 %v2491
    %3113 = vmatmul.bf16.gmra.mxu0 %v1251
    %v3114 = vpop.f32.mrf.mxu0
    %v3115 = vadd.f32 %v3102, %v3114
    %v3116 = vpop.f32.mrf.mxu0
    %3117 = vdwg.mxu0
    %3118 = vmatpush.bf16.msra.mxu0 %v2356
    %3119 = vmatpush.bf16.msra.mxu0 %v2348
    %3120 = vmatpush.bf16.msra.mxu0 %v2340
    %3121 = vmatpush.bf16.msra.mxu0 %v2332
    %3122 = vmatpush.bf16.msra.mxu0 %v2324
    %3123 = vmatpush.bf16.msra.mxu0 %v2316
    %3124 = vmatpush.bf16.msra.mxu0 %v2308
    %3125 = vmatpush.bf16.msra.mxu0 %v2300
    %3126 = vmatmul.bf16.gmra.mxu0 %v1248
    %v3127 = vpop.f32.mrf.mxu0
    %v3128 = vadd.f32 %v1516, %v3127
    %v3129 = vpop.f32.mrf.mxu0
    %3130 = vdwg.mxu0
    %3131 = vmatpush.bf16.msra.mxu0 %v2420
    %3132 = vmatpush.bf16.msra.mxu0 %v2412
    %3133 = vmatpush.bf16.msra.mxu0 %v2404
    %3134 = vmatpush.bf16.msra.mxu0 %v2396
    %3135 = vmatpush.bf16.msra.mxu0 %v2388
    %3136 = vmatpush.bf16.msra.mxu0 %v2380
    %3137 = vmatpush.bf16.msra.mxu0 %v2372
    %3138 = vmatpush.bf16.msra.mxu0 %v2364
    %3139 = vmatmul.bf16.gmra.mxu0 %v1249
    %v3140 = vpop.f32.mrf.mxu0
    %v3141 = vadd.f32 %v3128, %v3140
    %v3142 = vpop.f32.mrf.mxu0
    %3143 = vdwg.mxu0
    %3144 = vmatpush.bf16.msra.mxu0 %v2484
    %3145 = vmatpush.bf16.msra.mxu0 %v2476
    %3146 = vmatpush.bf16.msra.mxu0 %v2468
    %3147 = vmatpush.bf16.msra.mxu0 %v2460
    %3148 = vmatpush.bf16.msra.mxu0 %v2452
    %3149 = vmatpush.bf16.msra.mxu0 %v2444
    %3150 = vmatpush.bf16.msra.mxu0 %v2436
    %3151 = vmatpush.bf16.msra.mxu0 %v2428
    %3152 = vmatmul.bf16.gmra.mxu0 %v1250
    %v3153 = vpop.f32.mrf.mxu0
    %v3154 = vadd.f32 %v3141, %v3153
    %v3155 = vpop.f32.mrf.mxu0
    %3156 = vdwg.mxu0
    %3157 = vmatpush.bf16.msra.mxu0 %v2548
    %3158 = vmatpush.bf16.msra.mxu0 %v2540
    %3159 = vmatpush.bf16.msra.mxu0 %v2532
    %3160 = vmatpush.bf16.msra.mxu0 %v2524
    %3161 = vmatpush.bf16.msra.mxu0 %v2516
    %3162 = vmatpush.bf16.msra.mxu0 %v2508
    %3163 = vmatpush.bf16.msra.mxu0 %v2500
    %3164 = vmatpush.bf16.msra.mxu0 %v2492
    %3165 = vmatmul.bf16.gmra.mxu0 %v1251
    %v3166 = vpop.f32.mrf.mxu0
    %v3167 = vadd.f32 %v3154, %v3166
    %v3168 = vpop.f32.mrf.mxu0
    %3169 = vdwg.mxu0
    %3170 = vmatpush.bf16.msra.mxu0 %v2357
    %3171 = vmatpush.bf16.msra.mxu0 %v2349
    %3172 = vmatpush.bf16.msra.mxu0 %v2341
    %3173 = vmatpush.bf16.msra.mxu0 %v2333
    %3174 = vmatpush.bf16.msra.mxu0 %v2325
    %3175 = vmatpush.bf16.msra.mxu0 %v2317
    %3176 = vmatpush.bf16.msra.mxu0 %v2309
    %3177 = vmatpush.bf16.msra.mxu0 %v2301
    %3178 = vmatmul.bf16.gmra.mxu0 %v1248
    %v3179 = vpop.f32.mrf.mxu0
    %v3180 = vadd.f32 %v1517, %v3179
    %v3181 = vpop.f32.mrf.mxu0
    %3182 = vdwg.mxu0
    %3183 = vmatpush.bf16.msra.mxu0 %v2421
    %3184 = vmatpush.bf16.msra.mxu0 %v2413
    %3185 = vmatpush.bf16.msra.mxu0 %v2405
    %3186 = vmatpush.bf16.msra.mxu0 %v2397
    %3187 = vmatpush.bf16.msra.mxu0 %v2389
    %3188 = vmatpush.bf16.msra.mxu0 %v2381
    %3189 = vmatpush.bf16.msra.mxu0 %v2373
    %3190 = vmatpush.bf16.msra.mxu0 %v2365
    %3191 = vmatmul.bf16.gmra.mxu0 %v1249
    %v3192 = vpop.f32.mrf.mxu0
    %v3193 = vadd.f32 %v3180, %v3192
    %v3194 = vpop.f32.mrf.mxu0
    %3195 = vdwg.mxu0
    %3196 = vmatpush.bf16.msra.mxu0 %v2485
    %3197 = vmatpush.bf16.msra.mxu0 %v2477
    %3198 = vmatpush.bf16.msra.mxu0 %v2469
    %3199 = vmatpush.bf16.msra.mxu0 %v2461
    %3200 = vmatpush.bf16.msra.mxu0 %v2453
    %3201 = vmatpush.bf16.msra.mxu0 %v2445
    %3202 = vmatpush.bf16.msra.mxu0 %v2437
    %3203 = vmatpush.bf16.msra.mxu0 %v2429
    %3204 = vmatmul.bf16.gmra.mxu0 %v1250
    %v3205 = vpop.f32.mrf.mxu0
    %v3206 = vadd.f32 %v3193, %v3205
    %v3207 = vpop.f32.mrf.mxu0
    %3208 = vdwg.mxu0
    %3209 = vmatpush.bf16.msra.mxu0 %v2549
    %3210 = vmatpush.bf16.msra.mxu0 %v2541
    %3211 = vmatpush.bf16.msra.mxu0 %v2533
    %3212 = vmatpush.bf16.msra.mxu0 %v2525
    %3213 = vmatpush.bf16.msra.mxu0 %v2517
    %3214 = vmatpush.bf16.msra.mxu0 %v2509
    %3215 = vmatpush.bf16.msra.mxu0 %v2501
    %3216 = vmatpush.bf16.msra.mxu0 %v2493
    %3217 = vmatmul.bf16.gmra.mxu0 %v1251
    %v3218 = vpop.f32.mrf.mxu0
    %v3219 = vadd.f32 %v3206, %v3218
    %v3220 = vpop.f32.mrf.mxu0
    %3221 = vdwg.mxu0
    %v3222 = vld [vmem:[#allocation23] sm:$0xff]
    %v3223 = vld [vmem:[#allocation25] sm:$0xff]
    %v3224 = vrot.slane %v2855, 4
    %v3225 = vadd.f32 %v2855, %v3224
    %v3226 = vrot.slane %v3225, 2
    %v3227 = vadd.f32 %v3225, %v3226
    %v3228 = vrot.slane %v3227, 1
    %v3229 = vadd.f32 %v3227, %v3228
    %v3230 = vrot.slane %v2907, 4
    %v3231 = vadd.f32 %v2907, %v3230
    %v3232 = vrot.slane %v3231, 2
    %v3233 = vadd.f32 %v3231, %v3232
    %v3234 = vrot.slane %v3233, 1
    %v3235 = vadd.f32 %v3233, %v3234
    %v3236 = vrot.slane %v2959, 4
    %v3237 = vadd.f32 %v2959, %v3236
    %v3238 = vrot.slane %v3237, 2
    %v3239 = vadd.f32 %v3237, %v3238
    %v3240 = vrot.slane %v3239, 1
    %v3241 = vadd.f32 %v3239, %v3240
    %v3242 = vrot.slane %v3011, 4
    %v3243 = vadd.f32 %v3011, %v3242
    %v3244 = vrot.slane %v3243, 2
    %v3245 = vadd.f32 %v3243, %v3244
    %v3246 = vrot.slane %v3245, 1
    %v3247 = vadd.f32 %v3245, %v3246
    %v3248 = vrot.slane %v3063, 4
    %v3249 = vadd.f32 %v3063, %v3248
    %v3250 = vrot.slane %v3249, 2
    %v3251 = vadd.f32 %v3249, %v3250
    %v3252 = vrot.slane %v3251, 1
    %v3253 = vadd.f32 %v3251, %v3252
    %v3254 = vrot.slane %v3115, 4
    %v3255 = vadd.f32 %v3115, %v3254
    %v3256 = vrot.slane %v3255, 2
    %v3257 = vadd.f32 %v3255, %v3256
    %v3258 = vrot.slane %v3257, 1
    %v3259 = vadd.f32 %v3257, %v3258
    %v3260 = vrot.slane %v3167, 4
    %v3261 = vadd.f32 %v3167, %v3260
    %v3262 = vrot.slane %v3261, 2
    %v3263 = vadd.f32 %v3261, %v3262
    %v3264 = vrot.slane %v3263, 1
    %v3265 = vadd.f32 %v3263, %v3264
    %v3266 = vrot.slane %v3219, 4
    %v3267 = vadd.f32 %v3219, %v3266
    %v3268 = vrot.slane %v3267, 2
    %v3269 = vadd.f32 %v3267, %v3268
    %v3270 = vrot.slane %v3269, 1
    %v3271 = vadd.f32 %v3269, %v3270
    %v3272 = vmul.f32 %v3229, %v531
    %v3273 = vmul.f32 %v3235, %v531
    %v3274 = vmul.f32 %v3241, %v531
    %v3275 = vmul.f32 %v3247, %v531
    %v3276 = vmul.f32 %v3253, %v531
    %v3277 = vmul.f32 %v3259, %v531
    %v3278 = vmul.f32 %v3265, %v531
    %v3279 = vmul.f32 %v3271, %v531
    %v3280 = vsub.f32 %v2855, %v3272
    %v3281 = vsub.f32 %v2907, %v3273
    %v3282 = vsub.f32 %v2959, %v3274
    %v3283 = vsub.f32 %v3011, %v3275
    %v3284 = vsub.f32 %v3063, %v3276
    %v3285 = vsub.f32 %v3115, %v3277
    %v3286 = vsub.f32 %v3167, %v3278
    %v3287 = vsub.f32 %v3219, %v3279
    %v3288 = vmul.f32 %v3280, %v3280
    %v3289 = vmul.f32 %v3281, %v3281
    %v3290 = vmul.f32 %v3282, %v3282
    %v3291 = vmul.f32 %v3283, %v3283
    %v3292 = vmul.f32 %v3284, %v3284
    %v3293 = vmul.f32 %v3285, %v3285
    %v3294 = vmul.f32 %v3286, %v3286
    %v3295 = vmul.f32 %v3287, %v3287
    %v3296 = vrot.slane %v3288, 4
    %v3297 = vadd.f32 %v3288, %v3296
    %v3298 = vrot.slane %v3297, 2
    %v3299 = vadd.f32 %v3297, %v3298
    %v3300 = vrot.slane %v3299, 1
    %v3301 = vadd.f32 %v3299, %v3300
    %v3302 = vrot.slane %v3289, 4
    %v3303 = vadd.f32 %v3289, %v3302
    %v3304 = vrot.slane %v3303, 2
    %v3305 = vadd.f32 %v3303, %v3304
    %v3306 = vrot.slane %v3305, 1
    %v3307 = vadd.f32 %v3305, %v3306
    %v3308 = vrot.slane %v3290, 4
    %v3309 = vadd.f32 %v3290, %v3308
    %v3310 = vrot.slane %v3309, 2
    %v3311 = vadd.f32 %v3309, %v3310
    %v3312 = vrot.slane %v3311, 1
    %v3313 = vadd.f32 %v3311, %v3312
    %v3314 = vrot.slane %v3291, 4
    %v3315 = vadd.f32 %v3291, %v3314
    %v3316 = vrot.slane %v3315, 2
    %v3317 = vadd.f32 %v3315, %v3316
    %v3318 = vrot.slane %v3317, 1
    %v3319 = vadd.f32 %v3317, %v3318
    %v3320 = vrot.slane %v3292, 4
    %v3321 = vadd.f32 %v3292, %v3320
    %v3322 = vrot.slane %v3321, 2
    %v3323 = vadd.f32 %v3321, %v3322
    %v3324 = vrot.slane %v3323, 1
    %v3325 = vadd.f32 %v3323, %v3324
    %v3326 = vrot.slane %v3293, 4
    %v3327 = vadd.f32 %v3293, %v3326
    %v3328 = vrot.slane %v3327, 2
    %v3329 = vadd.f32 %v3327, %v3328
    %v3330 = vrot.slane %v3329, 1
    %v3331 = vadd.f32 %v3329, %v3330
    %v3332 = vrot.slane %v3294, 4
    %v3333 = vadd.f32 %v3294, %v3332
    %v3334 = vrot.slane %v3333, 2
    %v3335 = vadd.f32 %v3333, %v3334
    %v3336 = vrot.slane %v3335, 1
    %v3337 = vadd.f32 %v3335, %v3336
    %v3338 = vrot.slane %v3295, 4
    %v3339 = vadd.f32 %v3295, %v3338
    %v3340 = vrot.slane %v3339, 2
    %v3341 = vadd.f32 %v3339, %v3340
    %v3342 = vrot.slane %v3341, 1
    %v3343 = vadd.f32 %v3341, %v3342
    %v3344 = vmul.f32 %v3301, %v531
    %v3345 = vmul.f32 %v3307, %v531
    %v3346 = vmul.f32 %v3313, %v531
    %v3347 = vmul.f32 %v3319, %v531
    %v3348 = vmul.f32 %v3325, %v531
    %v3349 = vmul.f32 %v3331, %v531
    %v3350 = vmul.f32 %v3337, %v531
    %v3351 = vmul.f32 %v3343, %v531
    %v3352 = vadd.f32 %v3344, 0.8
    %v3353 = vadd.f32 %v3345, 0.8
    %v3354 = vadd.f32 %v3346, 0.8
    %v3355 = vadd.f32 %v3347, 0.8
    %v3356 = vadd.f32 %v3348, 0.8
    %v3357 = vadd.f32 %v3349, 0.8
    %v3358 = vadd.f32 %v3350, 0.8
    %v3359 = vadd.f32 %v3351, 0.8
    %v3360 = vrsqrt.pop %v3352
    %v3361 = vmul.f32 %v3360, %v3352
    %v3362 = vmul.f32 %v3361, %v3360
    %v3363 = vmul.f32 0.5, %v3362
    %v3364 = vsub.f32 1.5, %v3363
    %v3365 = vmul.f32 %v3360, %v3364
    %vm3366 = vweird.f32 %v3352
    %vm3367 = vweird.f32 %v3360
    %vm3368 = vmor %vm3366, %vm3367
    %v3369 = vsel %vm3368, %v3360, %v3365
    %v3370 = vrsqrt.pop %v3353
    %v3371 = vmul.f32 %v3370, %v3353
    %v3372 = vmul.f32 %v3371, %v3370
    %v3373 = vmul.f32 0.5, %v3372
    %v3374 = vsub.f32 1.5, %v3373
    %v3375 = vmul.f32 %v3370, %v3374
    %vm3376 = vweird.f32 %v3353
    %vm3377 = vweird.f32 %v3370
    %vm3378 = vmor %vm3376, %vm3377
    %v3379 = vsel %vm3378, %v3370, %v3375
    %v3380 = vrsqrt.pop %v3354
    %v3381 = vmul.f32 %v3380, %v3354
    %v3382 = vmul.f32 %v3381, %v3380
    %v3383 = vmul.f32 0.5, %v3382
    %v3384 = vsub.f32 1.5, %v3383
    %v3385 = vmul.f32 %v3380, %v3384
    %vm3386 = vweird.f32 %v3354
    %vm3387 = vweird.f32 %v3380
    %vm3388 = vmor %vm3386, %vm3387
    %v3389 = vsel %vm3388, %v3380, %v3385
    %v3390 = vrsqrt.pop %v3355
    %v3391 = vmul.f32 %v3390, %v3355
    %v3392 = vmul.f32 %v3391, %v3390
    %v3393 = vmul.f32 0.5, %v3392
    %v3394 = vsub.f32 1.5, %v3393
    %v3395 = vmul.f32 %v3390, %v3394
    %vm3396 = vweird.f32 %v3355
    %vm3397 = vweird.f32 %v3390
    %vm3398 = vmor %vm3396, %vm3397
    %v3399 = vsel %vm3398, %v3390, %v3395
    %v3400 = vrsqrt.pop %v3356
    %v3401 = vmul.f32 %v3400, %v3356
    %v3402 = vmul.f32 %v3401, %v3400
    %v3403 = vmul.f32 0.5, %v3402
    %v3404 = vsub.f32 1.5, %v3403
    %v3405 = vmul.f32 %v3400, %v3404
    %vm3406 = vweird.f32 %v3356
    %vm3407 = vweird.f32 %v3400
    %vm3408 = vmor %vm3406, %vm3407
    %v3409 = vsel %vm3408, %v3400, %v3405
    %v3410 = vrsqrt.pop %v3357
    %v3411 = vmul.f32 %v3410, %v3357
    %v3412 = vmul.f32 %v3411, %v3410
    %v3413 = vmul.f32 0.5, %v3412
    %v3414 = vsub.f32 1.5, %v3413
    %v3415 = vmul.f32 %v3410, %v3414
    %vm3416 = vweird.f32 %v3357
    %vm3417 = vweird.f32 %v3410
    %vm3418 = vmor %vm3416, %vm3417
    %v3419 = vsel %vm3418, %v3410, %v3415
    %v3420 = vrsqrt.pop %v3358
    %v3421 = vmul.f32 %v3420, %v3358
    %v3422 = vmul.f32 %v3421, %v3420
    %v3423 = vmul.f32 0.5, %v3422
    %v3424 = vsub.f32 1.5, %v3423
    %v3425 = vmul.f32 %v3420, %v3424
    %vm3426 = vweird.f32 %v3358
    %vm3427 = vweird.f32 %v3420
    %vm3428 = vmor %vm3426, %vm3427
    %v3429 = vsel %vm3428, %v3420, %v3425
    %v3430 = vrsqrt.pop %v3359
    %v3431 = vmul.f32 %v3430, %v3359
    %v3432 = vmul.f32 %v3431, %v3430
    %v3433 = vmul.f32 0.5, %v3432
    %v3434 = vsub.f32 1.5, %v3433
    %v3435 = vmul.f32 %v3430, %v3434
    %vm3436 = vweird.f32 %v3359
    %vm3437 = vweird.f32 %v3430
    %vm3438 = vmor %vm3436, %vm3437
    %v3439 = vsel %vm3438, %v3430, %v3435
    %v3440 = vmul.f32 %v3280, %v3369
    %v3441 = vmul.f32 %v3281, %v3379
    %v3442 = vmul.f32 %v3282, %v3389
    %v3443 = vmul.f32 %v3283, %v3399
    %v3444 = vmul.f32 %v3284, %v3409
    %v3445 = vmul.f32 %v3285, %v3419
    %v3446 = vmul.f32 %v3286, %v3429
    %v3447 = vmul.f32 %v3287, %v3439
    %v3449 = vperm.slane %v3222, 0
    %v3450 = vperm.slane %v3222, 1
    %v3451 = vperm.slane %v3222, 2
    %v3452 = vperm.slane %v3222, 3
    %v3453 = vperm.slane %v3222, 4
    %v3454 = vperm.slane %v3222, 5
    %v3455 = vperm.slane %v3222, 6
    %v3456 = vperm.slane %v3222, 7
    %v3465 = vmul.f32 %v3440, %v3449
    %v3466 = vmul.f32 %v3441, %v3450
    %v3467 = vmul.f32 %v3442, %v3451
    %v3468 = vmul.f32 %v3443, %v3452
    %v3469 = vmul.f32 %v3444, %v3453
    %v3470 = vmul.f32 %v3445, %v3454
    %v3471 = vmul.f32 %v3446, %v3455
    %v3472 = vmul.f32 %v3447, %v3456
    %v3474 = vperm.slane %v3223, 0
    %v3475 = vperm.slane %v3223, 1
    %v3476 = vperm.slane %v3223, 2
    %v3477 = vperm.slane %v3223, 3
    %v3478 = vperm.slane %v3223, 4
    %v3479 = vperm.slane %v3223, 5
    %v3480 = vperm.slane %v3223, 6
    %v3481 = vperm.slane %v3223, 7
    %v3490 = vadd.f32 %v3465, %v3474
    %v3491 = vadd.f32 %v3466, %v3475
    %v3492 = vadd.f32 %v3467, %v3476
    %v3493 = vadd.f32 %v3468, %v3477
    %v3494 = vadd.f32 %v3469, %v3478
    %v3495 = vadd.f32 %v3470, %v3479
    %v3496 = vadd.f32 %v3471, %v3480
    %v3497 = vadd.f32 %v3472, %v3481
    %vm3498 = vcmp.gt.f32.partialorder %v3490, 0.0
    %vm3499 = vcmp.gt.f32.partialorder %v3491, 0.0
    %vm3500 = vcmp.gt.f32.partialorder %v3492, 0.0
    %vm3501 = vcmp.gt.f32.partialorder %v3493, 0.0
    %vm3502 = vcmp.gt.f32.partialorder %v3494, 0.0
    %vm3503 = vcmp.gt.f32.partialorder %v3495, 0.0
    %vm3504 = vcmp.gt.f32.partialorder %v3496, 0.0
    %vm3505 = vcmp.gt.f32.partialorder %v3497, 0.0
    %v3506 = vmul.f32 %v3490, 0.2
    %v3507 = vmul.f32 %v3491, 0.2
    %v3508 = vmul.f32 %v3492, 0.2
    %v3509 = vmul.f32 %v3493, 0.2
    %v3510 = vmul.f32 %v3494, 0.2
    %v3511 = vmul.f32 %v3495, 0.2
    %v3512 = vmul.f32 %v3496, 0.2
    %v3513 = vmul.f32 %v3497, 0.2
    %v3514 = vsel %vm3498, %v3490, %v3506
    %v3515 = vsel %vm3499, %v3491, %v3507
    %v3516 = vsel %vm3500, %v3492, %v3508
    %v3517 = vsel %vm3501, %v3493, %v3509
    %v3518 = vsel %vm3502, %v3494, %v3510
    %v3519 = vsel %vm3503, %v3495, %v3511
    %v3520 = vsel %vm3504, %v3496, %v3512
    %v3521 = vsel %vm3505, %v3497, %v3513
    %v3522 = vpack.c.bf16 %v3514, %v3514
    %v3523 = vpack.c.bf16 %v3515, %v3515
    %v3524 = vpack.c.bf16 %v3516, %v3516
    %v3525 = vpack.c.bf16 %v3517, %v3517
    %v3526 = vpack.c.bf16 %v3518, %v3518
    %v3527 = vpack.c.bf16 %v3519, %v3519
    %v3528 = vpack.c.bf16 %v3520, %v3520
    %v3529 = vpack.c.bf16 %v3521, %v3521
    %v3530 = vld [vmem:[#allocation26] sm:$0xff]
    %v3531 = vld [vmem:[#allocation26 + $0x8] sm:$0xff]
    %v3532 = vld [vmem:[#allocation26 + $0x10] sm:$0xff]
    %v3533 = vld [vmem:[#allocation26 + $0x18] sm:$0xf]
    %v3534 = vld [vmem:[#allocation26 + $0x1c] sm:$0xff]
    %v3535 = vld [vmem:[#allocation26 + $0x24] sm:$0xff]
    %v3536 = vld [vmem:[#allocation26 + $0x2c] sm:$0xff]
    %v3537 = vld [vmem:[#allocation26 + $0x34] sm:$0xf]
    %v3538 = vld [vmem:[#allocation26 + $0x38] sm:$0xff]
    %v3539 = vld [vmem:[#allocation26 + $0x40] sm:$0xff]
    %v3540 = vld [vmem:[#allocation26 + $0x48] sm:$0xff]
    %v3541 = vld [vmem:[#allocation26 + $0x50] sm:$0xf]
    %v3542 = vld [vmem:[#allocation26 + $0x54] sm:$0xff]
    %v3543 = vld [vmem:[#allocation26 + $0x5c] sm:$0xff]
    %v3544 = vld [vmem:[#allocation26 + $0x64] sm:$0xff]
    %v3545 = vld [vmem:[#allocation26 + $0x6c] sm:$0xf]
    %v3546 = vld [vmem:[#allocation26 + $0x70] sm:$0xff]
    %v3547 = vld [vmem:[#allocation26 + $0x78] sm:$0xff]
    %v3548 = vld [vmem:[#allocation26 + $0x80] sm:$0xff]
    %v3549 = vld [vmem:[#allocation26 + $0x88] sm:$0xf]
    %v3550 = vld [vmem:[#allocation26 + $0x8c] sm:$0xff]
    %v3551 = vld [vmem:[#allocation26 + $0x94] sm:$0xff]
    %v3552 = vld [vmem:[#allocation26 + $0x9c] sm:$0xff]
    %v3553 = vld [vmem:[#allocation26 + $0xa4] sm:$0xf]
    %v3554 = vld [vmem:[#allocation26 + $0xa8] sm:$0xff]
    %v3555 = vld [vmem:[#allocation26 + $0xb0] sm:$0xff]
    %v3556 = vld [vmem:[#allocation26 + $0xb8] sm:$0xff]
    %v3557 = vld [vmem:[#allocation26 + $0xc0] sm:$0xf]
    %v3558 = vld [vmem:[#allocation26 + $0xc4] sm:$0xff]
    %v3559 = vld [vmem:[#allocation26 + $0xcc] sm:$0xff]
    %v3560 = vld [vmem:[#allocation26 + $0xd4] sm:$0xff]
    %v3561 = vld [vmem:[#allocation26 + $0xdc] sm:$0xf]
    %v3562 = vld [vmem:[#allocation26 + $0xe0] sm:$0xff]
    %v3563 = vld [vmem:[#allocation26 + $0xe8] sm:$0xff]
    %v3564 = vld [vmem:[#allocation26 + $0xf0] sm:$0xff]
    %v3565 = vld [vmem:[#allocation26 + $0xf8] sm:$0xf]
    %v3566 = vld [vmem:[#allocation26 + $0xfc] sm:$0xff]
    %v3567 = vld [vmem:[#allocation26 + $0x104] sm:$0xff]
    %v3568 = vld [vmem:[#allocation26 + $0x10c] sm:$0xff]
    %v3569 = vld [vmem:[#allocation26 + $0x114] sm:$0xf]
    %v3570 = vld [vmem:[#allocation26 + $0x118] sm:$0xff]
    %v3571 = vld [vmem:[#allocation26 + $0x120] sm:$0xff]
    %v3572 = vld [vmem:[#allocation26 + $0x128] sm:$0xff]
    %v3573 = vld [vmem:[#allocation26 + $0x130] sm:$0xf]
    %v3574 = vld [vmem:[#allocation26 + $0x134] sm:$0xff]
    %v3575 = vld [vmem:[#allocation26 + $0x13c] sm:$0xff]
    %v3576 = vld [vmem:[#allocation26 + $0x144] sm:$0xff]
    %v3577 = vld [vmem:[#allocation26 + $0x14c] sm:$0xf]
    %v3578 = vld [vmem:[#allocation26 + $0x150] sm:$0xff]
    %v3579 = vld [vmem:[#allocation26 + $0x158] sm:$0xff]
    %v3580 = vld [vmem:[#allocation26 + $0x160] sm:$0xff]
    %v3581 = vld [vmem:[#allocation26 + $0x168] sm:$0xf]
    %v3582 = vld [vmem:[#allocation26 + $0x16c] sm:$0xff]
    %v3583 = vld [vmem:[#allocation26 + $0x174] sm:$0xff]
    %v3584 = vld [vmem:[#allocation26 + $0x17c] sm:$0xff]
    %v3585 = vld [vmem:[#allocation26 + $0x184] sm:$0xf]
    %v3586 = vld [vmem:[#allocation26 + $0x188] sm:$0xff]
    %v3587 = vld [vmem:[#allocation26 + $0x190] sm:$0xff]
    %v3588 = vld [vmem:[#allocation26 + $0x198] sm:$0xff]
    %v3589 = vld [vmem:[#allocation26 + $0x1a0] sm:$0xf]
    %v3590 = vld [vmem:[#allocation26 + $0x1a4] sm:$0xff]
    %v3591 = vld [vmem:[#allocation26 + $0x1ac] sm:$0xff]
    %v3592 = vld [vmem:[#allocation26 + $0x1b4] sm:$0xff]
    %v3593 = vld [vmem:[#allocation26 + $0x1bc] sm:$0xf]
    %v3594 = vld [vmem:[#allocation26 + $0x1c0] sm:$0xff]
    %v3595 = vld [vmem:[#allocation26 + $0x1c8] sm:$0xff]
    %v3596 = vld [vmem:[#allocation26 + $0x1d0] sm:$0xff]
    %v3597 = vld [vmem:[#allocation26 + $0x1d8] sm:$0xf]
    %v3598 = vld [vmem:[#allocation26 + $0x1dc] sm:$0xff]
    %v3599 = vld [vmem:[#allocation26 + $0x1e4] sm:$0xff]
    %v3600 = vld [vmem:[#allocation26 + $0x1ec] sm:$0xff]
    %v3601 = vld [vmem:[#allocation26 + $0x1f4] sm:$0xf]
    %v3602 = vld [vmem:[#allocation26 + $0x1f8] sm:$0xff]
    %v3603 = vld [vmem:[#allocation26 + $0x200] sm:$0xff]
    %v3604 = vld [vmem:[#allocation26 + $0x208] sm:$0xff]
    %v3605 = vld [vmem:[#allocation26 + $0x210] sm:$0xf]
    %v3606 = vld [vmem:[#allocation26 + $0x214] sm:$0xff]
    %v3607 = vld [vmem:[#allocation26 + $0x21c] sm:$0xff]
    %v3608 = vld [vmem:[#allocation26 + $0x224] sm:$0xff]
    %v3609 = vld [vmem:[#allocation26 + $0x22c] sm:$0xf]
    %v3610 = vld [vmem:[#allocation26 + $0x230] sm:$0xff]
    %v3611 = vld [vmem:[#allocation26 + $0x238] sm:$0xff]
    %v3612 = vld [vmem:[#allocation26 + $0x240] sm:$0xff]
    %v3613 = vld [vmem:[#allocation26 + $0x248] sm:$0xf]
    %v3614 = vld [vmem:[#allocation26 + $0x24c] sm:$0xff]
    %v3615 = vld [vmem:[#allocation26 + $0x254] sm:$0xff]
    %v3616 = vld [vmem:[#allocation26 + $0x25c] sm:$0xff]
    %v3617 = vld [vmem:[#allocation26 + $0x264] sm:$0xf]
    %v3618 = vld [vmem:[#allocation26 + $0x268] sm:$0xff]
    %v3619 = vld [vmem:[#allocation26 + $0x270] sm:$0xff]
    %v3620 = vld [vmem:[#allocation26 + $0x278] sm:$0xff]
    %v3621 = vld [vmem:[#allocation26 + $0x280] sm:$0xf]
    %v3622 = vld [vmem:[#allocation26 + $0x284] sm:$0xff]
    %v3623 = vld [vmem:[#allocation26 + $0x28c] sm:$0xff]
    %v3624 = vld [vmem:[#allocation26 + $0x294] sm:$0xff]
    %v3625 = vld [vmem:[#allocation26 + $0x29c] sm:$0xf]
    %v3626 = vld [vmem:[#allocation26 + $0x2a0] sm:$0xff]
    %v3627 = vld [vmem:[#allocation26 + $0x2a8] sm:$0xff]
    %v3628 = vld [vmem:[#allocation26 + $0x2b0] sm:$0xff]
    %v3629 = vld [vmem:[#allocation26 + $0x2b8] sm:$0xf]
    %v3630 = vld [vmem:[#allocation26 + $0x2bc] sm:$0xff]
    %v3631 = vld [vmem:[#allocation26 + $0x2c4] sm:$0xff]
    %v3632 = vld [vmem:[#allocation26 + $0x2cc] sm:$0xff]
    %v3633 = vld [vmem:[#allocation26 + $0x2d4] sm:$0xf]
    %v3634 = vld [vmem:[#allocation26 + $0x2d8] sm:$0xff]
    %v3635 = vld [vmem:[#allocation26 + $0x2e0] sm:$0xff]
    %v3636 = vld [vmem:[#allocation26 + $0x2e8] sm:$0xff]
    %v3637 = vld [vmem:[#allocation26 + $0x2f0] sm:$0xf]
    %v3638 = vld [vmem:[#allocation26 + $0x2f4] sm:$0xff]
    %v3639 = vld [vmem:[#allocation26 + $0x2fc] sm:$0xff]
    %v3640 = vld [vmem:[#allocation26 + $0x304] sm:$0xff]
    %v3641 = vld [vmem:[#allocation26 + $0x30c] sm:$0xf]
    %v3642 = vld [vmem:[#allocation26 + $0x310] sm:$0xff]
    %v3643 = vld [vmem:[#allocation26 + $0x318] sm:$0xff]
    %v3644 = vld [vmem:[#allocation26 + $0x320] sm:$0xff]
    %v3645 = vld [vmem:[#allocation26 + $0x328] sm:$0xf]
    %v3646 = vld [vmem:[#allocation26 + $0x32c] sm:$0xff]
    %v3647 = vld [vmem:[#allocation26 + $0x334] sm:$0xff]
    %v3648 = vld [vmem:[#allocation26 + $0x33c] sm:$0xff]
    %v3649 = vld [vmem:[#allocation26 + $0x344] sm:$0xf]
    %v3650 = vld [vmem:[#allocation26 + $0x348] sm:$0xff]
    %v3651 = vld [vmem:[#allocation26 + $0x350] sm:$0xff]
    %v3652 = vld [vmem:[#allocation26 + $0x358] sm:$0xff]
    %v3653 = vld [vmem:[#allocation26 + $0x360] sm:$0xf]
    %v3654 = vld [vmem:[#allocation26 + $0x364] sm:$0xff]
    %v3655 = vld [vmem:[#allocation26 + $0x36c] sm:$0xff]
    %v3656 = vld [vmem:[#allocation26 + $0x374] sm:$0xff]
    %v3657 = vld [vmem:[#allocation26 + $0x37c] sm:$0xf]
    %v3658 = vld [vmem:[#allocation26 + $0x380] sm:$0xff]
    %v3659 = vld [vmem:[#allocation26 + $0x388] sm:$0xff]
    %v3660 = vld [vmem:[#allocation26 + $0x390] sm:$0xff]
    %v3661 = vld [vmem:[#allocation26 + $0x398] sm:$0xf]
    %v3662 = vld [vmem:[#allocation26 + $0x39c] sm:$0xff]
    %v3663 = vld [vmem:[#allocation26 + $0x3a4] sm:$0xff]
    %v3664 = vld [vmem:[#allocation26 + $0x3ac] sm:$0xff]
    %v3665 = vld [vmem:[#allocation26 + $0x3b4] sm:$0xf]
    %v3666 = vld [vmem:[#allocation26 + $0x3b8] sm:$0xff]
    %v3667 = vld [vmem:[#allocation26 + $0x3c0] sm:$0xff]
    %v3668 = vld [vmem:[#allocation26 + $0x3c8] sm:$0xff]
    %v3669 = vld [vmem:[#allocation26 + $0x3d0] sm:$0xf]
    %v3670 = vld [vmem:[#allocation26 + $0x3d4] sm:$0xff]
    %v3671 = vld [vmem:[#allocation26 + $0x3dc] sm:$0xff]
    %v3672 = vld [vmem:[#allocation26 + $0x3e4] sm:$0xff]
    %v3673 = vld [vmem:[#allocation26 + $0x3ec] sm:$0xf]
    %v3674 = vld [vmem:[#allocation26 + $0x3f0] sm:$0xff]
    %v3675 = vld [vmem:[#allocation26 + $0x3f8] sm:$0xff]
    %v3676 = vld [vmem:[#allocation26 + $0x400] sm:$0xff]
    %v3677 = vld [vmem:[#allocation26 + $0x408] sm:$0xf]
    %v3678 = vld [vmem:[#allocation26 + $0x40c] sm:$0xff]
    %v3679 = vld [vmem:[#allocation26 + $0x414] sm:$0xff]
    %v3680 = vld [vmem:[#allocation26 + $0x41c] sm:$0xff]
    %v3681 = vld [vmem:[#allocation26 + $0x424] sm:$0xf]
    %v3682 = vld [vmem:[#allocation26 + $0x428] sm:$0xff]
    %v3683 = vld [vmem:[#allocation26 + $0x430] sm:$0xff]
    %v3684 = vld [vmem:[#allocation26 + $0x438] sm:$0xff]
    %v3685 = vld [vmem:[#allocation26 + $0x440] sm:$0xf]
    %v3686 = vld [vmem:[#allocation26 + $0x444] sm:$0xff]
    %v3687 = vld [vmem:[#allocation26 + $0x44c] sm:$0xff]
    %v3688 = vld [vmem:[#allocation26 + $0x454] sm:$0xff]
    %v3689 = vld [vmem:[#allocation26 + $0x45c] sm:$0xf]
    %v3690 = vld [vmem:[#allocation26 + $0x460] sm:$0xff]
    %v3691 = vld [vmem:[#allocation26 + $0x468] sm:$0xff]
    %v3692 = vld [vmem:[#allocation26 + $0x470] sm:$0xff]
    %v3693 = vld [vmem:[#allocation26 + $0x478] sm:$0xf]
    %v3694 = vld [vmem:[#allocation26 + $0x47c] sm:$0xff]
    %v3695 = vld [vmem:[#allocation26 + $0x484] sm:$0xff]
    %v3696 = vld [vmem:[#allocation26 + $0x48c] sm:$0xff]
    %v3697 = vld [vmem:[#allocation26 + $0x494] sm:$0xf]
    %v3698 = vld [vmem:[#allocation26 + $0x498] sm:$0xff]
    %v3699 = vld [vmem:[#allocation26 + $0x4a0] sm:$0xff]
    %v3700 = vld [vmem:[#allocation26 + $0x4a8] sm:$0xff]
    %v3701 = vld [vmem:[#allocation26 + $0x4b0] sm:$0xf]
    %v3702 = vld [vmem:[#allocation26 + $0x4b4] sm:$0xff]
    %v3703 = vld [vmem:[#allocation26 + $0x4bc] sm:$0xff]
    %v3704 = vld [vmem:[#allocation26 + $0x4c4] sm:$0xff]
    %v3705 = vld [vmem:[#allocation26 + $0x4cc] sm:$0xf]
    %v3706 = vld [vmem:[#allocation26 + $0x4d0] sm:$0xff]
    %v3707 = vld [vmem:[#allocation26 + $0x4d8] sm:$0xff]
    %v3708 = vld [vmem:[#allocation26 + $0x4e0] sm:$0xff]
    %v3709 = vld [vmem:[#allocation26 + $0x4e8] sm:$0xf]
    %v3710 = vld [vmem:[#allocation26 + $0x4ec] sm:$0xff]
    %v3711 = vld [vmem:[#allocation26 + $0x4f4] sm:$0xff]
    %v3712 = vld [vmem:[#allocation26 + $0x4fc] sm:$0xff]
    %v3713 = vld [vmem:[#allocation26 + $0x504] sm:$0xf]
    %v3714 = vld [vmem:[#allocation26 + $0x508] sm:$0xff]
    %v3715 = vld [vmem:[#allocation26 + $0x510] sm:$0xff]
    %v3716 = vld [vmem:[#allocation26 + $0x518] sm:$0xff]
    %v3717 = vld [vmem:[#allocation26 + $0x520] sm:$0xf]
    %v3718 = vld [vmem:[#allocation26 + $0x524] sm:$0xff]
    %v3719 = vld [vmem:[#allocation26 + $0x52c] sm:$0xff]
    %v3720 = vld [vmem:[#allocation26 + $0x534] sm:$0xff]
    %v3721 = vld [vmem:[#allocation26 + $0x53c] sm:$0xf]
    %v3722 = vld [vmem:[#allocation26 + $0x540] sm:$0xff]
    %v3723 = vld [vmem:[#allocation26 + $0x548] sm:$0xff]
    %v3724 = vld [vmem:[#allocation26 + $0x550] sm:$0xff]
    %v3725 = vld [vmem:[#allocation26 + $0x558] sm:$0xf]
    %v3726 = vld [vmem:[#allocation26 + $0x55c] sm:$0xff]
    %v3727 = vld [vmem:[#allocation26 + $0x564] sm:$0xff]
    %v3728 = vld [vmem:[#allocation26 + $0x56c] sm:$0xff]
    %v3729 = vld [vmem:[#allocation26 + $0x574] sm:$0xf]
    %v3730 = vld [vmem:[#allocation26 + $0x578] sm:$0xff]
    %v3731 = vld [vmem:[#allocation26 + $0x580] sm:$0xff]
    %v3732 = vld [vmem:[#allocation26 + $0x588] sm:$0xff]
    %v3733 = vld [vmem:[#allocation26 + $0x590] sm:$0xf]
    %v3734 = vld [vmem:[#allocation26 + $0x594] sm:$0xff]
    %v3735 = vld [vmem:[#allocation26 + $0x59c] sm:$0xff]
    %v3736 = vld [vmem:[#allocation26 + $0x5a4] sm:$0xff]
    %v3737 = vld [vmem:[#allocation26 + $0x5ac] sm:$0xf]
    %v3738 = vld [vmem:[#allocation26 + $0x5b0] sm:$0xff]
    %v3739 = vld [vmem:[#allocation26 + $0x5b8] sm:$0xff]
    %v3740 = vld [vmem:[#allocation26 + $0x5c0] sm:$0xff]
    %v3741 = vld [vmem:[#allocation26 + $0x5c8] sm:$0xf]
    %v3742 = vld [vmem:[#allocation26 + $0x5cc] sm:$0xff]
    %v3743 = vld [vmem:[#allocation26 + $0x5d4] sm:$0xff]
    %v3744 = vld [vmem:[#allocation26 + $0x5dc] sm:$0xff]
    %v3745 = vld [vmem:[#allocation26 + $0x5e4] sm:$0xf]
    %v3746 = vld [vmem:[#allocation26 + $0x5e8] sm:$0xff]
    %v3747 = vld [vmem:[#allocation26 + $0x5f0] sm:$0xff]
    %v3748 = vld [vmem:[#allocation26 + $0x5f8] sm:$0xff]
    %v3749 = vld [vmem:[#allocation26 + $0x600] sm:$0xf]
    %v3750 = vld [vmem:[#allocation26 + $0x604] sm:$0xff]
    %v3751 = vld [vmem:[#allocation26 + $0x60c] sm:$0xff]
    %v3752 = vld [vmem:[#allocation26 + $0x614] sm:$0xff]
    %v3753 = vld [vmem:[#allocation26 + $0x61c] sm:$0xf]
    %v3754 = vld [vmem:[#allocation26 + $0x620] sm:$0xff]
    %v3755 = vld [vmem:[#allocation26 + $0x628] sm:$0xff]
    %v3756 = vld [vmem:[#allocation26 + $0x630] sm:$0xff]
    %v3757 = vld [vmem:[#allocation26 + $0x638] sm:$0xf]
    %v3758 = vld [vmem:[#allocation26 + $0x63c] sm:$0xff]
    %v3759 = vld [vmem:[#allocation26 + $0x644] sm:$0xff]
    %v3760 = vld [vmem:[#allocation26 + $0x64c] sm:$0xff]
    %v3761 = vld [vmem:[#allocation26 + $0x654] sm:$0xf]
    %v3762 = vld [vmem:[#allocation26 + $0x658] sm:$0xff]
    %v3763 = vld [vmem:[#allocation26 + $0x660] sm:$0xff]
    %v3764 = vld [vmem:[#allocation26 + $0x668] sm:$0xff]
    %v3765 = vld [vmem:[#allocation26 + $0x670] sm:$0xf]
    %v3766 = vld [vmem:[#allocation26 + $0x674] sm:$0xff]
    %v3767 = vld [vmem:[#allocation26 + $0x67c] sm:$0xff]
    %v3768 = vld [vmem:[#allocation26 + $0x684] sm:$0xff]
    %v3769 = vld [vmem:[#allocation26 + $0x68c] sm:$0xf]
    %v3770 = vld [vmem:[#allocation26 + $0x690] sm:$0xff]
    %v3771 = vld [vmem:[#allocation26 + $0x698] sm:$0xff]
    %v3772 = vld [vmem:[#allocation26 + $0x6a0] sm:$0xff]
    %v3773 = vld [vmem:[#allocation26 + $0x6a8] sm:$0xf]
    %v3774 = vld [vmem:[#allocation26 + $0x6ac] sm:$0xff]
    %v3775 = vld [vmem:[#allocation26 + $0x6b4] sm:$0xff]
    %v3776 = vld [vmem:[#allocation26 + $0x6bc] sm:$0xff]
    %v3777 = vld [vmem:[#allocation26 + $0x6c4] sm:$0xf]
    %v3778 = vld [vmem:[#allocation26 + $0x6c8] sm:$0xff]
    %v3779 = vld [vmem:[#allocation26 + $0x6d0] sm:$0xff]
    %v3780 = vld [vmem:[#allocation26 + $0x6d8] sm:$0xff]
    %v3781 = vld [vmem:[#allocation26 + $0x6e0] sm:$0xf]
    %v3782 = vld [vmem:[#allocation26 + $0x6e4] sm:$0xff]
    %v3783 = vld [vmem:[#allocation26 + $0x6ec] sm:$0xff]
    %v3784 = vld [vmem:[#allocation26 + $0x6f4] sm:$0xff]
    %v3785 = vld [vmem:[#allocation26 + $0x6fc] sm:$0xf]
    %v3786 = vld [vmem:[#allocation26 + $0x700] sm:$0xff]
    %v3787 = vld [vmem:[#allocation26 + $0x708] sm:$0xff]
    %v3788 = vld [vmem:[#allocation26 + $0x710] sm:$0xff]
    %v3789 = vld [vmem:[#allocation26 + $0x718] sm:$0xf]
    %v3790 = vld [vmem:[#allocation26 + $0x71c] sm:$0xff]
    %v3791 = vld [vmem:[#allocation26 + $0x724] sm:$0xff]
    %v3792 = vld [vmem:[#allocation26 + $0x72c] sm:$0xff]
    %v3793 = vld [vmem:[#allocation26 + $0x734] sm:$0xf]
    %v3794 = vld [vmem:[#allocation26 + $0x738] sm:$0xff]
    %v3795 = vld [vmem:[#allocation26 + $0x740] sm:$0xff]
    %v3796 = vld [vmem:[#allocation26 + $0x748] sm:$0xff]
    %v3797 = vld [vmem:[#allocation26 + $0x750] sm:$0xf]
    %v3798 = vld [vmem:[#allocation26 + $0x754] sm:$0xff]
    %v3799 = vld [vmem:[#allocation26 + $0x75c] sm:$0xff]
    %v3800 = vld [vmem:[#allocation26 + $0x764] sm:$0xff]
    %v3801 = vld [vmem:[#allocation26 + $0x76c] sm:$0xf]
    %v3802 = vld [vmem:[#allocation26 + $0x770] sm:$0xff]
    %v3803 = vld [vmem:[#allocation26 + $0x778] sm:$0xff]
    %v3804 = vld [vmem:[#allocation26 + $0x780] sm:$0xff]
    %v3805 = vld [vmem:[#allocation26 + $0x788] sm:$0xf]
    %v3806 = vld [vmem:[#allocation26 + $0x78c] sm:$0xff]
    %v3807 = vld [vmem:[#allocation26 + $0x794] sm:$0xff]
    %v3808 = vld [vmem:[#allocation26 + $0x79c] sm:$0xff]
    %v3809 = vld [vmem:[#allocation26 + $0x7a4] sm:$0xf]
    %v3810 = vld [vmem:[#allocation26 + $0x7a8] sm:$0xff]
    %v3811 = vld [vmem:[#allocation26 + $0x7b0] sm:$0xff]
    %v3812 = vld [vmem:[#allocation26 + $0x7b8] sm:$0xff]
    %v3813 = vld [vmem:[#allocation26 + $0x7c0] sm:$0xf]
    %v3814 = vld [vmem:[#allocation26 + $0x7c4] sm:$0xff]
    %v3815 = vld [vmem:[#allocation26 + $0x7cc] sm:$0xff]
    %v3816 = vld [vmem:[#allocation26 + $0x7d4] sm:$0xff]
    %v3817 = vld [vmem:[#allocation26 + $0x7dc] sm:$0xf]
    %v3818 = vld [vmem:[#allocation26 + $0x7e0] sm:$0xff]
    %v3819 = vld [vmem:[#allocation26 + $0x7e8] sm:$0xff]
    %v3820 = vld [vmem:[#allocation26 + $0x7f0] sm:$0xff]
    %v3821 = vld [vmem:[#allocation26 + $0x7f8] sm:$0xf]
    %v3822 = vld [vmem:[#allocation26 + $0x7fc] sm:$0xff]
    %v3823 = vld [vmem:[#allocation26 + $0x804] sm:$0xff]
    %v3824 = vld [vmem:[#allocation26 + $0x80c] sm:$0xff]
    %v3825 = vld [vmem:[#allocation26 + $0x814] sm:$0xf]
    %v3826 = vld [vmem:[#allocation26 + $0x818] sm:$0xff]
    %v3827 = vld [vmem:[#allocation26 + $0x820] sm:$0xff]
    %v3828 = vld [vmem:[#allocation26 + $0x828] sm:$0xff]
    %v3829 = vld [vmem:[#allocation26 + $0x830] sm:$0xf]
    %v3830 = vld [vmem:[#allocation26 + $0x834] sm:$0xff]
    %v3831 = vld [vmem:[#allocation26 + $0x83c] sm:$0xff]
    %v3832 = vld [vmem:[#allocation26 + $0x844] sm:$0xff]
    %v3833 = vld [vmem:[#allocation26 + $0x84c] sm:$0xf]
    %v3834 = vld [vmem:[#allocation26 + $0x850] sm:$0xff]
    %v3835 = vld [vmem:[#allocation26 + $0x858] sm:$0xff]
    %v3836 = vld [vmem:[#allocation26 + $0x860] sm:$0xff]
    %v3837 = vld [vmem:[#allocation26 + $0x868] sm:$0xf]
    %v3838 = vld [vmem:[#allocation26 + $0x86c] sm:$0xff]
    %v3839 = vld [vmem:[#allocation26 + $0x874] sm:$0xff]
    %v3840 = vld [vmem:[#allocation26 + $0x87c] sm:$0xff]
    %v3841 = vld [vmem:[#allocation26 + $0x884] sm:$0xf]
    %v3842 = vld [vmem:[#allocation26 + $0x888] sm:$0xff]
    %v3843 = vld [vmem:[#allocation26 + $0x890] sm:$0xff]
    %v3844 = vld [vmem:[#allocation26 + $0x898] sm:$0xff]
    %v3845 = vld [vmem:[#allocation26 + $0x8a0] sm:$0xf]
    %v3846 = vld [vmem:[#allocation26 + $0x8a4] sm:$0xff]
    %v3847 = vld [vmem:[#allocation26 + $0x8ac] sm:$0xff]
    %v3848 = vld [vmem:[#allocation26 + $0x8b4] sm:$0xff]
    %v3849 = vld [vmem:[#allocation26 + $0x8bc] sm:$0xf]
    %v3850 = vld [vmem:[#allocation26 + $0x8c0] sm:$0xff]
    %v3851 = vld [vmem:[#allocation26 + $0x8c8] sm:$0xff]
    %v3852 = vld [vmem:[#allocation26 + $0x8d0] sm:$0xff]
    %v3853 = vld [vmem:[#allocation26 + $0x8d8] sm:$0xf]
    %v3854 = vld [vmem:[#allocation26 + $0x8dc] sm:$0xff]
    %v3855 = vld [vmem:[#allocation26 + $0x8e4] sm:$0xff]
    %v3856 = vld [vmem:[#allocation26 + $0x8ec] sm:$0xff]
    %v3857 = vld [vmem:[#allocation26 + $0x8f4] sm:$0xf]
    %v3858 = vld [vmem:[#allocation26 + $0x8f8] sm:$0xff]
    %v3859 = vld [vmem:[#allocation26 + $0x900] sm:$0xff]
    %v3860 = vld [vmem:[#allocation26 + $0x908] sm:$0xff]
    %v3861 = vld [vmem:[#allocation26 + $0x910] sm:$0xf]
    %v3862 = vld [vmem:[#allocation26 + $0x914] sm:$0xff]
    %v3863 = vld [vmem:[#allocation26 + $0x91c] sm:$0xff]
    %v3864 = vld [vmem:[#allocation26 + $0x924] sm:$0xff]
    %v3865 = vld [vmem:[#allocation26 + $0x92c] sm:$0xf]
    %v3866 = vld [vmem:[#allocation26 + $0x930] sm:$0xff]
    %v3867 = vld [vmem:[#allocation26 + $0x938] sm:$0xff]
    %v3868 = vld [vmem:[#allocation26 + $0x940] sm:$0xff]
    %v3869 = vld [vmem:[#allocation26 + $0x948] sm:$0xf]
    %v3870 = vld [vmem:[#allocation26 + $0x94c] sm:$0xff]
    %v3871 = vld [vmem:[#allocation26 + $0x954] sm:$0xff]
    %v3872 = vld [vmem:[#allocation26 + $0x95c] sm:$0xff]
    %v3873 = vld [vmem:[#allocation26 + $0x964] sm:$0xf]
    %v3874 = vld [vmem:[#allocation26 + $0x968] sm:$0xff]
    %v3875 = vld [vmem:[#allocation26 + $0x970] sm:$0xff]
    %v3876 = vld [vmem:[#allocation26 + $0x978] sm:$0xff]
    %v3877 = vld [vmem:[#allocation26 + $0x980] sm:$0xf]
    %v3878 = vld [vmem:[#allocation26 + $0x984] sm:$0xff]
    %v3879 = vld [vmem:[#allocation26 + $0x98c] sm:$0xff]
    %v3880 = vld [vmem:[#allocation26 + $0x994] sm:$0xff]
    %v3881 = vld [vmem:[#allocation26 + $0x99c] sm:$0xf]
    %v3882 = vld [vmem:[#allocation26 + $0x9a0] sm:$0xff]
    %v3883 = vld [vmem:[#allocation26 + $0x9a8] sm:$0xff]
    %v3884 = vld [vmem:[#allocation26 + $0x9b0] sm:$0xff]
    %v3885 = vld [vmem:[#allocation26 + $0x9b8] sm:$0xf]
    %v3886 = vld [vmem:[#allocation26 + $0x9bc] sm:$0xff]
    %v3887 = vld [vmem:[#allocation26 + $0x9c4] sm:$0xff]
    %v3888 = vld [vmem:[#allocation26 + $0x9cc] sm:$0xff]
    %v3889 = vld [vmem:[#allocation26 + $0x9d4] sm:$0xf]
    %v3890 = vld [vmem:[#allocation26 + $0x9d8] sm:$0xff]
    %v3891 = vld [vmem:[#allocation26 + $0x9e0] sm:$0xff]
    %v3892 = vld [vmem:[#allocation26 + $0x9e8] sm:$0xff]
    %v3893 = vld [vmem:[#allocation26 + $0x9f0] sm:$0xf]
    %v3894 = vld [vmem:[#allocation26 + $0x9f4] sm:$0xff]
    %v3895 = vld [vmem:[#allocation26 + $0x9fc] sm:$0xff]
    %v3896 = vld [vmem:[#allocation26 + $0xa04] sm:$0xff]
    %v3897 = vld [vmem:[#allocation26 + $0xa0c] sm:$0xf]
    %v3898 = vld [vmem:[#allocation26 + $0xa10] sm:$0xff]
    %v3899 = vld [vmem:[#allocation26 + $0xa18] sm:$0xff]
    %v3900 = vld [vmem:[#allocation26 + $0xa20] sm:$0xff]
    %v3901 = vld [vmem:[#allocation26 + $0xa28] sm:$0xf]
    %v3902 = vld [vmem:[#allocation26 + $0xa2c] sm:$0xff]
    %v3903 = vld [vmem:[#allocation26 + $0xa34] sm:$0xff]
    %v3904 = vld [vmem:[#allocation26 + $0xa3c] sm:$0xff]
    %v3905 = vld [vmem:[#allocation26 + $0xa44] sm:$0xf]
    %v3906 = vld [vmem:[#allocation26 + $0xa48] sm:$0xff]
    %v3907 = vld [vmem:[#allocation26 + $0xa50] sm:$0xff]
    %v3908 = vld [vmem:[#allocation26 + $0xa58] sm:$0xff]
    %v3909 = vld [vmem:[#allocation26 + $0xa60] sm:$0xf]
    %v3910 = vld [vmem:[#allocation26 + $0xa64] sm:$0xff]
    %v3911 = vld [vmem:[#allocation26 + $0xa6c] sm:$0xff]
    %v3912 = vld [vmem:[#allocation26 + $0xa74] sm:$0xff]
    %v3913 = vld [vmem:[#allocation26 + $0xa7c] sm:$0xf]
    %v3914 = vld [vmem:[#allocation26 + $0xa80] sm:$0xff]
    %v3915 = vld [vmem:[#allocation26 + $0xa88] sm:$0xff]
    %v3916 = vld [vmem:[#allocation26 + $0xa90] sm:$0xff]
    %v3917 = vld [vmem:[#allocation26 + $0xa98] sm:$0xf]
    %v3918 = vld [vmem:[#allocation26 + $0xa9c] sm:$0xff]
    %v3919 = vld [vmem:[#allocation26 + $0xaa4] sm:$0xff]
    %v3920 = vld [vmem:[#allocation26 + $0xaac] sm:$0xff]
    %v3921 = vld [vmem:[#allocation26 + $0xab4] sm:$0xf]
    %v3922 = vld [vmem:[#allocation26 + $0xab8] sm:$0xff]
    %v3923 = vld [vmem:[#allocation26 + $0xac0] sm:$0xff]
    %v3924 = vld [vmem:[#allocation26 + $0xac8] sm:$0xff]
    %v3925 = vld [vmem:[#allocation26 + $0xad0] sm:$0xf]
    %v3926 = vld [vmem:[#allocation26 + $0xad4] sm:$0xff]
    %v3927 = vld [vmem:[#allocation26 + $0xadc] sm:$0xff]
    %v3928 = vld [vmem:[#allocation26 + $0xae4] sm:$0xff]
    %v3929 = vld [vmem:[#allocation26 + $0xaec] sm:$0xf]
    %v3930 = vld [vmem:[#allocation26 + $0xaf0] sm:$0xff]
    %v3931 = vld [vmem:[#allocation26 + $0xaf8] sm:$0xff]
    %v3932 = vld [vmem:[#allocation26 + $0xb00] sm:$0xff]
    %v3933 = vld [vmem:[#allocation26 + $0xb08] sm:$0xf]
    %v3934 = vld [vmem:[#allocation26 + $0xb0c] sm:$0xff]
    %v3935 = vld [vmem:[#allocation26 + $0xb14] sm:$0xff]
    %v3936 = vld [vmem:[#allocation26 + $0xb1c] sm:$0xff]
    %v3937 = vld [vmem:[#allocation26 + $0xb24] sm:$0xf]
    %v3938 = vld [vmem:[#allocation26 + $0xb28] sm:$0xff]
    %v3939 = vld [vmem:[#allocation26 + $0xb30] sm:$0xff]
    %v3940 = vld [vmem:[#allocation26 + $0xb38] sm:$0xff]
    %v3941 = vld [vmem:[#allocation26 + $0xb40] sm:$0xf]
    %v3942 = vld [vmem:[#allocation26 + $0xb44] sm:$0xff]
    %v3943 = vld [vmem:[#allocation26 + $0xb4c] sm:$0xff]
    %v3944 = vld [vmem:[#allocation26 + $0xb54] sm:$0xff]
    %v3945 = vld [vmem:[#allocation26 + $0xb5c] sm:$0xf]
    %v3946 = vld [vmem:[#allocation26 + $0xb60] sm:$0xff]
    %v3947 = vld [vmem:[#allocation26 + $0xb68] sm:$0xff]
    %v3948 = vld [vmem:[#allocation26 + $0xb70] sm:$0xff]
    %v3949 = vld [vmem:[#allocation26 + $0xb78] sm:$0xf]
    %v3950 = vld [vmem:[#allocation26 + $0xb7c] sm:$0xff]
    %v3951 = vld [vmem:[#allocation26 + $0xb84] sm:$0xff]
    %v3952 = vld [vmem:[#allocation26 + $0xb8c] sm:$0xff]
    %v3953 = vld [vmem:[#allocation26 + $0xb94] sm:$0xf]
    %v3954 = vld [vmem:[#allocation26 + $0xb98] sm:$0xff]
    %v3955 = vld [vmem:[#allocation26 + $0xba0] sm:$0xff]
    %v3956 = vld [vmem:[#allocation26 + $0xba8] sm:$0xff]
    %v3957 = vld [vmem:[#allocation26 + $0xbb0] sm:$0xf]
    %v3958 = vld [vmem:[#allocation26 + $0xbb4] sm:$0xff]
    %v3959 = vld [vmem:[#allocation26 + $0xbbc] sm:$0xff]
    %v3960 = vld [vmem:[#allocation26 + $0xbc4] sm:$0xff]
    %v3961 = vld [vmem:[#allocation26 + $0xbcc] sm:$0xf]
    %v3962 = vld [vmem:[#allocation26 + $0xbd0] sm:$0xff]
    %v3963 = vld [vmem:[#allocation26 + $0xbd8] sm:$0xff]
    %v3964 = vld [vmem:[#allocation26 + $0xbe0] sm:$0xff]
    %v3965 = vld [vmem:[#allocation26 + $0xbe8] sm:$0xf]
    %v3966 = vld [vmem:[#allocation26 + $0xbec] sm:$0xff]
    %v3967 = vld [vmem:[#allocation26 + $0xbf4] sm:$0xff]
    %v3968 = vld [vmem:[#allocation26 + $0xbfc] sm:$0xff]
    %v3969 = vld [vmem:[#allocation26 + $0xc04] sm:$0xf]
    %v3970 = vld [vmem:[#allocation26 + $0xc08] sm:$0xff]
    %v3971 = vld [vmem:[#allocation26 + $0xc10] sm:$0xff]
    %v3972 = vld [vmem:[#allocation26 + $0xc18] sm:$0xff]
    %v3973 = vld [vmem:[#allocation26 + $0xc20] sm:$0xf]
    %v3974 = vld [vmem:[#allocation26 + $0xc24] sm:$0xff]
    %v3975 = vld [vmem:[#allocation26 + $0xc2c] sm:$0xff]
    %v3976 = vld [vmem:[#allocation26 + $0xc34] sm:$0xff]
    %v3977 = vld [vmem:[#allocation26 + $0xc3c] sm:$0xf]
    %v3978 = vld [vmem:[#allocation26 + $0xc40] sm:$0xff]
    %v3979 = vld [vmem:[#allocation26 + $0xc48] sm:$0xff]
    %v3980 = vld [vmem:[#allocation26 + $0xc50] sm:$0xff]
    %v3981 = vld [vmem:[#allocation26 + $0xc58] sm:$0xf]
    %v3982 = vld [vmem:[#allocation26 + $0xc5c] sm:$0xff]
    %v3983 = vld [vmem:[#allocation26 + $0xc64] sm:$0xff]
    %v3984 = vld [vmem:[#allocation26 + $0xc6c] sm:$0xff]
    %v3985 = vld [vmem:[#allocation26 + $0xc74] sm:$0xf]
    %v3986 = vld [vmem:[#allocation26 + $0xc78] sm:$0xff]
    %v3987 = vld [vmem:[#allocation26 + $0xc80] sm:$0xff]
    %v3988 = vld [vmem:[#allocation26 + $0xc88] sm:$0xff]
    %v3989 = vld [vmem:[#allocation26 + $0xc90] sm:$0xf]
    %v3990 = vld [vmem:[#allocation26 + $0xc94] sm:$0xff]
    %v3991 = vld [vmem:[#allocation26 + $0xc9c] sm:$0xff]
    %v3992 = vld [vmem:[#allocation26 + $0xca4] sm:$0xff]
    %v3993 = vld [vmem:[#allocation26 + $0xcac] sm:$0xf]
    %v3994 = vld [vmem:[#allocation26 + $0xcb0] sm:$0xff]
    %v3995 = vld [vmem:[#allocation26 + $0xcb8] sm:$0xff]
    %v3996 = vld [vmem:[#allocation26 + $0xcc0] sm:$0xff]
    %v3997 = vld [vmem:[#allocation26 + $0xcc8] sm:$0xf]
    %v3998 = vld [vmem:[#allocation26 + $0xccc] sm:$0xff]
    %v3999 = vld [vmem:[#allocation26 + $0xcd4] sm:$0xff]
    %v4000 = vld [vmem:[#allocation26 + $0xcdc] sm:$0xff]
    %v4001 = vld [vmem:[#allocation26 + $0xce4] sm:$0xf]
    %v4002 = vld [vmem:[#allocation26 + $0xce8] sm:$0xff]
    %v4003 = vld [vmem:[#allocation26 + $0xcf0] sm:$0xff]
    %v4004 = vld [vmem:[#allocation26 + $0xcf8] sm:$0xff]
    %v4005 = vld [vmem:[#allocation26 + $0xd00] sm:$0xf]
    %v4006 = vld [vmem:[#allocation26 + $0xd04] sm:$0xff]
    %v4007 = vld [vmem:[#allocation26 + $0xd0c] sm:$0xff]
    %v4008 = vld [vmem:[#allocation26 + $0xd14] sm:$0xff]
    %v4009 = vld [vmem:[#allocation26 + $0xd1c] sm:$0xf]
    %v4010 = vld [vmem:[#allocation26 + $0xd20] sm:$0xff]
    %v4011 = vld [vmem:[#allocation26 + $0xd28] sm:$0xff]
    %v4012 = vld [vmem:[#allocation26 + $0xd30] sm:$0xff]
    %v4013 = vld [vmem:[#allocation26 + $0xd38] sm:$0xf]
    %v4014 = vld [vmem:[#allocation26 + $0xd3c] sm:$0xff]
    %v4015 = vld [vmem:[#allocation26 + $0xd44] sm:$0xff]
    %v4016 = vld [vmem:[#allocation26 + $0xd4c] sm:$0xff]
    %v4017 = vld [vmem:[#allocation26 + $0xd54] sm:$0xf]
    %v4018 = vld [vmem:[#allocation26 + $0xd58] sm:$0xff]
    %v4019 = vld [vmem:[#allocation26 + $0xd60] sm:$0xff]
    %v4020 = vld [vmem:[#allocation26 + $0xd68] sm:$0xff]
    %v4021 = vld [vmem:[#allocation26 + $0xd70] sm:$0xf]
    %v4022 = vld [vmem:[#allocation26 + $0xd74] sm:$0xff]
    %v4023 = vld [vmem:[#allocation26 + $0xd7c] sm:$0xff]
    %v4024 = vld [vmem:[#allocation26 + $0xd84] sm:$0xff]
    %v4025 = vld [vmem:[#allocation26 + $0xd8c] sm:$0xf]
    %v4026 = vld [vmem:[#allocation26 + $0xd90] sm:$0xff]
    %v4027 = vld [vmem:[#allocation26 + $0xd98] sm:$0xff]
    %v4028 = vld [vmem:[#allocation26 + $0xda0] sm:$0xff]
    %v4029 = vld [vmem:[#allocation26 + $0xda8] sm:$0xf]
    %v4030 = vld [vmem:[#allocation26 + $0xdac] sm:$0xff]
    %v4031 = vld [vmem:[#allocation26 + $0xdb4] sm:$0xff]
    %v4032 = vld [vmem:[#allocation26 + $0xdbc] sm:$0xff]
    %v4033 = vld [vmem:[#allocation26 + $0xdc4] sm:$0xf]
    %v4034 = vld [vmem:[#allocation26 + $0xdc8] sm:$0xff]
    %v4035 = vld [vmem:[#allocation26 + $0xdd0] sm:$0xff]
    %v4036 = vld [vmem:[#allocation26 + $0xdd8] sm:$0xff]
    %v4037 = vld [vmem:[#allocation26 + $0xde0] sm:$0xf]
    %v4038 = vld [vmem:[#allocation26 + $0xde4] sm:$0xff]
    %v4039 = vld [vmem:[#allocation26 + $0xdec] sm:$0xff]
    %v4040 = vld [vmem:[#allocation26 + $0xdf4] sm:$0xff]
    %v4041 = vld [vmem:[#allocation26 + $0xdfc] sm:$0xf]
    %v4042 = vld [vmem:[#allocation28] sm:$0xff]
    %v4044 = vperm.slane %v4042, 0
    %v4045 = vperm.slane %v4042, 1
    %v4046 = vperm.slane %v4042, 2
    %v4047 = vperm.slane %v4042, 3
    %v4048 = vperm.slane %v4042, 4
    %v4049 = vperm.slane %v4042, 5
    %v4050 = vperm.slane %v4042, 6
    %v4570 = vunpack.c.l.b16 %v3530
    %v4571 = vunpack.c.h.b16 %v3530
    %v4572 = vunpack.c.l.b16 %v3531
    %v4573 = vunpack.c.h.b16 %v3531
    %v4574 = vunpack.c.l.b16 %v3532
    %v4575 = vunpack.c.h.b16 %v3532
    %v4576 = vunpack.c.l.b16 %v3533
    %v4577 = vunpack.c.l.b16 %v3534
    %v4578 = vunpack.c.h.b16 %v3534
    %v4579 = vunpack.c.l.b16 %v3535
    %v4580 = vunpack.c.h.b16 %v3535
    %v4581 = vunpack.c.l.b16 %v3536
    %v4582 = vunpack.c.h.b16 %v3536
    %v4583 = vunpack.c.l.b16 %v3537
    %v4584 = vunpack.c.l.b16 %v3538
    %v4585 = vunpack.c.h.b16 %v3538
    %v4586 = vunpack.c.l.b16 %v3539
    %v4587 = vunpack.c.h.b16 %v3539
    %v4588 = vunpack.c.l.b16 %v3540
    %v4589 = vunpack.c.h.b16 %v3540
    %v4590 = vunpack.c.l.b16 %v3541
    %v4591 = vunpack.c.l.b16 %v3542
    %v4592 = vunpack.c.h.b16 %v3542
    %v4593 = vunpack.c.l.b16 %v3543
    %v4594 = vunpack.c.h.b16 %v3543
    %v4595 = vunpack.c.l.b16 %v3544
    %v4596 = vunpack.c.h.b16 %v3544
    %v4597 = vunpack.c.l.b16 %v3545
    %v4598 = vunpack.c.l.b16 %v3546
    %v4599 = vunpack.c.h.b16 %v3546
    %v4600 = vunpack.c.l.b16 %v3547
    %v4601 = vunpack.c.h.b16 %v3547
    %v4602 = vunpack.c.l.b16 %v3548
    %v4603 = vunpack.c.h.b16 %v3548
    %v4604 = vunpack.c.l.b16 %v3549
    %v4605 = vunpack.c.l.b16 %v3550
    %v4606 = vunpack.c.h.b16 %v3550
    %v4607 = vunpack.c.l.b16 %v3551
    %v4608 = vunpack.c.h.b16 %v3551
    %v4609 = vunpack.c.l.b16 %v3552
    %v4610 = vunpack.c.h.b16 %v3552
    %v4611 = vunpack.c.l.b16 %v3553
    %v4612 = vunpack.c.l.b16 %v3554
    %v4613 = vunpack.c.h.b16 %v3554
    %v4614 = vunpack.c.l.b16 %v3555
    %v4615 = vunpack.c.h.b16 %v3555
    %v4616 = vunpack.c.l.b16 %v3556
    %v4617 = vunpack.c.h.b16 %v3556
    %v4618 = vunpack.c.l.b16 %v3557
    %v4619 = vunpack.c.l.b16 %v3558
    %v4620 = vunpack.c.h.b16 %v3558
    %v4621 = vunpack.c.l.b16 %v3559
    %v4622 = vunpack.c.h.b16 %v3559
    %v4623 = vunpack.c.l.b16 %v3560
    %v4624 = vunpack.c.h.b16 %v3560
    %v4625 = vunpack.c.l.b16 %v3561
    %v4626 = vunpack.c.l.b16 %v3562
    %v4627 = vunpack.c.h.b16 %v3562
    %v4628 = vunpack.c.l.b16 %v3563
    %v4629 = vunpack.c.h.b16 %v3563
    %v4630 = vunpack.c.l.b16 %v3564
    %v4631 = vunpack.c.h.b16 %v3564
    %v4632 = vunpack.c.l.b16 %v3565
    %v4633 = vunpack.c.l.b16 %v3566
    %v4634 = vunpack.c.h.b16 %v3566
    %v4635 = vunpack.c.l.b16 %v3567
    %v4636 = vunpack.c.h.b16 %v3567
    %v4637 = vunpack.c.l.b16 %v3568
    %v4638 = vunpack.c.h.b16 %v3568
    %v4639 = vunpack.c.l.b16 %v3569
    %v4640 = vunpack.c.l.b16 %v3570
    %v4641 = vunpack.c.h.b16 %v3570
    %v4642 = vunpack.c.l.b16 %v3571
    %v4643 = vunpack.c.h.b16 %v3571
    %v4644 = vunpack.c.l.b16 %v3572
    %v4645 = vunpack.c.h.b16 %v3572
    %v4646 = vunpack.c.l.b16 %v3573
    %v4647 = vunpack.c.l.b16 %v3574
    %v4648 = vunpack.c.h.b16 %v3574
    %v4649 = vunpack.c.l.b16 %v3575
    %v4650 = vunpack.c.h.b16 %v3575
    %v4651 = vunpack.c.l.b16 %v3576
    %v4652 = vunpack.c.h.b16 %v3576
    %v4653 = vunpack.c.l.b16 %v3577
    %v4654 = vunpack.c.l.b16 %v3578
    %v4655 = vunpack.c.h.b16 %v3578
    %v4656 = vunpack.c.l.b16 %v3579
    %v4657 = vunpack.c.h.b16 %v3579
    %v4658 = vunpack.c.l.b16 %v3580
    %v4659 = vunpack.c.h.b16 %v3580
    %v4660 = vunpack.c.l.b16 %v3581
    %v4661 = vunpack.c.l.b16 %v3582
    %v4662 = vunpack.c.h.b16 %v3582
    %v4663 = vunpack.c.l.b16 %v3583
    %v4664 = vunpack.c.h.b16 %v3583
    %v4665 = vunpack.c.l.b16 %v3584
    %v4666 = vunpack.c.h.b16 %v3584
    %v4667 = vunpack.c.l.b16 %v3585
    %v4668 = vunpack.c.l.b16 %v3586
    %v4669 = vunpack.c.h.b16 %v3586
    %v4670 = vunpack.c.l.b16 %v3587
    %v4671 = vunpack.c.h.b16 %v3587
    %v4672 = vunpack.c.l.b16 %v3588
    %v4673 = vunpack.c.h.b16 %v3588
    %v4674 = vunpack.c.l.b16 %v3589
    %v4675 = vunpack.c.l.b16 %v3590
    %v4676 = vunpack.c.h.b16 %v3590
    %v4677 = vunpack.c.l.b16 %v3591
    %v4678 = vunpack.c.h.b16 %v3591
    %v4679 = vunpack.c.l.b16 %v3592
    %v4680 = vunpack.c.h.b16 %v3592
    %v4681 = vunpack.c.l.b16 %v3593
    %v4682 = vunpack.c.l.b16 %v3594
    %v4683 = vunpack.c.h.b16 %v3594
    %v4684 = vunpack.c.l.b16 %v3595
    %v4685 = vunpack.c.h.b16 %v3595
    %v4686 = vunpack.c.l.b16 %v3596
    %v4687 = vunpack.c.h.b16 %v3596
    %v4688 = vunpack.c.l.b16 %v3597
    %v4689 = vunpack.c.l.b16 %v3598
    %v4690 = vunpack.c.h.b16 %v3598
    %v4691 = vunpack.c.l.b16 %v3599
    %v4692 = vunpack.c.h.b16 %v3599
    %v4693 = vunpack.c.l.b16 %v3600
    %v4694 = vunpack.c.h.b16 %v3600
    %v4695 = vunpack.c.l.b16 %v3601
    %v4696 = vunpack.c.l.b16 %v3602
    %v4697 = vunpack.c.h.b16 %v3602
    %v4698 = vunpack.c.l.b16 %v3603
    %v4699 = vunpack.c.h.b16 %v3603
    %v4700 = vunpack.c.l.b16 %v3604
    %v4701 = vunpack.c.h.b16 %v3604
    %v4702 = vunpack.c.l.b16 %v3605
    %v4703 = vunpack.c.l.b16 %v3606
    %v4704 = vunpack.c.h.b16 %v3606
    %v4705 = vunpack.c.l.b16 %v3607
    %v4706 = vunpack.c.h.b16 %v3607
    %v4707 = vunpack.c.l.b16 %v3608
    %v4708 = vunpack.c.h.b16 %v3608
    %v4709 = vunpack.c.l.b16 %v3609
    %v4710 = vunpack.c.l.b16 %v3610
    %v4711 = vunpack.c.h.b16 %v3610
    %v4712 = vunpack.c.l.b16 %v3611
    %v4713 = vunpack.c.h.b16 %v3611
    %v4714 = vunpack.c.l.b16 %v3612
    %v4715 = vunpack.c.h.b16 %v3612
    %v4716 = vunpack.c.l.b16 %v3613
    %v4717 = vunpack.c.l.b16 %v3614
    %v4718 = vunpack.c.h.b16 %v3614
    %v4719 = vunpack.c.l.b16 %v3615
    %v4720 = vunpack.c.h.b16 %v3615
    %v4721 = vunpack.c.l.b16 %v3616
    %v4722 = vunpack.c.h.b16 %v3616
    %v4723 = vunpack.c.l.b16 %v3617
    %v4724 = vunpack.c.l.b16 %v3618
    %v4725 = vunpack.c.h.b16 %v3618
    %v4726 = vunpack.c.l.b16 %v3619
    %v4727 = vunpack.c.h.b16 %v3619
    %v4728 = vunpack.c.l.b16 %v3620
    %v4729 = vunpack.c.h.b16 %v3620
    %v4730 = vunpack.c.l.b16 %v3621
    %v4731 = vunpack.c.l.b16 %v3622
    %v4732 = vunpack.c.h.b16 %v3622
    %v4733 = vunpack.c.l.b16 %v3623
    %v4734 = vunpack.c.h.b16 %v3623
    %v4735 = vunpack.c.l.b16 %v3624
    %v4736 = vunpack.c.h.b16 %v3624
    %v4737 = vunpack.c.l.b16 %v3625
    %v4738 = vunpack.c.l.b16 %v3626
    %v4739 = vunpack.c.h.b16 %v3626
    %v4740 = vunpack.c.l.b16 %v3627
    %v4741 = vunpack.c.h.b16 %v3627
    %v4742 = vunpack.c.l.b16 %v3628
    %v4743 = vunpack.c.h.b16 %v3628
    %v4744 = vunpack.c.l.b16 %v3629
    %v4745 = vunpack.c.l.b16 %v3630
    %v4746 = vunpack.c.h.b16 %v3630
    %v4747 = vunpack.c.l.b16 %v3631
    %v4748 = vunpack.c.h.b16 %v3631
    %v4749 = vunpack.c.l.b16 %v3632
    %v4750 = vunpack.c.h.b16 %v3632
    %v4751 = vunpack.c.l.b16 %v3633
    %v4752 = vunpack.c.l.b16 %v3634
    %v4753 = vunpack.c.h.b16 %v3634
    %v4754 = vunpack.c.l.b16 %v3635
    %v4755 = vunpack.c.h.b16 %v3635
    %v4756 = vunpack.c.l.b16 %v3636
    %v4757 = vunpack.c.h.b16 %v3636
    %v4758 = vunpack.c.l.b16 %v3637
    %v4759 = vunpack.c.l.b16 %v3638
    %v4760 = vunpack.c.h.b16 %v3638
    %v4761 = vunpack.c.l.b16 %v3639
    %v4762 = vunpack.c.h.b16 %v3639
    %v4763 = vunpack.c.l.b16 %v3640
    %v4764 = vunpack.c.h.b16 %v3640
    %v4765 = vunpack.c.l.b16 %v3641
    %v4766 = vunpack.c.l.b16 %v3642
    %v4767 = vunpack.c.h.b16 %v3642
    %v4768 = vunpack.c.l.b16 %v3643
    %v4769 = vunpack.c.h.b16 %v3643
    %v4770 = vunpack.c.l.b16 %v3644
    %v4771 = vunpack.c.h.b16 %v3644
    %v4772 = vunpack.c.l.b16 %v3645
    %v4773 = vunpack.c.l.b16 %v3646
    %v4774 = vunpack.c.h.b16 %v3646
    %v4775 = vunpack.c.l.b16 %v3647
    %v4776 = vunpack.c.h.b16 %v3647
    %v4777 = vunpack.c.l.b16 %v3648
    %v4778 = vunpack.c.h.b16 %v3648
    %v4779 = vunpack.c.l.b16 %v3649
    %v4780 = vunpack.c.l.b16 %v3650
    %v4781 = vunpack.c.h.b16 %v3650
    %v4782 = vunpack.c.l.b16 %v3651
    %v4783 = vunpack.c.h.b16 %v3651
    %v4784 = vunpack.c.l.b16 %v3652
    %v4785 = vunpack.c.h.b16 %v3652
    %v4786 = vunpack.c.l.b16 %v3653
    %v4787 = vunpack.c.l.b16 %v3654
    %v4788 = vunpack.c.h.b16 %v3654
    %v4789 = vunpack.c.l.b16 %v3655
    %v4790 = vunpack.c.h.b16 %v3655
    %v4791 = vunpack.c.l.b16 %v3656
    %v4792 = vunpack.c.h.b16 %v3656
    %v4793 = vunpack.c.l.b16 %v3657
    %v4794 = vunpack.c.l.b16 %v3658
    %v4795 = vunpack.c.h.b16 %v3658
    %v4796 = vunpack.c.l.b16 %v3659
    %v4797 = vunpack.c.h.b16 %v3659
    %v4798 = vunpack.c.l.b16 %v3660
    %v4799 = vunpack.c.h.b16 %v3660
    %v4800 = vunpack.c.l.b16 %v3661
    %v4801 = vunpack.c.l.b16 %v3662
    %v4802 = vunpack.c.h.b16 %v3662
    %v4803 = vunpack.c.l.b16 %v3663
    %v4804 = vunpack.c.h.b16 %v3663
    %v4805 = vunpack.c.l.b16 %v3664
    %v4806 = vunpack.c.h.b16 %v3664
    %v4807 = vunpack.c.l.b16 %v3665
    %v4808 = vunpack.c.l.b16 %v3666
    %v4809 = vunpack.c.h.b16 %v3666
    %v4810 = vunpack.c.l.b16 %v3667
    %v4811 = vunpack.c.h.b16 %v3667
    %v4812 = vunpack.c.l.b16 %v3668
    %v4813 = vunpack.c.h.b16 %v3668
    %v4814 = vunpack.c.l.b16 %v3669
    %v4815 = vunpack.c.l.b16 %v3670
    %v4816 = vunpack.c.h.b16 %v3670
    %v4817 = vunpack.c.l.b16 %v3671
    %v4818 = vunpack.c.h.b16 %v3671
    %v4819 = vunpack.c.l.b16 %v3672
    %v4820 = vunpack.c.h.b16 %v3672
    %v4821 = vunpack.c.l.b16 %v3673
    %v4822 = vunpack.c.l.b16 %v3674
    %v4823 = vunpack.c.h.b16 %v3674
    %v4824 = vunpack.c.l.b16 %v3675
    %v4825 = vunpack.c.h.b16 %v3675
    %v4826 = vunpack.c.l.b16 %v3676
    %v4827 = vunpack.c.h.b16 %v3676
    %v4828 = vunpack.c.l.b16 %v3677
    %v4829 = vunpack.c.l.b16 %v3678
    %v4830 = vunpack.c.h.b16 %v3678
    %v4831 = vunpack.c.l.b16 %v3679
    %v4832 = vunpack.c.h.b16 %v3679
    %v4833 = vunpack.c.l.b16 %v3680
    %v4834 = vunpack.c.h.b16 %v3680
    %v4835 = vunpack.c.l.b16 %v3681
    %v4836 = vunpack.c.l.b16 %v3682
    %v4837 = vunpack.c.h.b16 %v3682
    %v4838 = vunpack.c.l.b16 %v3683
    %v4839 = vunpack.c.h.b16 %v3683
    %v4840 = vunpack.c.l.b16 %v3684
    %v4841 = vunpack.c.h.b16 %v3684
    %v4842 = vunpack.c.l.b16 %v3685
    %v4843 = vunpack.c.l.b16 %v3686
    %v4844 = vunpack.c.h.b16 %v3686
    %v4845 = vunpack.c.l.b16 %v3687
    %v4846 = vunpack.c.h.b16 %v3687
    %v4847 = vunpack.c.l.b16 %v3688
    %v4848 = vunpack.c.h.b16 %v3688
    %v4849 = vunpack.c.l.b16 %v3689
    %v4850 = vunpack.c.l.b16 %v3690
    %v4851 = vunpack.c.h.b16 %v3690
    %v4852 = vunpack.c.l.b16 %v3691
    %v4853 = vunpack.c.h.b16 %v3691
    %v4854 = vunpack.c.l.b16 %v3692
    %v4855 = vunpack.c.h.b16 %v3692
    %v4856 = vunpack.c.l.b16 %v3693
    %v4857 = vunpack.c.l.b16 %v3694
    %v4858 = vunpack.c.h.b16 %v3694
    %v4859 = vunpack.c.l.b16 %v3695
    %v4860 = vunpack.c.h.b16 %v3695
    %v4861 = vunpack.c.l.b16 %v3696
    %v4862 = vunpack.c.h.b16 %v3696
    %v4863 = vunpack.c.l.b16 %v3697
    %v4864 = vunpack.c.l.b16 %v3698
    %v4865 = vunpack.c.h.b16 %v3698
    %v4866 = vunpack.c.l.b16 %v3699
    %v4867 = vunpack.c.h.b16 %v3699
    %v4868 = vunpack.c.l.b16 %v3700
    %v4869 = vunpack.c.h.b16 %v3700
    %v4870 = vunpack.c.l.b16 %v3701
    %v4871 = vunpack.c.l.b16 %v3702
    %v4872 = vunpack.c.h.b16 %v3702
    %v4873 = vunpack.c.l.b16 %v3703
    %v4874 = vunpack.c.h.b16 %v3703
    %v4875 = vunpack.c.l.b16 %v3704
    %v4876 = vunpack.c.h.b16 %v3704
    %v4877 = vunpack.c.l.b16 %v3705
    %v4878 = vunpack.c.l.b16 %v3706
    %v4879 = vunpack.c.h.b16 %v3706
    %v4880 = vunpack.c.l.b16 %v3707
    %v4881 = vunpack.c.h.b16 %v3707
    %v4882 = vunpack.c.l.b16 %v3708
    %v4883 = vunpack.c.h.b16 %v3708
    %v4884 = vunpack.c.l.b16 %v3709
    %v4885 = vunpack.c.l.b16 %v3710
    %v4886 = vunpack.c.h.b16 %v3710
    %v4887 = vunpack.c.l.b16 %v3711
    %v4888 = vunpack.c.h.b16 %v3711
    %v4889 = vunpack.c.l.b16 %v3712
    %v4890 = vunpack.c.h.b16 %v3712
    %v4891 = vunpack.c.l.b16 %v3713
    %v4892 = vunpack.c.l.b16 %v3714
    %v4893 = vunpack.c.h.b16 %v3714
    %v4894 = vunpack.c.l.b16 %v3715
    %v4895 = vunpack.c.h.b16 %v3715
    %v4896 = vunpack.c.l.b16 %v3716
    %v4897 = vunpack.c.h.b16 %v3716
    %v4898 = vunpack.c.l.b16 %v3717
    %v4899 = vunpack.c.l.b16 %v3718
    %v4900 = vunpack.c.h.b16 %v3718
    %v4901 = vunpack.c.l.b16 %v3719
    %v4902 = vunpack.c.h.b16 %v3719
    %v4903 = vunpack.c.l.b16 %v3720
    %v4904 = vunpack.c.h.b16 %v3720
    %v4905 = vunpack.c.l.b16 %v3721
    %v4906 = vunpack.c.l.b16 %v3722
    %v4907 = vunpack.c.h.b16 %v3722
    %v4908 = vunpack.c.l.b16 %v3723
    %v4909 = vunpack.c.h.b16 %v3723
    %v4910 = vunpack.c.l.b16 %v3724
    %v4911 = vunpack.c.h.b16 %v3724
    %v4912 = vunpack.c.l.b16 %v3725
    %v4913 = vunpack.c.l.b16 %v3726
    %v4914 = vunpack.c.h.b16 %v3726
    %v4915 = vunpack.c.l.b16 %v3727
    %v4916 = vunpack.c.h.b16 %v3727
    %v4917 = vunpack.c.l.b16 %v3728
    %v4918 = vunpack.c.h.b16 %v3728
    %v4919 = vunpack.c.l.b16 %v3729
    %v4920 = vunpack.c.l.b16 %v3730
    %v4921 = vunpack.c.h.b16 %v3730
    %v4922 = vunpack.c.l.b16 %v3731
    %v4923 = vunpack.c.h.b16 %v3731
    %v4924 = vunpack.c.l.b16 %v3732
    %v4925 = vunpack.c.h.b16 %v3732
    %v4926 = vunpack.c.l.b16 %v3733
    %v4927 = vunpack.c.l.b16 %v3734
    %v4928 = vunpack.c.h.b16 %v3734
    %v4929 = vunpack.c.l.b16 %v3735
    %v4930 = vunpack.c.h.b16 %v3735
    %v4931 = vunpack.c.l.b16 %v3736
    %v4932 = vunpack.c.h.b16 %v3736
    %v4933 = vunpack.c.l.b16 %v3737
    %v4934 = vunpack.c.l.b16 %v3738
    %v4935 = vunpack.c.h.b16 %v3738
    %v4936 = vunpack.c.l.b16 %v3739
    %v4937 = vunpack.c.h.b16 %v3739
    %v4938 = vunpack.c.l.b16 %v3740
    %v4939 = vunpack.c.h.b16 %v3740
    %v4940 = vunpack.c.l.b16 %v3741
    %v4941 = vunpack.c.l.b16 %v3742
    %v4942 = vunpack.c.h.b16 %v3742
    %v4943 = vunpack.c.l.b16 %v3743
    %v4944 = vunpack.c.h.b16 %v3743
    %v4945 = vunpack.c.l.b16 %v3744
    %v4946 = vunpack.c.h.b16 %v3744
    %v4947 = vunpack.c.l.b16 %v3745
    %v4948 = vunpack.c.l.b16 %v3746
    %v4949 = vunpack.c.h.b16 %v3746
    %v4950 = vunpack.c.l.b16 %v3747
    %v4951 = vunpack.c.h.b16 %v3747
    %v4952 = vunpack.c.l.b16 %v3748
    %v4953 = vunpack.c.h.b16 %v3748
    %v4954 = vunpack.c.l.b16 %v3749
    %v4955 = vunpack.c.l.b16 %v3750
    %v4956 = vunpack.c.h.b16 %v3750
    %v4957 = vunpack.c.l.b16 %v3751
    %v4958 = vunpack.c.h.b16 %v3751
    %v4959 = vunpack.c.l.b16 %v3752
    %v4960 = vunpack.c.h.b16 %v3752
    %v4961 = vunpack.c.l.b16 %v3753
    %v4962 = vunpack.c.l.b16 %v3754
    %v4963 = vunpack.c.h.b16 %v3754
    %v4964 = vunpack.c.l.b16 %v3755
    %v4965 = vunpack.c.h.b16 %v3755
    %v4966 = vunpack.c.l.b16 %v3756
    %v4967 = vunpack.c.h.b16 %v3756
    %v4968 = vunpack.c.l.b16 %v3757
    %v4969 = vunpack.c.l.b16 %v3758
    %v4970 = vunpack.c.h.b16 %v3758
    %v4971 = vunpack.c.l.b16 %v3759
    %v4972 = vunpack.c.h.b16 %v3759
    %v4973 = vunpack.c.l.b16 %v3760
    %v4974 = vunpack.c.h.b16 %v3760
    %v4975 = vunpack.c.l.b16 %v3761
    %v4976 = vunpack.c.l.b16 %v3762
    %v4977 = vunpack.c.h.b16 %v3762
    %v4978 = vunpack.c.l.b16 %v3763
    %v4979 = vunpack.c.h.b16 %v3763
    %v4980 = vunpack.c.l.b16 %v3764
    %v4981 = vunpack.c.h.b16 %v3764
    %v4982 = vunpack.c.l.b16 %v3765
    %v4983 = vunpack.c.l.b16 %v3766
    %v4984 = vunpack.c.h.b16 %v3766
    %v4985 = vunpack.c.l.b16 %v3767
    %v4986 = vunpack.c.h.b16 %v3767
    %v4987 = vunpack.c.l.b16 %v3768
    %v4988 = vunpack.c.h.b16 %v3768
    %v4989 = vunpack.c.l.b16 %v3769
    %v4990 = vunpack.c.l.b16 %v3770
    %v4991 = vunpack.c.h.b16 %v3770
    %v4992 = vunpack.c.l.b16 %v3771
    %v4993 = vunpack.c.h.b16 %v3771
    %v4994 = vunpack.c.l.b16 %v3772
    %v4995 = vunpack.c.h.b16 %v3772
    %v4996 = vunpack.c.l.b16 %v3773
    %v4997 = vunpack.c.l.b16 %v3774
    %v4998 = vunpack.c.h.b16 %v3774
    %v4999 = vunpack.c.l.b16 %v3775
    %v5000 = vunpack.c.h.b16 %v3775
    %v5001 = vunpack.c.l.b16 %v3776
    %v5002 = vunpack.c.h.b16 %v3776
    %v5003 = vunpack.c.l.b16 %v3777
    %v5004 = vunpack.c.l.b16 %v3778
    %v5005 = vunpack.c.h.b16 %v3778
    %v5006 = vunpack.c.l.b16 %v3779
    %v5007 = vunpack.c.h.b16 %v3779
    %v5008 = vunpack.c.l.b16 %v3780
    %v5009 = vunpack.c.h.b16 %v3780
    %v5010 = vunpack.c.l.b16 %v3781
    %v5011 = vunpack.c.l.b16 %v3782
    %v5012 = vunpack.c.h.b16 %v3782
    %v5013 = vunpack.c.l.b16 %v3783
    %v5014 = vunpack.c.h.b16 %v3783
    %v5015 = vunpack.c.l.b16 %v3784
    %v5016 = vunpack.c.h.b16 %v3784
    %v5017 = vunpack.c.l.b16 %v3785
    %v5018 = vunpack.c.l.b16 %v3786
    %v5019 = vunpack.c.h.b16 %v3786
    %v5020 = vunpack.c.l.b16 %v3787
    %v5021 = vunpack.c.h.b16 %v3787
    %v5022 = vunpack.c.l.b16 %v3788
    %v5023 = vunpack.c.h.b16 %v3788
    %v5024 = vunpack.c.l.b16 %v3789
    %v5025 = vunpack.c.l.b16 %v3790
    %v5026 = vunpack.c.h.b16 %v3790
    %v5027 = vunpack.c.l.b16 %v3791
    %v5028 = vunpack.c.h.b16 %v3791
    %v5029 = vunpack.c.l.b16 %v3792
    %v5030 = vunpack.c.h.b16 %v3792
    %v5031 = vunpack.c.l.b16 %v3793
    %v5032 = vunpack.c.l.b16 %v3794
    %v5033 = vunpack.c.h.b16 %v3794
    %v5034 = vunpack.c.l.b16 %v3795
    %v5035 = vunpack.c.h.b16 %v3795
    %v5036 = vunpack.c.l.b16 %v3796
    %v5037 = vunpack.c.h.b16 %v3796
    %v5038 = vunpack.c.l.b16 %v3797
    %v5039 = vunpack.c.l.b16 %v3798
    %v5040 = vunpack.c.h.b16 %v3798
    %v5041 = vunpack.c.l.b16 %v3799
    %v5042 = vunpack.c.h.b16 %v3799
    %v5043 = vunpack.c.l.b16 %v3800
    %v5044 = vunpack.c.h.b16 %v3800
    %v5045 = vunpack.c.l.b16 %v3801
    %v5046 = vunpack.c.l.b16 %v3802
    %v5047 = vunpack.c.h.b16 %v3802
    %v5048 = vunpack.c.l.b16 %v3803
    %v5049 = vunpack.c.h.b16 %v3803
    %v5050 = vunpack.c.l.b16 %v3804
    %v5051 = vunpack.c.h.b16 %v3804
    %v5052 = vunpack.c.l.b16 %v3805
    %v5053 = vunpack.c.l.b16 %v3806
    %v5054 = vunpack.c.h.b16 %v3806
    %v5055 = vunpack.c.l.b16 %v3807
    %v5056 = vunpack.c.h.b16 %v3807
    %v5057 = vunpack.c.l.b16 %v3808
    %v5058 = vunpack.c.h.b16 %v3808
    %v5059 = vunpack.c.l.b16 %v3809
    %v5060 = vunpack.c.l.b16 %v3810
    %v5061 = vunpack.c.h.b16 %v3810
    %v5062 = vunpack.c.l.b16 %v3811
    %v5063 = vunpack.c.h.b16 %v3811
    %v5064 = vunpack.c.l.b16 %v3812
    %v5065 = vunpack.c.h.b16 %v3812
    %v5066 = vunpack.c.l.b16 %v3813
    %v5067 = vunpack.c.l.b16 %v3814
    %v5068 = vunpack.c.h.b16 %v3814
    %v5069 = vunpack.c.l.b16 %v3815
    %v5070 = vunpack.c.h.b16 %v3815
    %v5071 = vunpack.c.l.b16 %v3816
    %v5072 = vunpack.c.h.b16 %v3816
    %v5073 = vunpack.c.l.b16 %v3817
    %v5074 = vunpack.c.l.b16 %v3818
    %v5075 = vunpack.c.h.b16 %v3818
    %v5076 = vunpack.c.l.b16 %v3819
    %v5077 = vunpack.c.h.b16 %v3819
    %v5078 = vunpack.c.l.b16 %v3820
    %v5079 = vunpack.c.h.b16 %v3820
    %v5080 = vunpack.c.l.b16 %v3821
    %v5081 = vunpack.c.l.b16 %v3822
    %v5082 = vunpack.c.h.b16 %v3822
    %v5083 = vunpack.c.l.b16 %v3823
    %v5084 = vunpack.c.h.b16 %v3823
    %v5085 = vunpack.c.l.b16 %v3824
    %v5086 = vunpack.c.h.b16 %v3824
    %v5087 = vunpack.c.l.b16 %v3825
    %v5088 = vunpack.c.l.b16 %v3826
    %v5089 = vunpack.c.h.b16 %v3826
    %v5090 = vunpack.c.l.b16 %v3827
    %v5091 = vunpack.c.h.b16 %v3827
    %v5092 = vunpack.c.l.b16 %v3828
    %v5093 = vunpack.c.h.b16 %v3828
    %v5094 = vunpack.c.l.b16 %v3829
    %v5095 = vunpack.c.l.b16 %v3830
    %v5096 = vunpack.c.h.b16 %v3830
    %v5097 = vunpack.c.l.b16 %v3831
    %v5098 = vunpack.c.h.b16 %v3831
    %v5099 = vunpack.c.l.b16 %v3832
    %v5100 = vunpack.c.h.b16 %v3832
    %v5101 = vunpack.c.l.b16 %v3833
    %v5102 = vunpack.c.l.b16 %v3834
    %v5103 = vunpack.c.h.b16 %v3834
    %v5104 = vunpack.c.l.b16 %v3835
    %v5105 = vunpack.c.h.b16 %v3835
    %v5106 = vunpack.c.l.b16 %v3836
    %v5107 = vunpack.c.h.b16 %v3836
    %v5108 = vunpack.c.l.b16 %v3837
    %v5109 = vunpack.c.l.b16 %v3838
    %v5110 = vunpack.c.h.b16 %v3838
    %v5111 = vunpack.c.l.b16 %v3839
    %v5112 = vunpack.c.h.b16 %v3839
    %v5113 = vunpack.c.l.b16 %v3840
    %v5114 = vunpack.c.h.b16 %v3840
    %v5115 = vunpack.c.l.b16 %v3841
    %v5116 = vunpack.c.l.b16 %v3842
    %v5117 = vunpack.c.h.b16 %v3842
    %v5118 = vunpack.c.l.b16 %v3843
    %v5119 = vunpack.c.h.b16 %v3843
    %v5120 = vunpack.c.l.b16 %v3844
    %v5121 = vunpack.c.h.b16 %v3844
    %v5122 = vunpack.c.l.b16 %v3845
    %v5123 = vunpack.c.l.b16 %v3846
    %v5124 = vunpack.c.h.b16 %v3846
    %v5125 = vunpack.c.l.b16 %v3847
    %v5126 = vunpack.c.h.b16 %v3847
    %v5127 = vunpack.c.l.b16 %v3848
    %v5128 = vunpack.c.h.b16 %v3848
    %v5129 = vunpack.c.l.b16 %v3849
    %v5130 = vunpack.c.l.b16 %v3850
    %v5131 = vunpack.c.h.b16 %v3850
    %v5132 = vunpack.c.l.b16 %v3851
    %v5133 = vunpack.c.h.b16 %v3851
    %v5134 = vunpack.c.l.b16 %v3852
    %v5135 = vunpack.c.h.b16 %v3852
    %v5136 = vunpack.c.l.b16 %v3853
    %v5137 = vunpack.c.l.b16 %v3854
    %v5138 = vunpack.c.h.b16 %v3854
    %v5139 = vunpack.c.l.b16 %v3855
    %v5140 = vunpack.c.h.b16 %v3855
    %v5141 = vunpack.c.l.b16 %v3856
    %v5142 = vunpack.c.h.b16 %v3856
    %v5143 = vunpack.c.l.b16 %v3857
    %v5144 = vunpack.c.l.b16 %v3858
    %v5145 = vunpack.c.h.b16 %v3858
    %v5146 = vunpack.c.l.b16 %v3859
    %v5147 = vunpack.c.h.b16 %v3859
    %v5148 = vunpack.c.l.b16 %v3860
    %v5149 = vunpack.c.h.b16 %v3860
    %v5150 = vunpack.c.l.b16 %v3861
    %v5151 = vunpack.c.l.b16 %v3862
    %v5152 = vunpack.c.h.b16 %v3862
    %v5153 = vunpack.c.l.b16 %v3863
    %v5154 = vunpack.c.h.b16 %v3863
    %v5155 = vunpack.c.l.b16 %v3864
    %v5156 = vunpack.c.h.b16 %v3864
    %v5157 = vunpack.c.l.b16 %v3865
    %v5158 = vunpack.c.l.b16 %v3866
    %v5159 = vunpack.c.h.b16 %v3866
    %v5160 = vunpack.c.l.b16 %v3867
    %v5161 = vunpack.c.h.b16 %v3867
    %v5162 = vunpack.c.l.b16 %v3868
    %v5163 = vunpack.c.h.b16 %v3868
    %v5164 = vunpack.c.l.b16 %v3869
    %v5165 = vunpack.c.l.b16 %v3870
    %v5166 = vunpack.c.h.b16 %v3870
    %v5167 = vunpack.c.l.b16 %v3871
    %v5168 = vunpack.c.h.b16 %v3871
    %v5169 = vunpack.c.l.b16 %v3872
    %v5170 = vunpack.c.h.b16 %v3872
    %v5171 = vunpack.c.l.b16 %v3873
    %v5172 = vunpack.c.l.b16 %v3874
    %v5173 = vunpack.c.h.b16 %v3874
    %v5174 = vunpack.c.l.b16 %v3875
    %v5175 = vunpack.c.h.b16 %v3875
    %v5176 = vunpack.c.l.b16 %v3876
    %v5177 = vunpack.c.h.b16 %v3876
    %v5178 = vunpack.c.l.b16 %v3877
    %v5179 = vunpack.c.l.b16 %v3878
    %v5180 = vunpack.c.h.b16 %v3878
    %v5181 = vunpack.c.l.b16 %v3879
    %v5182 = vunpack.c.h.b16 %v3879
    %v5183 = vunpack.c.l.b16 %v3880
    %v5184 = vunpack.c.h.b16 %v3880
    %v5185 = vunpack.c.l.b16 %v3881
    %v5186 = vunpack.c.l.b16 %v3882
    %v5187 = vunpack.c.h.b16 %v3882
    %v5188 = vunpack.c.l.b16 %v3883
    %v5189 = vunpack.c.h.b16 %v3883
    %v5190 = vunpack.c.l.b16 %v3884
    %v5191 = vunpack.c.h.b16 %v3884
    %v5192 = vunpack.c.l.b16 %v3885
    %v5193 = vunpack.c.l.b16 %v3886
    %v5194 = vunpack.c.h.b16 %v3886
    %v5195 = vunpack.c.l.b16 %v3887
    %v5196 = vunpack.c.h.b16 %v3887
    %v5197 = vunpack.c.l.b16 %v3888
    %v5198 = vunpack.c.h.b16 %v3888
    %v5199 = vunpack.c.l.b16 %v3889
    %v5200 = vunpack.c.l.b16 %v3890
    %v5201 = vunpack.c.h.b16 %v3890
    %v5202 = vunpack.c.l.b16 %v3891
    %v5203 = vunpack.c.h.b16 %v3891
    %v5204 = vunpack.c.l.b16 %v3892
    %v5205 = vunpack.c.h.b16 %v3892
    %v5206 = vunpack.c.l.b16 %v3893
    %v5207 = vunpack.c.l.b16 %v3894
    %v5208 = vunpack.c.h.b16 %v3894
    %v5209 = vunpack.c.l.b16 %v3895
    %v5210 = vunpack.c.h.b16 %v3895
    %v5211 = vunpack.c.l.b16 %v3896
    %v5212 = vunpack.c.h.b16 %v3896
    %v5213 = vunpack.c.l.b16 %v3897
    %v5214 = vunpack.c.l.b16 %v3898
    %v5215 = vunpack.c.h.b16 %v3898
    %v5216 = vunpack.c.l.b16 %v3899
    %v5217 = vunpack.c.h.b16 %v3899
    %v5218 = vunpack.c.l.b16 %v3900
    %v5219 = vunpack.c.h.b16 %v3900
    %v5220 = vunpack.c.l.b16 %v3901
    %v5221 = vunpack.c.l.b16 %v3902
    %v5222 = vunpack.c.h.b16 %v3902
    %v5223 = vunpack.c.l.b16 %v3903
    %v5224 = vunpack.c.h.b16 %v3903
    %v5225 = vunpack.c.l.b16 %v3904
    %v5226 = vunpack.c.h.b16 %v3904
    %v5227 = vunpack.c.l.b16 %v3905
    %v5228 = vunpack.c.l.b16 %v3906
    %v5229 = vunpack.c.h.b16 %v3906
    %v5230 = vunpack.c.l.b16 %v3907
    %v5231 = vunpack.c.h.b16 %v3907
    %v5232 = vunpack.c.l.b16 %v3908
    %v5233 = vunpack.c.h.b16 %v3908
    %v5234 = vunpack.c.l.b16 %v3909
    %v5235 = vunpack.c.l.b16 %v3910
    %v5236 = vunpack.c.h.b16 %v3910
    %v5237 = vunpack.c.l.b16 %v3911
    %v5238 = vunpack.c.h.b16 %v3911
    %v5239 = vunpack.c.l.b16 %v3912
    %v5240 = vunpack.c.h.b16 %v3912
    %v5241 = vunpack.c.l.b16 %v3913
    %v5242 = vunpack.c.l.b16 %v3914
    %v5243 = vunpack.c.h.b16 %v3914
    %v5244 = vunpack.c.l.b16 %v3915
    %v5245 = vunpack.c.h.b16 %v3915
    %v5246 = vunpack.c.l.b16 %v3916
    %v5247 = vunpack.c.h.b16 %v3916
    %v5248 = vunpack.c.l.b16 %v3917
    %v5249 = vunpack.c.l.b16 %v3918
    %v5250 = vunpack.c.h.b16 %v3918
    %v5251 = vunpack.c.l.b16 %v3919
    %v5252 = vunpack.c.h.b16 %v3919
    %v5253 = vunpack.c.l.b16 %v3920
    %v5254 = vunpack.c.h.b16 %v3920
    %v5255 = vunpack.c.l.b16 %v3921
    %v5256 = vunpack.c.l.b16 %v3922
    %v5257 = vunpack.c.h.b16 %v3922
    %v5258 = vunpack.c.l.b16 %v3923
    %v5259 = vunpack.c.h.b16 %v3923
    %v5260 = vunpack.c.l.b16 %v3924
    %v5261 = vunpack.c.h.b16 %v3924
    %v5262 = vunpack.c.l.b16 %v3925
    %v5263 = vunpack.c.l.b16 %v3926
    %v5264 = vunpack.c.h.b16 %v3926
    %v5265 = vunpack.c.l.b16 %v3927
    %v5266 = vunpack.c.h.b16 %v3927
    %v5267 = vunpack.c.l.b16 %v3928
    %v5268 = vunpack.c.h.b16 %v3928
    %v5269 = vunpack.c.l.b16 %v3929
    %v5270 = vunpack.c.l.b16 %v3930
    %v5271 = vunpack.c.h.b16 %v3930
    %v5272 = vunpack.c.l.b16 %v3931
    %v5273 = vunpack.c.h.b16 %v3931
    %v5274 = vunpack.c.l.b16 %v3932
    %v5275 = vunpack.c.h.b16 %v3932
    %v5276 = vunpack.c.l.b16 %v3933
    %v5277 = vunpack.c.l.b16 %v3934
    %v5278 = vunpack.c.h.b16 %v3934
    %v5279 = vunpack.c.l.b16 %v3935
    %v5280 = vunpack.c.h.b16 %v3935
    %v5281 = vunpack.c.l.b16 %v3936
    %v5282 = vunpack.c.h.b16 %v3936
    %v5283 = vunpack.c.l.b16 %v3937
    %v5284 = vunpack.c.l.b16 %v3938
    %v5285 = vunpack.c.h.b16 %v3938
    %v5286 = vunpack.c.l.b16 %v3939
    %v5287 = vunpack.c.h.b16 %v3939
    %v5288 = vunpack.c.l.b16 %v3940
    %v5289 = vunpack.c.h.b16 %v3940
    %v5290 = vunpack.c.l.b16 %v3941
    %v5291 = vunpack.c.l.b16 %v3942
    %v5292 = vunpack.c.h.b16 %v3942
    %v5293 = vunpack.c.l.b16 %v3943
    %v5294 = vunpack.c.h.b16 %v3943
    %v5295 = vunpack.c.l.b16 %v3944
    %v5296 = vunpack.c.h.b16 %v3944
    %v5297 = vunpack.c.l.b16 %v3945
    %v5298 = vunpack.c.l.b16 %v3946
    %v5299 = vunpack.c.h.b16 %v3946
    %v5300 = vunpack.c.l.b16 %v3947
    %v5301 = vunpack.c.h.b16 %v3947
    %v5302 = vunpack.c.l.b16 %v3948
    %v5303 = vunpack.c.h.b16 %v3948
    %v5304 = vunpack.c.l.b16 %v3949
    %v5305 = vunpack.c.l.b16 %v3950
    %v5306 = vunpack.c.h.b16 %v3950
    %v5307 = vunpack.c.l.b16 %v3951
    %v5308 = vunpack.c.h.b16 %v3951
    %v5309 = vunpack.c.l.b16 %v3952
    %v5310 = vunpack.c.h.b16 %v3952
    %v5311 = vunpack.c.l.b16 %v3953
    %v5312 = vunpack.c.l.b16 %v3954
    %v5313 = vunpack.c.h.b16 %v3954
    %v5314 = vunpack.c.l.b16 %v3955
    %v5315 = vunpack.c.h.b16 %v3955
    %v5316 = vunpack.c.l.b16 %v3956
    %v5317 = vunpack.c.h.b16 %v3956
    %v5318 = vunpack.c.l.b16 %v3957
    %v5319 = vunpack.c.l.b16 %v3958
    %v5320 = vunpack.c.h.b16 %v3958
    %v5321 = vunpack.c.l.b16 %v3959
    %v5322 = vunpack.c.h.b16 %v3959
    %v5323 = vunpack.c.l.b16 %v3960
    %v5324 = vunpack.c.h.b16 %v3960
    %v5325 = vunpack.c.l.b16 %v3961
    %v5326 = vunpack.c.l.b16 %v3962
    %v5327 = vunpack.c.h.b16 %v3962
    %v5328 = vunpack.c.l.b16 %v3963
    %v5329 = vunpack.c.h.b16 %v3963
    %v5330 = vunpack.c.l.b16 %v3964
    %v5331 = vunpack.c.h.b16 %v3964
    %v5332 = vunpack.c.l.b16 %v3965
    %v5333 = vunpack.c.l.b16 %v3966
    %v5334 = vunpack.c.h.b16 %v3966
    %v5335 = vunpack.c.l.b16 %v3967
    %v5336 = vunpack.c.h.b16 %v3967
    %v5337 = vunpack.c.l.b16 %v3968
    %v5338 = vunpack.c.h.b16 %v3968
    %v5339 = vunpack.c.l.b16 %v3969
    %v5340 = vunpack.c.l.b16 %v3970
    %v5341 = vunpack.c.h.b16 %v3970
    %v5342 = vunpack.c.l.b16 %v3971
    %v5343 = vunpack.c.h.b16 %v3971
    %v5344 = vunpack.c.l.b16 %v3972
    %v5345 = vunpack.c.h.b16 %v3972
    %v5346 = vunpack.c.l.b16 %v3973
    %v5347 = vunpack.c.l.b16 %v3974
    %v5348 = vunpack.c.h.b16 %v3974
    %v5349 = vunpack.c.l.b16 %v3975
    %v5350 = vunpack.c.h.b16 %v3975
    %v5351 = vunpack.c.l.b16 %v3976
    %v5352 = vunpack.c.h.b16 %v3976
    %v5353 = vunpack.c.l.b16 %v3977
    %v5354 = vunpack.c.l.b16 %v3978
    %v5355 = vunpack.c.h.b16 %v3978
    %v5356 = vunpack.c.l.b16 %v3979
    %v5357 = vunpack.c.h.b16 %v3979
    %v5358 = vunpack.c.l.b16 %v3980
    %v5359 = vunpack.c.h.b16 %v3980
    %v5360 = vunpack.c.l.b16 %v3981
    %v5361 = vunpack.c.l.b16 %v3982
    %v5362 = vunpack.c.h.b16 %v3982
    %v5363 = vunpack.c.l.b16 %v3983
    %v5364 = vunpack.c.h.b16 %v3983
    %v5365 = vunpack.c.l.b16 %v3984
    %v5366 = vunpack.c.h.b16 %v3984
    %v5367 = vunpack.c.l.b16 %v3985
    %v5368 = vunpack.c.l.b16 %v3986
    %v5369 = vunpack.c.h.b16 %v3986
    %v5370 = vunpack.c.l.b16 %v3987
    %v5371 = vunpack.c.h.b16 %v3987
    %v5372 = vunpack.c.l.b16 %v3988
    %v5373 = vunpack.c.h.b16 %v3988
    %v5374 = vunpack.c.l.b16 %v3989
    %v5375 = vunpack.c.l.b16 %v3990
    %v5376 = vunpack.c.h.b16 %v3990
    %v5377 = vunpack.c.l.b16 %v3991
    %v5378 = vunpack.c.h.b16 %v3991
    %v5379 = vunpack.c.l.b16 %v3992
    %v5380 = vunpack.c.h.b16 %v3992
    %v5381 = vunpack.c.l.b16 %v3993
    %v5382 = vunpack.c.l.b16 %v3994
    %v5383 = vunpack.c.h.b16 %v3994
    %v5384 = vunpack.c.l.b16 %v3995
    %v5385 = vunpack.c.h.b16 %v3995
    %v5386 = vunpack.c.l.b16 %v3996
    %v5387 = vunpack.c.h.b16 %v3996
    %v5388 = vunpack.c.l.b16 %v3997
    %v5389 = vunpack.c.l.b16 %v3998
    %v5390 = vunpack.c.h.b16 %v3998
    %v5391 = vunpack.c.l.b16 %v3999
    %v5392 = vunpack.c.h.b16 %v3999
    %v5393 = vunpack.c.l.b16 %v4000
    %v5394 = vunpack.c.h.b16 %v4000
    %v5395 = vunpack.c.l.b16 %v4001
    %v5396 = vunpack.c.l.b16 %v4002
    %v5397 = vunpack.c.h.b16 %v4002
    %v5398 = vunpack.c.l.b16 %v4003
    %v5399 = vunpack.c.h.b16 %v4003
    %v5400 = vunpack.c.l.b16 %v4004
    %v5401 = vunpack.c.h.b16 %v4004
    %v5402 = vunpack.c.l.b16 %v4005
    %v5403 = vunpack.c.l.b16 %v4006
    %v5404 = vunpack.c.h.b16 %v4006
    %v5405 = vunpack.c.l.b16 %v4007
    %v5406 = vunpack.c.h.b16 %v4007
    %v5407 = vunpack.c.l.b16 %v4008
    %v5408 = vunpack.c.h.b16 %v4008
    %v5409 = vunpack.c.l.b16 %v4009
    %v5410 = vunpack.c.l.b16 %v4010
    %v5411 = vunpack.c.h.b16 %v4010
    %v5412 = vunpack.c.l.b16 %v4011
    %v5413 = vunpack.c.h.b16 %v4011
    %v5414 = vunpack.c.l.b16 %v4012
    %v5415 = vunpack.c.h.b16 %v4012
    %v5416 = vunpack.c.l.b16 %v4013
    %v5417 = vunpack.c.l.b16 %v4014
    %v5418 = vunpack.c.h.b16 %v4014
    %v5419 = vunpack.c.l.b16 %v4015
    %v5420 = vunpack.c.h.b16 %v4015
    %v5421 = vunpack.c.l.b16 %v4016
    %v5422 = vunpack.c.h.b16 %v4016
    %v5423 = vunpack.c.l.b16 %v4017
    %v5424 = vunpack.c.l.b16 %v4018
    %v5425 = vunpack.c.h.b16 %v4018
    %v5426 = vunpack.c.l.b16 %v4019
    %v5427 = vunpack.c.h.b16 %v4019
    %v5428 = vunpack.c.l.b16 %v4020
    %v5429 = vunpack.c.h.b16 %v4020
    %v5430 = vunpack.c.l.b16 %v4021
    %v5431 = vunpack.c.l.b16 %v4022
    %v5432 = vunpack.c.h.b16 %v4022
    %v5433 = vunpack.c.l.b16 %v4023
    %v5434 = vunpack.c.h.b16 %v4023
    %v5435 = vunpack.c.l.b16 %v4024
    %v5436 = vunpack.c.h.b16 %v4024
    %v5437 = vunpack.c.l.b16 %v4025
    %v5438 = vunpack.c.l.b16 %v4026
    %v5439 = vunpack.c.h.b16 %v4026
    %v5440 = vunpack.c.l.b16 %v4027
    %v5441 = vunpack.c.h.b16 %v4027
    %v5442 = vunpack.c.l.b16 %v4028
    %v5443 = vunpack.c.h.b16 %v4028
    %v5444 = vunpack.c.l.b16 %v4029
    %v5445 = vunpack.c.l.b16 %v4030
    %v5446 = vunpack.c.h.b16 %v4030
    %v5447 = vunpack.c.l.b16 %v4031
    %v5448 = vunpack.c.h.b16 %v4031
    %v5449 = vunpack.c.l.b16 %v4032
    %v5450 = vunpack.c.h.b16 %v4032
    %v5451 = vunpack.c.l.b16 %v4033
    %v5452 = vunpack.c.l.b16 %v4034
    %v5453 = vunpack.c.h.b16 %v4034
    %v5454 = vunpack.c.l.b16 %v4035
    %v5455 = vunpack.c.h.b16 %v4035
    %v5456 = vunpack.c.l.b16 %v4036
    %v5457 = vunpack.c.h.b16 %v4036
    %v5458 = vunpack.c.l.b16 %v4037
    %v5459 = vunpack.c.l.b16 %v4038
    %v5460 = vunpack.c.h.b16 %v4038
    %v5461 = vunpack.c.l.b16 %v4039
    %v5462 = vunpack.c.h.b16 %v4039
    %v5463 = vunpack.c.l.b16 %v4040
    %v5464 = vunpack.c.h.b16 %v4040
    %v5465 = vunpack.c.l.b16 %v4041
    %v5466 = vpack.c.b16 %v4577, %v4570
    %v5467 = vpack.c.b16 %v4578, %v4571
    %v5468 = vpack.c.b16 %v4579, %v4572
    %v5469 = vpack.c.b16 %v4580, %v4573
    %v5470 = vpack.c.b16 %v4581, %v4574
    %v5471 = vpack.c.b16 %v4582, %v4575
    %v5472 = vpack.c.b16 %v4583, %v4576
    %v5473 = vpack.c.b16 %v4591, %v4584
    %v5474 = vpack.c.b16 %v4592, %v4585
    %v5475 = vpack.c.b16 %v4593, %v4586
    %v5476 = vpack.c.b16 %v4594, %v4587
    %v5477 = vpack.c.b16 %v4595, %v4588
    %v5478 = vpack.c.b16 %v4596, %v4589
    %v5479 = vpack.c.b16 %v4597, %v4590
    %v5480 = vpack.c.b16 %v4605, %v4598
    %v5481 = vpack.c.b16 %v4606, %v4599
    %v5482 = vpack.c.b16 %v4607, %v4600
    %v5483 = vpack.c.b16 %v4608, %v4601
    %v5484 = vpack.c.b16 %v4609, %v4602
    %v5485 = vpack.c.b16 %v4610, %v4603
    %v5486 = vpack.c.b16 %v4611, %v4604
    %v5487 = vpack.c.b16 %v4619, %v4612
    %v5488 = vpack.c.b16 %v4620, %v4613
    %v5489 = vpack.c.b16 %v4621, %v4614
    %v5490 = vpack.c.b16 %v4622, %v4615
    %v5491 = vpack.c.b16 %v4623, %v4616
    %v5492 = vpack.c.b16 %v4624, %v4617
    %v5493 = vpack.c.b16 %v4625, %v4618
    %v5494 = vpack.c.b16 %v4633, %v4626
    %v5495 = vpack.c.b16 %v4634, %v4627
    %v5496 = vpack.c.b16 %v4635, %v4628
    %v5497 = vpack.c.b16 %v4636, %v4629
    %v5498 = vpack.c.b16 %v4637, %v4630
    %v5499 = vpack.c.b16 %v4638, %v4631
    %v5500 = vpack.c.b16 %v4639, %v4632
    %v5501 = vpack.c.b16 %v4647, %v4640
    %v5502 = vpack.c.b16 %v4648, %v4641
    %v5503 = vpack.c.b16 %v4649, %v4642
    %v5504 = vpack.c.b16 %v4650, %v4643
    %v5505 = vpack.c.b16 %v4651, %v4644
    %v5506 = vpack.c.b16 %v4652, %v4645
    %v5507 = vpack.c.b16 %v4653, %v4646
    %v5508 = vpack.c.b16 %v4661, %v4654
    %v5509 = vpack.c.b16 %v4662, %v4655
    %v5510 = vpack.c.b16 %v4663, %v4656
    %v5511 = vpack.c.b16 %v4664, %v4657
    %v5512 = vpack.c.b16 %v4665, %v4658
    %v5513 = vpack.c.b16 %v4666, %v4659
    %v5514 = vpack.c.b16 %v4667, %v4660
    %v5515 = vpack.c.b16 %v4675, %v4668
    %v5516 = vpack.c.b16 %v4676, %v4669
    %v5517 = vpack.c.b16 %v4677, %v4670
    %v5518 = vpack.c.b16 %v4678, %v4671
    %v5519 = vpack.c.b16 %v4679, %v4672
    %v5520 = vpack.c.b16 %v4680, %v4673
    %v5521 = vpack.c.b16 %v4681, %v4674
    %v5522 = vpack.c.b16 %v4689, %v4682
    %v5523 = vpack.c.b16 %v4690, %v4683
    %v5524 = vpack.c.b16 %v4691, %v4684
    %v5525 = vpack.c.b16 %v4692, %v4685
    %v5526 = vpack.c.b16 %v4693, %v4686
    %v5527 = vpack.c.b16 %v4694, %v4687
    %v5528 = vpack.c.b16 %v4695, %v4688
    %v5529 = vpack.c.b16 %v4703, %v4696
    %v5530 = vpack.c.b16 %v4704, %v4697
    %v5531 = vpack.c.b16 %v4705, %v4698
    %v5532 = vpack.c.b16 %v4706, %v4699
    %v5533 = vpack.c.b16 %v4707, %v4700
    %v5534 = vpack.c.b16 %v4708, %v4701
    %v5535 = vpack.c.b16 %v4709, %v4702
    %v5536 = vpack.c.b16 %v4717, %v4710
    %v5537 = vpack.c.b16 %v4718, %v4711
    %v5538 = vpack.c.b16 %v4719, %v4712
    %v5539 = vpack.c.b16 %v4720, %v4713
    %v5540 = vpack.c.b16 %v4721, %v4714
    %v5541 = vpack.c.b16 %v4722, %v4715
    %v5542 = vpack.c.b16 %v4723, %v4716
    %v5543 = vpack.c.b16 %v4731, %v4724
    %v5544 = vpack.c.b16 %v4732, %v4725
    %v5545 = vpack.c.b16 %v4733, %v4726
    %v5546 = vpack.c.b16 %v4734, %v4727
    %v5547 = vpack.c.b16 %v4735, %v4728
    %v5548 = vpack.c.b16 %v4736, %v4729
    %v5549 = vpack.c.b16 %v4737, %v4730
    %v5550 = vpack.c.b16 %v4745, %v4738
    %v5551 = vpack.c.b16 %v4746, %v4739
    %v5552 = vpack.c.b16 %v4747, %v4740
    %v5553 = vpack.c.b16 %v4748, %v4741
    %v5554 = vpack.c.b16 %v4749, %v4742
    %v5555 = vpack.c.b16 %v4750, %v4743
    %v5556 = vpack.c.b16 %v4751, %v4744
    %v5557 = vpack.c.b16 %v4759, %v4752
    %v5558 = vpack.c.b16 %v4760, %v4753
    %v5559 = vpack.c.b16 %v4761, %v4754
    %v5560 = vpack.c.b16 %v4762, %v4755
    %v5561 = vpack.c.b16 %v4763, %v4756
    %v5562 = vpack.c.b16 %v4764, %v4757
    %v5563 = vpack.c.b16 %v4765, %v4758
    %v5564 = vpack.c.b16 %v4773, %v4766
    %v5565 = vpack.c.b16 %v4774, %v4767
    %v5566 = vpack.c.b16 %v4775, %v4768
    %v5567 = vpack.c.b16 %v4776, %v4769
    %v5568 = vpack.c.b16 %v4777, %v4770
    %v5569 = vpack.c.b16 %v4778, %v4771
    %v5570 = vpack.c.b16 %v4779, %v4772
    %v5571 = vpack.c.b16 %v4787, %v4780
    %v5572 = vpack.c.b16 %v4788, %v4781
    %v5573 = vpack.c.b16 %v4789, %v4782
    %v5574 = vpack.c.b16 %v4790, %v4783
    %v5575 = vpack.c.b16 %v4791, %v4784
    %v5576 = vpack.c.b16 %v4792, %v4785
    %v5577 = vpack.c.b16 %v4793, %v4786
    %v5578 = vpack.c.b16 %v4801, %v4794
    %v5579 = vpack.c.b16 %v4802, %v4795
    %v5580 = vpack.c.b16 %v4803, %v4796
    %v5581 = vpack.c.b16 %v4804, %v4797
    %v5582 = vpack.c.b16 %v4805, %v4798
    %v5583 = vpack.c.b16 %v4806, %v4799
    %v5584 = vpack.c.b16 %v4807, %v4800
    %v5585 = vpack.c.b16 %v4815, %v4808
    %v5586 = vpack.c.b16 %v4816, %v4809
    %v5587 = vpack.c.b16 %v4817, %v4810
    %v5588 = vpack.c.b16 %v4818, %v4811
    %v5589 = vpack.c.b16 %v4819, %v4812
    %v5590 = vpack.c.b16 %v4820, %v4813
    %v5591 = vpack.c.b16 %v4821, %v4814
    %v5592 = vpack.c.b16 %v4829, %v4822
    %v5593 = vpack.c.b16 %v4830, %v4823
    %v5594 = vpack.c.b16 %v4831, %v4824
    %v5595 = vpack.c.b16 %v4832, %v4825
    %v5596 = vpack.c.b16 %v4833, %v4826
    %v5597 = vpack.c.b16 %v4834, %v4827
    %v5598 = vpack.c.b16 %v4835, %v4828
    %v5599 = vpack.c.b16 %v4843, %v4836
    %v5600 = vpack.c.b16 %v4844, %v4837
    %v5601 = vpack.c.b16 %v4845, %v4838
    %v5602 = vpack.c.b16 %v4846, %v4839
    %v5603 = vpack.c.b16 %v4847, %v4840
    %v5604 = vpack.c.b16 %v4848, %v4841
    %v5605 = vpack.c.b16 %v4849, %v4842
    %v5606 = vpack.c.b16 %v4857, %v4850
    %v5607 = vpack.c.b16 %v4858, %v4851
    %v5608 = vpack.c.b16 %v4859, %v4852
    %v5609 = vpack.c.b16 %v4860, %v4853
    %v5610 = vpack.c.b16 %v4861, %v4854
    %v5611 = vpack.c.b16 %v4862, %v4855
    %v5612 = vpack.c.b16 %v4863, %v4856
    %v5613 = vpack.c.b16 %v4871, %v4864
    %v5614 = vpack.c.b16 %v4872, %v4865
    %v5615 = vpack.c.b16 %v4873, %v4866
    %v5616 = vpack.c.b16 %v4874, %v4867
    %v5617 = vpack.c.b16 %v4875, %v4868
    %v5618 = vpack.c.b16 %v4876, %v4869
    %v5619 = vpack.c.b16 %v4877, %v4870
    %v5620 = vpack.c.b16 %v4885, %v4878
    %v5621 = vpack.c.b16 %v4886, %v4879
    %v5622 = vpack.c.b16 %v4887, %v4880
    %v5623 = vpack.c.b16 %v4888, %v4881
    %v5624 = vpack.c.b16 %v4889, %v4882
    %v5625 = vpack.c.b16 %v4890, %v4883
    %v5626 = vpack.c.b16 %v4891, %v4884
    %v5627 = vpack.c.b16 %v4899, %v4892
    %v5628 = vpack.c.b16 %v4900, %v4893
    %v5629 = vpack.c.b16 %v4901, %v4894
    %v5630 = vpack.c.b16 %v4902, %v4895
    %v5631 = vpack.c.b16 %v4903, %v4896
    %v5632 = vpack.c.b16 %v4904, %v4897
    %v5633 = vpack.c.b16 %v4905, %v4898
    %v5634 = vpack.c.b16 %v4913, %v4906
    %v5635 = vpack.c.b16 %v4914, %v4907
    %v5636 = vpack.c.b16 %v4915, %v4908
    %v5637 = vpack.c.b16 %v4916, %v4909
    %v5638 = vpack.c.b16 %v4917, %v4910
    %v5639 = vpack.c.b16 %v4918, %v4911
    %v5640 = vpack.c.b16 %v4919, %v4912
    %v5641 = vpack.c.b16 %v4927, %v4920
    %v5642 = vpack.c.b16 %v4928, %v4921
    %v5643 = vpack.c.b16 %v4929, %v4922
    %v5644 = vpack.c.b16 %v4930, %v4923
    %v5645 = vpack.c.b16 %v4931, %v4924
    %v5646 = vpack.c.b16 %v4932, %v4925
    %v5647 = vpack.c.b16 %v4933, %v4926
    %v5648 = vpack.c.b16 %v4941, %v4934
    %v5649 = vpack.c.b16 %v4942, %v4935
    %v5650 = vpack.c.b16 %v4943, %v4936
    %v5651 = vpack.c.b16 %v4944, %v4937
    %v5652 = vpack.c.b16 %v4945, %v4938
    %v5653 = vpack.c.b16 %v4946, %v4939
    %v5654 = vpack.c.b16 %v4947, %v4940
    %v5655 = vpack.c.b16 %v4955, %v4948
    %v5656 = vpack.c.b16 %v4956, %v4949
    %v5657 = vpack.c.b16 %v4957, %v4950
    %v5658 = vpack.c.b16 %v4958, %v4951
    %v5659 = vpack.c.b16 %v4959, %v4952
    %v5660 = vpack.c.b16 %v4960, %v4953
    %v5661 = vpack.c.b16 %v4961, %v4954
    %v5662 = vpack.c.b16 %v4969, %v4962
    %v5663 = vpack.c.b16 %v4970, %v4963
    %v5664 = vpack.c.b16 %v4971, %v4964
    %v5665 = vpack.c.b16 %v4972, %v4965
    %v5666 = vpack.c.b16 %v4973, %v4966
    %v5667 = vpack.c.b16 %v4974, %v4967
    %v5668 = vpack.c.b16 %v4975, %v4968
    %v5669 = vpack.c.b16 %v4983, %v4976
    %v5670 = vpack.c.b16 %v4984, %v4977
    %v5671 = vpack.c.b16 %v4985, %v4978
    %v5672 = vpack.c.b16 %v4986, %v4979
    %v5673 = vpack.c.b16 %v4987, %v4980
    %v5674 = vpack.c.b16 %v4988, %v4981
    %v5675 = vpack.c.b16 %v4989, %v4982
    %v5676 = vpack.c.b16 %v4997, %v4990
    %v5677 = vpack.c.b16 %v4998, %v4991
    %v5678 = vpack.c.b16 %v4999, %v4992
    %v5679 = vpack.c.b16 %v5000, %v4993
    %v5680 = vpack.c.b16 %v5001, %v4994
    %v5681 = vpack.c.b16 %v5002, %v4995
    %v5682 = vpack.c.b16 %v5003, %v4996
    %v5683 = vpack.c.b16 %v5011, %v5004
    %v5684 = vpack.c.b16 %v5012, %v5005
    %v5685 = vpack.c.b16 %v5013, %v5006
    %v5686 = vpack.c.b16 %v5014, %v5007
    %v5687 = vpack.c.b16 %v5015, %v5008
    %v5688 = vpack.c.b16 %v5016, %v5009
    %v5689 = vpack.c.b16 %v5017, %v5010
    %v5690 = vpack.c.b16 %v5025, %v5018
    %v5691 = vpack.c.b16 %v5026, %v5019
    %v5692 = vpack.c.b16 %v5027, %v5020
    %v5693 = vpack.c.b16 %v5028, %v5021
    %v5694 = vpack.c.b16 %v5029, %v5022
    %v5695 = vpack.c.b16 %v5030, %v5023
    %v5696 = vpack.c.b16 %v5031, %v5024
    %v5697 = vpack.c.b16 %v5039, %v5032
    %v5698 = vpack.c.b16 %v5040, %v5033
    %v5699 = vpack.c.b16 %v5041, %v5034
    %v5700 = vpack.c.b16 %v5042, %v5035
    %v5701 = vpack.c.b16 %v5043, %v5036
    %v5702 = vpack.c.b16 %v5044, %v5037
    %v5703 = vpack.c.b16 %v5045, %v5038
    %v5704 = vpack.c.b16 %v5053, %v5046
    %v5705 = vpack.c.b16 %v5054, %v5047
    %v5706 = vpack.c.b16 %v5055, %v5048
    %v5707 = vpack.c.b16 %v5056, %v5049
    %v5708 = vpack.c.b16 %v5057, %v5050
    %v5709 = vpack.c.b16 %v5058, %v5051
    %v5710 = vpack.c.b16 %v5059, %v5052
    %v5711 = vpack.c.b16 %v5067, %v5060
    %v5712 = vpack.c.b16 %v5068, %v5061
    %v5713 = vpack.c.b16 %v5069, %v5062
    %v5714 = vpack.c.b16 %v5070, %v5063
    %v5715 = vpack.c.b16 %v5071, %v5064
    %v5716 = vpack.c.b16 %v5072, %v5065
    %v5717 = vpack.c.b16 %v5073, %v5066
    %v5718 = vpack.c.b16 %v5081, %v5074
    %v5719 = vpack.c.b16 %v5082, %v5075
    %v5720 = vpack.c.b16 %v5083, %v5076
    %v5721 = vpack.c.b16 %v5084, %v5077
    %v5722 = vpack.c.b16 %v5085, %v5078
    %v5723 = vpack.c.b16 %v5086, %v5079
    %v5724 = vpack.c.b16 %v5087, %v5080
    %v5725 = vpack.c.b16 %v5095, %v5088
    %v5726 = vpack.c.b16 %v5096, %v5089
    %v5727 = vpack.c.b16 %v5097, %v5090
    %v5728 = vpack.c.b16 %v5098, %v5091
    %v5729 = vpack.c.b16 %v5099, %v5092
    %v5730 = vpack.c.b16 %v5100, %v5093
    %v5731 = vpack.c.b16 %v5101, %v5094
    %v5732 = vpack.c.b16 %v5109, %v5102
    %v5733 = vpack.c.b16 %v5110, %v5103
    %v5734 = vpack.c.b16 %v5111, %v5104
    %v5735 = vpack.c.b16 %v5112, %v5105
    %v5736 = vpack.c.b16 %v5113, %v5106
    %v5737 = vpack.c.b16 %v5114, %v5107
    %v5738 = vpack.c.b16 %v5115, %v5108
    %v5739 = vpack.c.b16 %v5123, %v5116
    %v5740 = vpack.c.b16 %v5124, %v5117
    %v5741 = vpack.c.b16 %v5125, %v5118
    %v5742 = vpack.c.b16 %v5126, %v5119
    %v5743 = vpack.c.b16 %v5127, %v5120
    %v5744 = vpack.c.b16 %v5128, %v5121
    %v5745 = vpack.c.b16 %v5129, %v5122
    %v5746 = vpack.c.b16 %v5137, %v5130
    %v5747 = vpack.c.b16 %v5138, %v5131
    %v5748 = vpack.c.b16 %v5139, %v5132
    %v5749 = vpack.c.b16 %v5140, %v5133
    %v5750 = vpack.c.b16 %v5141, %v5134
    %v5751 = vpack.c.b16 %v5142, %v5135
    %v5752 = vpack.c.b16 %v5143, %v5136
    %v5753 = vpack.c.b16 %v5151, %v5144
    %v5754 = vpack.c.b16 %v5152, %v5145
    %v5755 = vpack.c.b16 %v5153, %v5146
    %v5756 = vpack.c.b16 %v5154, %v5147
    %v5757 = vpack.c.b16 %v5155, %v5148
    %v5758 = vpack.c.b16 %v5156, %v5149
    %v5759 = vpack.c.b16 %v5157, %v5150
    %v5760 = vpack.c.b16 %v5165, %v5158
    %v5761 = vpack.c.b16 %v5166, %v5159
    %v5762 = vpack.c.b16 %v5167, %v5160
    %v5763 = vpack.c.b16 %v5168, %v5161
    %v5764 = vpack.c.b16 %v5169, %v5162
    %v5765 = vpack.c.b16 %v5170, %v5163
    %v5766 = vpack.c.b16 %v5171, %v5164
    %v5767 = vpack.c.b16 %v5179, %v5172
    %v5768 = vpack.c.b16 %v5180, %v5173
    %v5769 = vpack.c.b16 %v5181, %v5174
    %v5770 = vpack.c.b16 %v5182, %v5175
    %v5771 = vpack.c.b16 %v5183, %v5176
    %v5772 = vpack.c.b16 %v5184, %v5177
    %v5773 = vpack.c.b16 %v5185, %v5178
    %v5774 = vpack.c.b16 %v5193, %v5186
    %v5775 = vpack.c.b16 %v5194, %v5187
    %v5776 = vpack.c.b16 %v5195, %v5188
    %v5777 = vpack.c.b16 %v5196, %v5189
    %v5778 = vpack.c.b16 %v5197, %v5190
    %v5779 = vpack.c.b16 %v5198, %v5191
    %v5780 = vpack.c.b16 %v5199, %v5192
    %v5781 = vpack.c.b16 %v5207, %v5200
    %v5782 = vpack.c.b16 %v5208, %v5201
    %v5783 = vpack.c.b16 %v5209, %v5202
    %v5784 = vpack.c.b16 %v5210, %v5203
    %v5785 = vpack.c.b16 %v5211, %v5204
    %v5786 = vpack.c.b16 %v5212, %v5205
    %v5787 = vpack.c.b16 %v5213, %v5206
    %v5788 = vpack.c.b16 %v5221, %v5214
    %v5789 = vpack.c.b16 %v5222, %v5215
    %v5790 = vpack.c.b16 %v5223, %v5216
    %v5791 = vpack.c.b16 %v5224, %v5217
    %v5792 = vpack.c.b16 %v5225, %v5218
    %v5793 = vpack.c.b16 %v5226, %v5219
    %v5794 = vpack.c.b16 %v5227, %v5220
    %v5795 = vpack.c.b16 %v5235, %v5228
    %v5796 = vpack.c.b16 %v5236, %v5229
    %v5797 = vpack.c.b16 %v5237, %v5230
    %v5798 = vpack.c.b16 %v5238, %v5231
    %v5799 = vpack.c.b16 %v5239, %v5232
    %v5800 = vpack.c.b16 %v5240, %v5233
    %v5801 = vpack.c.b16 %v5241, %v5234
    %v5802 = vpack.c.b16 %v5249, %v5242
    %v5803 = vpack.c.b16 %v5250, %v5243
    %v5804 = vpack.c.b16 %v5251, %v5244
    %v5805 = vpack.c.b16 %v5252, %v5245
    %v5806 = vpack.c.b16 %v5253, %v5246
    %v5807 = vpack.c.b16 %v5254, %v5247
    %v5808 = vpack.c.b16 %v5255, %v5248
    %v5809 = vpack.c.b16 %v5263, %v5256
    %v5810 = vpack.c.b16 %v5264, %v5257
    %v5811 = vpack.c.b16 %v5265, %v5258
    %v5812 = vpack.c.b16 %v5266, %v5259
    %v5813 = vpack.c.b16 %v5267, %v5260
    %v5814 = vpack.c.b16 %v5268, %v5261
    %v5815 = vpack.c.b16 %v5269, %v5262
    %v5816 = vpack.c.b16 %v5277, %v5270
    %v5817 = vpack.c.b16 %v5278, %v5271
    %v5818 = vpack.c.b16 %v5279, %v5272
    %v5819 = vpack.c.b16 %v5280, %v5273
    %v5820 = vpack.c.b16 %v5281, %v5274
    %v5821 = vpack.c.b16 %v5282, %v5275
    %v5822 = vpack.c.b16 %v5283, %v5276
    %v5823 = vpack.c.b16 %v5291, %v5284
    %v5824 = vpack.c.b16 %v5292, %v5285
    %v5825 = vpack.c.b16 %v5293, %v5286
    %v5826 = vpack.c.b16 %v5294, %v5287
    %v5827 = vpack.c.b16 %v5295, %v5288
    %v5828 = vpack.c.b16 %v5296, %v5289
    %v5829 = vpack.c.b16 %v5297, %v5290
    %v5830 = vpack.c.b16 %v5305, %v5298
    %v5831 = vpack.c.b16 %v5306, %v5299
    %v5832 = vpack.c.b16 %v5307, %v5300
    %v5833 = vpack.c.b16 %v5308, %v5301
    %v5834 = vpack.c.b16 %v5309, %v5302
    %v5835 = vpack.c.b16 %v5310, %v5303
    %v5836 = vpack.c.b16 %v5311, %v5304
    %v5837 = vpack.c.b16 %v5319, %v5312
    %v5838 = vpack.c.b16 %v5320, %v5313
    %v5839 = vpack.c.b16 %v5321, %v5314
    %v5840 = vpack.c.b16 %v5322, %v5315
    %v5841 = vpack.c.b16 %v5323, %v5316
    %v5842 = vpack.c.b16 %v5324, %v5317
    %v5843 = vpack.c.b16 %v5325, %v5318
    %v5844 = vpack.c.b16 %v5333, %v5326
    %v5845 = vpack.c.b16 %v5334, %v5327
    %v5846 = vpack.c.b16 %v5335, %v5328
    %v5847 = vpack.c.b16 %v5336, %v5329
    %v5848 = vpack.c.b16 %v5337, %v5330
    %v5849 = vpack.c.b16 %v5338, %v5331
    %v5850 = vpack.c.b16 %v5339, %v5332
    %v5851 = vpack.c.b16 %v5347, %v5340
    %v5852 = vpack.c.b16 %v5348, %v5341
    %v5853 = vpack.c.b16 %v5349, %v5342
    %v5854 = vpack.c.b16 %v5350, %v5343
    %v5855 = vpack.c.b16 %v5351, %v5344
    %v5856 = vpack.c.b16 %v5352, %v5345
    %v5857 = vpack.c.b16 %v5353, %v5346
    %v5858 = vpack.c.b16 %v5361, %v5354
    %v5859 = vpack.c.b16 %v5362, %v5355
    %v5860 = vpack.c.b16 %v5363, %v5356
    %v5861 = vpack.c.b16 %v5364, %v5357
    %v5862 = vpack.c.b16 %v5365, %v5358
    %v5863 = vpack.c.b16 %v5366, %v5359
    %v5864 = vpack.c.b16 %v5367, %v5360
    %v5865 = vpack.c.b16 %v5375, %v5368
    %v5866 = vpack.c.b16 %v5376, %v5369
    %v5867 = vpack.c.b16 %v5377, %v5370
    %v5868 = vpack.c.b16 %v5378, %v5371
    %v5869 = vpack.c.b16 %v5379, %v5372
    %v5870 = vpack.c.b16 %v5380, %v5373
    %v5871 = vpack.c.b16 %v5381, %v5374
    %v5872 = vpack.c.b16 %v5389, %v5382
    %v5873 = vpack.c.b16 %v5390, %v5383
    %v5874 = vpack.c.b16 %v5391, %v5384
    %v5875 = vpack.c.b16 %v5392, %v5385
    %v5876 = vpack.c.b16 %v5393, %v5386
    %v5877 = vpack.c.b16 %v5394, %v5387
    %v5878 = vpack.c.b16 %v5395, %v5388
    %v5879 = vpack.c.b16 %v5403, %v5396
    %v5880 = vpack.c.b16 %v5404, %v5397
    %v5881 = vpack.c.b16 %v5405, %v5398
    %v5882 = vpack.c.b16 %v5406, %v5399
    %v5883 = vpack.c.b16 %v5407, %v5400
    %v5884 = vpack.c.b16 %v5408, %v5401
    %v5885 = vpack.c.b16 %v5409, %v5402
    %v5886 = vpack.c.b16 %v5417, %v5410
    %v5887 = vpack.c.b16 %v5418, %v5411
    %v5888 = vpack.c.b16 %v5419, %v5412
    %v5889 = vpack.c.b16 %v5420, %v5413
    %v5890 = vpack.c.b16 %v5421, %v5414
    %v5891 = vpack.c.b16 %v5422, %v5415
    %v5892 = vpack.c.b16 %v5423, %v5416
    %v5893 = vpack.c.b16 %v5431, %v5424
    %v5894 = vpack.c.b16 %v5432, %v5425
    %v5895 = vpack.c.b16 %v5433, %v5426
    %v5896 = vpack.c.b16 %v5434, %v5427
    %v5897 = vpack.c.b16 %v5435, %v5428
    %v5898 = vpack.c.b16 %v5436, %v5429
    %v5899 = vpack.c.b16 %v5437, %v5430
    %v5900 = vpack.c.b16 %v5445, %v5438
    %v5901 = vpack.c.b16 %v5446, %v5439
    %v5902 = vpack.c.b16 %v5447, %v5440
    %v5903 = vpack.c.b16 %v5448, %v5441
    %v5904 = vpack.c.b16 %v5449, %v5442
    %v5905 = vpack.c.b16 %v5450, %v5443
    %v5906 = vpack.c.b16 %v5451, %v5444
    %v5907 = vpack.c.b16 %v5459, %v5452
    %v5908 = vpack.c.b16 %v5460, %v5453
    %v5909 = vpack.c.b16 %v5461, %v5454
    %v5910 = vpack.c.b16 %v5462, %v5455
    %v5911 = vpack.c.b16 %v5463, %v5456
    %v5912 = vpack.c.b16 %v5464, %v5457
    %v5913 = vpack.c.b16 %v5465, %v5458
    %6362 = vmatpush.bf16.msra.mxu0 %v5515
    %6363 = vmatpush.bf16.msra.mxu0 %v5508
    %6364 = vmatpush.bf16.msra.mxu0 %v5501
    %6365 = vmatpush.bf16.msra.mxu0 %v5494
    %6366 = vmatpush.bf16.msra.mxu0 %v5487
    %6367 = vmatpush.bf16.msra.mxu0 %v5480
    %6368 = vmatpush.bf16.msra.mxu0 %v5473
    %6369 = vmatpush.bf16.msra.mxu0 %v5466
    %6370 = vmatmul.bf16.gmra.mxu0 %v3522
    %v6371 = vpop.f32.mrf.mxu0
    %v6372 = vadd.f32 %v4044, %v6371
    %v6373 = vpop.f32.mrf.mxu0
    %6374 = vdwg.mxu0
    %6375 = vmatpush.bf16.msra.mxu0 %v5571
    %6376 = vmatpush.bf16.msra.mxu0 %v5564
    %6377 = vmatpush.bf16.msra.mxu0 %v5557
    %6378 = vmatpush.bf16.msra.mxu0 %v5550
    %6379 = vmatpush.bf16.msra.mxu0 %v5543
    %6380 = vmatpush.bf16.msra.mxu0 %v5536
    %6381 = vmatpush.bf16.msra.mxu0 %v5529
    %6382 = vmatpush.bf16.msra.mxu0 %v5522
    %6383 = vmatmul.bf16.gmra.mxu0 %v3523
    %v6384 = vpop.f32.mrf.mxu0
    %v6385 = vadd.f32 %v6372, %v6384
    %v6386 = vpop.f32.mrf.mxu0
    %6387 = vdwg.mxu0
    %6388 = vmatpush.bf16.msra.mxu0 %v5627
    %6389 = vmatpush.bf16.msra.mxu0 %v5620
    %6390 = vmatpush.bf16.msra.mxu0 %v5613
    %6391 = vmatpush.bf16.msra.mxu0 %v5606
    %6392 = vmatpush.bf16.msra.mxu0 %v5599
    %6393 = vmatpush.bf16.msra.mxu0 %v5592
    %6394 = vmatpush.bf16.msra.mxu0 %v5585
    %6395 = vmatpush.bf16.msra.mxu0 %v5578
    %6396 = vmatmul.bf16.gmra.mxu0 %v3524
    %v6397 = vpop.f32.mrf.mxu0
    %v6398 = vadd.f32 %v6385, %v6397
    %v6399 = vpop.f32.mrf.mxu0
    %6400 = vdwg.mxu0
    %6401 = vmatpush.bf16.msra.mxu0 %v5683
    %6402 = vmatpush.bf16.msra.mxu0 %v5676
    %6403 = vmatpush.bf16.msra.mxu0 %v5669
    %6404 = vmatpush.bf16.msra.mxu0 %v5662
    %6405 = vmatpush.bf16.msra.mxu0 %v5655
    %6406 = vmatpush.bf16.msra.mxu0 %v5648
    %6407 = vmatpush.bf16.msra.mxu0 %v5641
    %6408 = vmatpush.bf16.msra.mxu0 %v5634
    %6409 = vmatmul.bf16.gmra.mxu0 %v3525
    %v6410 = vpop.f32.mrf.mxu0
    %v6411 = vadd.f32 %v6398, %v6410
    %v6412 = vpop.f32.mrf.mxu0
    %6413 = vdwg.mxu0
    %6414 = vmatpush.bf16.msra.mxu0 %v5739
    %6415 = vmatpush.bf16.msra.mxu0 %v5732
    %6416 = vmatpush.bf16.msra.mxu0 %v5725
    %6417 = vmatpush.bf16.msra.mxu0 %v5718
    %6418 = vmatpush.bf16.msra.mxu0 %v5711
    %6419 = vmatpush.bf16.msra.mxu0 %v5704
    %6420 = vmatpush.bf16.msra.mxu0 %v5697
    %6421 = vmatpush.bf16.msra.mxu0 %v5690
    %6422 = vmatmul.bf16.gmra.mxu0 %v3526
    %v6423 = vpop.f32.mrf.mxu0
    %v6424 = vadd.f32 %v6411, %v6423
    %v6425 = vpop.f32.mrf.mxu0
    %6426 = vdwg.mxu0
    %6427 = vmatpush.bf16.msra.mxu0 %v5795
    %6428 = vmatpush.bf16.msra.mxu0 %v5788
    %6429 = vmatpush.bf16.msra.mxu0 %v5781
    %6430 = vmatpush.bf16.msra.mxu0 %v5774
    %6431 = vmatpush.bf16.msra.mxu0 %v5767
    %6432 = vmatpush.bf16.msra.mxu0 %v5760
    %6433 = vmatpush.bf16.msra.mxu0 %v5753
    %6434 = vmatpush.bf16.msra.mxu0 %v5746
    %6435 = vmatmul.bf16.gmra.mxu0 %v3527
    %v6436 = vpop.f32.mrf.mxu0
    %v6437 = vadd.f32 %v6424, %v6436
    %v6438 = vpop.f32.mrf.mxu0
    %6439 = vdwg.mxu0
    %6440 = vmatpush.bf16.msra.mxu0 %v5851
    %6441 = vmatpush.bf16.msra.mxu0 %v5844
    %6442 = vmatpush.bf16.msra.mxu0 %v5837
    %6443 = vmatpush.bf16.msra.mxu0 %v5830
    %6444 = vmatpush.bf16.msra.mxu0 %v5823
    %6445 = vmatpush.bf16.msra.mxu0 %v5816
    %6446 = vmatpush.bf16.msra.mxu0 %v5809
    %6447 = vmatpush.bf16.msra.mxu0 %v5802
    %6448 = vmatmul.bf16.gmra.mxu0 %v3528
    %v6449 = vpop.f32.mrf.mxu0
    %v6450 = vadd.f32 %v6437, %v6449
    %v6451 = vpop.f32.mrf.mxu0
    %6452 = vdwg.mxu0
    %6453 = vmatpush.bf16.msra.mxu0 %v5907
    %6454 = vmatpush.bf16.msra.mxu0 %v5900
    %6455 = vmatpush.bf16.msra.mxu0 %v5893
    %6456 = vmatpush.bf16.msra.mxu0 %v5886
    %6457 = vmatpush.bf16.msra.mxu0 %v5879
    %6458 = vmatpush.bf16.msra.mxu0 %v5872
    %6459 = vmatpush.bf16.msra.mxu0 %v5865
    %6460 = vmatpush.bf16.msra.mxu0 %v5858
    %6461 = vmatmul.bf16.gmra.mxu0 %v3529
    %v6462 = vpop.f32.mrf.mxu0
    %v6463 = vadd.f32 %v6450, %v6462
    %v6464 = vpop.f32.mrf.mxu0
    %6465 = vdwg.mxu0
    %6466 = vmatpush.bf16.msra.mxu0 %v5516
    %6467 = vmatpush.bf16.msra.mxu0 %v5509
    %6468 = vmatpush.bf16.msra.mxu0 %v5502
    %6469 = vmatpush.bf16.msra.mxu0 %v5495
    %6470 = vmatpush.bf16.msra.mxu0 %v5488
    %6471 = vmatpush.bf16.msra.mxu0 %v5481
    %6472 = vmatpush.bf16.msra.mxu0 %v5474
    %6473 = vmatpush.bf16.msra.mxu0 %v5467
    %6474 = vmatmul.bf16.gmra.mxu0 %v3522
    %v6475 = vpop.f32.mrf.mxu0
    %v6476 = vadd.f32 %v4045, %v6475
    %v6477 = vpop.f32.mrf.mxu0
    %6478 = vdwg.mxu0
    %6479 = vmatpush.bf16.msra.mxu0 %v5572
    %6480 = vmatpush.bf16.msra.mxu0 %v5565
    %6481 = vmatpush.bf16.msra.mxu0 %v5558
    %6482 = vmatpush.bf16.msra.mxu0 %v5551
    %6483 = vmatpush.bf16.msra.mxu0 %v5544
    %6484 = vmatpush.bf16.msra.mxu0 %v5537
    %6485 = vmatpush.bf16.msra.mxu0 %v5530
    %6486 = vmatpush.bf16.msra.mxu0 %v5523
    %6487 = vmatmul.bf16.gmra.mxu0 %v3523
    %v6488 = vpop.f32.mrf.mxu0
    %v6489 = vadd.f32 %v6476, %v6488
    %v6490 = vpop.f32.mrf.mxu0
    %6491 = vdwg.mxu0
    %6492 = vmatpush.bf16.msra.mxu0 %v5628
    %6493 = vmatpush.bf16.msra.mxu0 %v5621
    %6494 = vmatpush.bf16.msra.mxu0 %v5614
    %6495 = vmatpush.bf16.msra.mxu0 %v5607
    %6496 = vmatpush.bf16.msra.mxu0 %v5600
    %6497 = vmatpush.bf16.msra.mxu0 %v5593
    %6498 = vmatpush.bf16.msra.mxu0 %v5586
    %6499 = vmatpush.bf16.msra.mxu0 %v5579
    %6500 = vmatmul.bf16.gmra.mxu0 %v3524
    %v6501 = vpop.f32.mrf.mxu0
    %v6502 = vadd.f32 %v6489, %v6501
    %v6503 = vpop.f32.mrf.mxu0
    %6504 = vdwg.mxu0
    %6505 = vmatpush.bf16.msra.mxu0 %v5684
    %6506 = vmatpush.bf16.msra.mxu0 %v5677
    %6507 = vmatpush.bf16.msra.mxu0 %v5670
    %6508 = vmatpush.bf16.msra.mxu0 %v5663
    %6509 = vmatpush.bf16.msra.mxu0 %v5656
    %6510 = vmatpush.bf16.msra.mxu0 %v5649
    %6511 = vmatpush.bf16.msra.mxu0 %v5642
    %6512 = vmatpush.bf16.msra.mxu0 %v5635
    %6513 = vmatmul.bf16.gmra.mxu0 %v3525
    %v6514 = vpop.f32.mrf.mxu0
    %v6515 = vadd.f32 %v6502, %v6514
    %v6516 = vpop.f32.mrf.mxu0
    %6517 = vdwg.mxu0
    %6518 = vmatpush.bf16.msra.mxu0 %v5740
    %6519 = vmatpush.bf16.msra.mxu0 %v5733
    %6520 = vmatpush.bf16.msra.mxu0 %v5726
    %6521 = vmatpush.bf16.msra.mxu0 %v5719
    %6522 = vmatpush.bf16.msra.mxu0 %v5712
    %6523 = vmatpush.bf16.msra.mxu0 %v5705
    %6524 = vmatpush.bf16.msra.mxu0 %v5698
    %6525 = vmatpush.bf16.msra.mxu0 %v5691
    %6526 = vmatmul.bf16.gmra.mxu0 %v3526
    %v6527 = vpop.f32.mrf.mxu0
    %v6528 = vadd.f32 %v6515, %v6527
    %v6529 = vpop.f32.mrf.mxu0
    %6530 = vdwg.mxu0
    %6531 = vmatpush.bf16.msra.mxu0 %v5796
    %6532 = vmatpush.bf16.msra.mxu0 %v5789
    %6533 = vmatpush.bf16.msra.mxu0 %v5782
    %6534 = vmatpush.bf16.msra.mxu0 %v5775
    %6535 = vmatpush.bf16.msra.mxu0 %v5768
    %6536 = vmatpush.bf16.msra.mxu0 %v5761
    %6537 = vmatpush.bf16.msra.mxu0 %v5754
    %6538 = vmatpush.bf16.msra.mxu0 %v5747
    %6539 = vmatmul.bf16.gmra.mxu0 %v3527
    %v6540 = vpop.f32.mrf.mxu0
    %v6541 = vadd.f32 %v6528, %v6540
    %v6542 = vpop.f32.mrf.mxu0
    %6543 = vdwg.mxu0
    %6544 = vmatpush.bf16.msra.mxu0 %v5852
    %6545 = vmatpush.bf16.msra.mxu0 %v5845
    %6546 = vmatpush.bf16.msra.mxu0 %v5838
    %6547 = vmatpush.bf16.msra.mxu0 %v5831
    %6548 = vmatpush.bf16.msra.mxu0 %v5824
    %6549 = vmatpush.bf16.msra.mxu0 %v5817
    %6550 = vmatpush.bf16.msra.mxu0 %v5810
    %6551 = vmatpush.bf16.msra.mxu0 %v5803
    %6552 = vmatmul.bf16.gmra.mxu0 %v3528
    %v6553 = vpop.f32.mrf.mxu0
    %v6554 = vadd.f32 %v6541, %v6553
    %v6555 = vpop.f32.mrf.mxu0
    %6556 = vdwg.mxu0
    %6557 = vmatpush.bf16.msra.mxu0 %v5908
    %6558 = vmatpush.bf16.msra.mxu0 %v5901
    %6559 = vmatpush.bf16.msra.mxu0 %v5894
    %6560 = vmatpush.bf16.msra.mxu0 %v5887
    %6561 = vmatpush.bf16.msra.mxu0 %v5880
    %6562 = vmatpush.bf16.msra.mxu0 %v5873
    %6563 = vmatpush.bf16.msra.mxu0 %v5866
    %6564 = vmatpush.bf16.msra.mxu0 %v5859
    %6565 = vmatmul.bf16.gmra.mxu0 %v3529
    %v6566 = vpop.f32.mrf.mxu0
    %v6567 = vadd.f32 %v6554, %v6566
    %v6568 = vpop.f32.mrf.mxu0
    %6569 = vdwg.mxu0
    %6570 = vmatpush.bf16.msra.mxu0 %v5517
    %6571 = vmatpush.bf16.msra.mxu0 %v5510
    %6572 = vmatpush.bf16.msra.mxu0 %v5503
    %6573 = vmatpush.bf16.msra.mxu0 %v5496
    %6574 = vmatpush.bf16.msra.mxu0 %v5489
    %6575 = vmatpush.bf16.msra.mxu0 %v5482
    %6576 = vmatpush.bf16.msra.mxu0 %v5475
    %6577 = vmatpush.bf16.msra.mxu0 %v5468
    %6578 = vmatmul.bf16.gmra.mxu0 %v3522
    %v6579 = vpop.f32.mrf.mxu0
    %v6580 = vadd.f32 %v4046, %v6579
    %v6581 = vpop.f32.mrf.mxu0
    %6582 = vdwg.mxu0
    %6583 = vmatpush.bf16.msra.mxu0 %v5573
    %6584 = vmatpush.bf16.msra.mxu0 %v5566
    %6585 = vmatpush.bf16.msra.mxu0 %v5559
    %6586 = vmatpush.bf16.msra.mxu0 %v5552
    %6587 = vmatpush.bf16.msra.mxu0 %v5545
    %6588 = vmatpush.bf16.msra.mxu0 %v5538
    %6589 = vmatpush.bf16.msra.mxu0 %v5531
    %6590 = vmatpush.bf16.msra.mxu0 %v5524
    %6591 = vmatmul.bf16.gmra.mxu0 %v3523
    %v6592 = vpop.f32.mrf.mxu0
    %v6593 = vadd.f32 %v6580, %v6592
    %v6594 = vpop.f32.mrf.mxu0
    %6595 = vdwg.mxu0
    %6596 = vmatpush.bf16.msra.mxu0 %v5629
    %6597 = vmatpush.bf16.msra.mxu0 %v5622
    %6598 = vmatpush.bf16.msra.mxu0 %v5615
    %6599 = vmatpush.bf16.msra.mxu0 %v5608
    %6600 = vmatpush.bf16.msra.mxu0 %v5601
    %6601 = vmatpush.bf16.msra.mxu0 %v5594
    %6602 = vmatpush.bf16.msra.mxu0 %v5587
    %6603 = vmatpush.bf16.msra.mxu0 %v5580
    %6604 = vmatmul.bf16.gmra.mxu0 %v3524
    %v6605 = vpop.f32.mrf.mxu0
    %v6606 = vadd.f32 %v6593, %v6605
    %v6607 = vpop.f32.mrf.mxu0
    %6608 = vdwg.mxu0
    %6609 = vmatpush.bf16.msra.mxu0 %v5685
    %6610 = vmatpush.bf16.msra.mxu0 %v5678
    %6611 = vmatpush.bf16.msra.mxu0 %v5671
    %6612 = vmatpush.bf16.msra.mxu0 %v5664
    %6613 = vmatpush.bf16.msra.mxu0 %v5657
    %6614 = vmatpush.bf16.msra.mxu0 %v5650
    %6615 = vmatpush.bf16.msra.mxu0 %v5643
    %6616 = vmatpush.bf16.msra.mxu0 %v5636
    %6617 = vmatmul.bf16.gmra.mxu0 %v3525
    %v6618 = vpop.f32.mrf.mxu0
    %v6619 = vadd.f32 %v6606, %v6618
    %v6620 = vpop.f32.mrf.mxu0
    %6621 = vdwg.mxu0
    %6622 = vmatpush.bf16.msra.mxu0 %v5741
    %6623 = vmatpush.bf16.msra.mxu0 %v5734
    %6624 = vmatpush.bf16.msra.mxu0 %v5727
    %6625 = vmatpush.bf16.msra.mxu0 %v5720
    %6626 = vmatpush.bf16.msra.mxu0 %v5713
    %6627 = vmatpush.bf16.msra.mxu0 %v5706
    %6628 = vmatpush.bf16.msra.mxu0 %v5699
    %6629 = vmatpush.bf16.msra.mxu0 %v5692
    %6630 = vmatmul.bf16.gmra.mxu0 %v3526
    %v6631 = vpop.f32.mrf.mxu0
    %v6632 = vadd.f32 %v6619, %v6631
    %v6633 = vpop.f32.mrf.mxu0
    %6634 = vdwg.mxu0
    %6635 = vmatpush.bf16.msra.mxu0 %v5797
    %6636 = vmatpush.bf16.msra.mxu0 %v5790
    %6637 = vmatpush.bf16.msra.mxu0 %v5783
    %6638 = vmatpush.bf16.msra.mxu0 %v5776
    %6639 = vmatpush.bf16.msra.mxu0 %v5769
    %6640 = vmatpush.bf16.msra.mxu0 %v5762
    %6641 = vmatpush.bf16.msra.mxu0 %v5755
    %6642 = vmatpush.bf16.msra.mxu0 %v5748
    %6643 = vmatmul.bf16.gmra.mxu0 %v3527
    %v6644 = vpop.f32.mrf.mxu0
    %v6645 = vadd.f32 %v6632, %v6644
    %v6646 = vpop.f32.mrf.mxu0
    %6647 = vdwg.mxu0
    %6648 = vmatpush.bf16.msra.mxu0 %v5853
    %6649 = vmatpush.bf16.msra.mxu0 %v5846
    %6650 = vmatpush.bf16.msra.mxu0 %v5839
    %6651 = vmatpush.bf16.msra.mxu0 %v5832
    %6652 = vmatpush.bf16.msra.mxu0 %v5825
    %6653 = vmatpush.bf16.msra.mxu0 %v5818
    %6654 = vmatpush.bf16.msra.mxu0 %v5811
    %6655 = vmatpush.bf16.msra.mxu0 %v5804
    %6656 = vmatmul.bf16.gmra.mxu0 %v3528
    %v6657 = vpop.f32.mrf.mxu0
    %v6658 = vadd.f32 %v6645, %v6657
    %v6659 = vpop.f32.mrf.mxu0
    %6660 = vdwg.mxu0
    %6661 = vmatpush.bf16.msra.mxu0 %v5909
    %6662 = vmatpush.bf16.msra.mxu0 %v5902
    %6663 = vmatpush.bf16.msra.mxu0 %v5895
    %6664 = vmatpush.bf16.msra.mxu0 %v5888
    %6665 = vmatpush.bf16.msra.mxu0 %v5881
    %6666 = vmatpush.bf16.msra.mxu0 %v5874
    %6667 = vmatpush.bf16.msra.mxu0 %v5867
    %6668 = vmatpush.bf16.msra.mxu0 %v5860
    %6669 = vmatmul.bf16.gmra.mxu0 %v3529
    %v6670 = vpop.f32.mrf.mxu0
    %v6671 = vadd.f32 %v6658, %v6670
    %v6672 = vpop.f32.mrf.mxu0
    %6673 = vdwg.mxu0
    %6674 = vmatpush.bf16.msra.mxu0 %v5518
    %6675 = vmatpush.bf16.msra.mxu0 %v5511
    %6676 = vmatpush.bf16.msra.mxu0 %v5504
    %6677 = vmatpush.bf16.msra.mxu0 %v5497
    %6678 = vmatpush.bf16.msra.mxu0 %v5490
    %6679 = vmatpush.bf16.msra.mxu0 %v5483
    %6680 = vmatpush.bf16.msra.mxu0 %v5476
    %6681 = vmatpush.bf16.msra.mxu0 %v5469
    %6682 = vmatmul.bf16.gmra.mxu0 %v3522
    %v6683 = vpop.f32.mrf.mxu0
    %v6684 = vadd.f32 %v4047, %v6683
    %v6685 = vpop.f32.mrf.mxu0
    %6686 = vdwg.mxu0
    %6687 = vmatpush.bf16.msra.mxu0 %v5574
    %6688 = vmatpush.bf16.msra.mxu0 %v5567
    %6689 = vmatpush.bf16.msra.mxu0 %v5560
    %6690 = vmatpush.bf16.msra.mxu0 %v5553
    %6691 = vmatpush.bf16.msra.mxu0 %v5546
    %6692 = vmatpush.bf16.msra.mxu0 %v5539
    %6693 = vmatpush.bf16.msra.mxu0 %v5532
    %6694 = vmatpush.bf16.msra.mxu0 %v5525
    %6695 = vmatmul.bf16.gmra.mxu0 %v3523
    %v6696 = vpop.f32.mrf.mxu0
    %v6697 = vadd.f32 %v6684, %v6696
    %v6698 = vpop.f32.mrf.mxu0
    %6699 = vdwg.mxu0
    %6700 = vmatpush.bf16.msra.mxu0 %v5630
    %6701 = vmatpush.bf16.msra.mxu0 %v5623
    %6702 = vmatpush.bf16.msra.mxu0 %v5616
    %6703 = vmatpush.bf16.msra.mxu0 %v5609
    %6704 = vmatpush.bf16.msra.mxu0 %v5602
    %6705 = vmatpush.bf16.msra.mxu0 %v5595
    %6706 = vmatpush.bf16.msra.mxu0 %v5588
    %6707 = vmatpush.bf16.msra.mxu0 %v5581
    %6708 = vmatmul.bf16.gmra.mxu0 %v3524
    %v6709 = vpop.f32.mrf.mxu0
    %v6710 = vadd.f32 %v6697, %v6709
    %v6711 = vpop.f32.mrf.mxu0
    %6712 = vdwg.mxu0
    %6713 = vmatpush.bf16.msra.mxu0 %v5686
    %6714 = vmatpush.bf16.msra.mxu0 %v5679
    %6715 = vmatpush.bf16.msra.mxu0 %v5672
    %6716 = vmatpush.bf16.msra.mxu0 %v5665
    %6717 = vmatpush.bf16.msra.mxu0 %v5658
    %6718 = vmatpush.bf16.msra.mxu0 %v5651
    %6719 = vmatpush.bf16.msra.mxu0 %v5644
    %6720 = vmatpush.bf16.msra.mxu0 %v5637
    %6721 = vmatmul.bf16.gmra.mxu0 %v3525
    %v6722 = vpop.f32.mrf.mxu0
    %v6723 = vadd.f32 %v6710, %v6722
    %v6724 = vpop.f32.mrf.mxu0
    %6725 = vdwg.mxu0
    %6726 = vmatpush.bf16.msra.mxu0 %v5742
    %6727 = vmatpush.bf16.msra.mxu0 %v5735
    %6728 = vmatpush.bf16.msra.mxu0 %v5728
    %6729 = vmatpush.bf16.msra.mxu0 %v5721
    %6730 = vmatpush.bf16.msra.mxu0 %v5714
    %6731 = vmatpush.bf16.msra.mxu0 %v5707
    %6732 = vmatpush.bf16.msra.mxu0 %v5700
    %6733 = vmatpush.bf16.msra.mxu0 %v5693
    %6734 = vmatmul.bf16.gmra.mxu0 %v3526
    %v6735 = vpop.f32.mrf.mxu0
    %v6736 = vadd.f32 %v6723, %v6735
    %v6737 = vpop.f32.mrf.mxu0
    %6738 = vdwg.mxu0
    %6739 = vmatpush.bf16.msra.mxu0 %v5798
    %6740 = vmatpush.bf16.msra.mxu0 %v5791
    %6741 = vmatpush.bf16.msra.mxu0 %v5784
    %6742 = vmatpush.bf16.msra.mxu0 %v5777
    %6743 = vmatpush.bf16.msra.mxu0 %v5770
    %6744 = vmatpush.bf16.msra.mxu0 %v5763
    %6745 = vmatpush.bf16.msra.mxu0 %v5756
    %6746 = vmatpush.bf16.msra.mxu0 %v5749
    %6747 = vmatmul.bf16.gmra.mxu0 %v3527
    %v6748 = vpop.f32.mrf.mxu0
    %v6749 = vadd.f32 %v6736, %v6748
    %v6750 = vpop.f32.mrf.mxu0
    %6751 = vdwg.mxu0
    %6752 = vmatpush.bf16.msra.mxu0 %v5854
    %6753 = vmatpush.bf16.msra.mxu0 %v5847
    %6754 = vmatpush.bf16.msra.mxu0 %v5840
    %6755 = vmatpush.bf16.msra.mxu0 %v5833
    %6756 = vmatpush.bf16.msra.mxu0 %v5826
    %6757 = vmatpush.bf16.msra.mxu0 %v5819
    %6758 = vmatpush.bf16.msra.mxu0 %v5812
    %6759 = vmatpush.bf16.msra.mxu0 %v5805
    %6760 = vmatmul.bf16.gmra.mxu0 %v3528
    %v6761 = vpop.f32.mrf.mxu0
    %v6762 = vadd.f32 %v6749, %v6761
    %v6763 = vpop.f32.mrf.mxu0
    %6764 = vdwg.mxu0
    %6765 = vmatpush.bf16.msra.mxu0 %v5910
    %6766 = vmatpush.bf16.msra.mxu0 %v5903
    %6767 = vmatpush.bf16.msra.mxu0 %v5896
    %6768 = vmatpush.bf16.msra.mxu0 %v5889
    %6769 = vmatpush.bf16.msra.mxu0 %v5882
    %6770 = vmatpush.bf16.msra.mxu0 %v5875
    %6771 = vmatpush.bf16.msra.mxu0 %v5868
    %6772 = vmatpush.bf16.msra.mxu0 %v5861
    %6773 = vmatmul.bf16.gmra.mxu0 %v3529
    %v6774 = vpop.f32.mrf.mxu0
    %v6775 = vadd.f32 %v6762, %v6774
    %v6776 = vpop.f32.mrf.mxu0
    %6777 = vdwg.mxu0
    %6778 = vmatpush.bf16.msra.mxu0 %v5519
    %6779 = vmatpush.bf16.msra.mxu0 %v5512
    %6780 = vmatpush.bf16.msra.mxu0 %v5505
    %6781 = vmatpush.bf16.msra.mxu0 %v5498
    %6782 = vmatpush.bf16.msra.mxu0 %v5491
    %6783 = vmatpush.bf16.msra.mxu0 %v5484
    %6784 = vmatpush.bf16.msra.mxu0 %v5477
    %6785 = vmatpush.bf16.msra.mxu0 %v5470
    %6786 = vmatmul.bf16.gmra.mxu0 %v3522
    %v6787 = vpop.f32.mrf.mxu0
    %v6788 = vadd.f32 %v4048, %v6787
    %v6789 = vpop.f32.mrf.mxu0
    %6790 = vdwg.mxu0
    %6791 = vmatpush.bf16.msra.mxu0 %v5575
    %6792 = vmatpush.bf16.msra.mxu0 %v5568
    %6793 = vmatpush.bf16.msra.mxu0 %v5561
    %6794 = vmatpush.bf16.msra.mxu0 %v5554
    %6795 = vmatpush.bf16.msra.mxu0 %v5547
    %6796 = vmatpush.bf16.msra.mxu0 %v5540
    %6797 = vmatpush.bf16.msra.mxu0 %v5533
    %6798 = vmatpush.bf16.msra.mxu0 %v5526
    %6799 = vmatmul.bf16.gmra.mxu0 %v3523
    %v6800 = vpop.f32.mrf.mxu0
    %v6801 = vadd.f32 %v6788, %v6800
    %v6802 = vpop.f32.mrf.mxu0
    %6803 = vdwg.mxu0
    %6804 = vmatpush.bf16.msra.mxu0 %v5631
    %6805 = vmatpush.bf16.msra.mxu0 %v5624
    %6806 = vmatpush.bf16.msra.mxu0 %v5617
    %6807 = vmatpush.bf16.msra.mxu0 %v5610
    %6808 = vmatpush.bf16.msra.mxu0 %v5603
    %6809 = vmatpush.bf16.msra.mxu0 %v5596
    %6810 = vmatpush.bf16.msra.mxu0 %v5589
    %6811 = vmatpush.bf16.msra.mxu0 %v5582
    %6812 = vmatmul.bf16.gmra.mxu0 %v3524
    %v6813 = vpop.f32.mrf.mxu0
    %v6814 = vadd.f32 %v6801, %v6813
    %v6815 = vpop.f32.mrf.mxu0
    %6816 = vdwg.mxu0
    %6817 = vmatpush.bf16.msra.mxu0 %v5687
    %6818 = vmatpush.bf16.msra.mxu0 %v5680
    %6819 = vmatpush.bf16.msra.mxu0 %v5673
    %6820 = vmatpush.bf16.msra.mxu0 %v5666
    %6821 = vmatpush.bf16.msra.mxu0 %v5659
    %6822 = vmatpush.bf16.msra.mxu0 %v5652
    %6823 = vmatpush.bf16.msra.mxu0 %v5645
    %6824 = vmatpush.bf16.msra.mxu0 %v5638
    %6825 = vmatmul.bf16.gmra.mxu0 %v3525
    %v6826 = vpop.f32.mrf.mxu0
    %v6827 = vadd.f32 %v6814, %v6826
    %v6828 = vpop.f32.mrf.mxu0
    %6829 = vdwg.mxu0
    %6830 = vmatpush.bf16.msra.mxu0 %v5743
    %6831 = vmatpush.bf16.msra.mxu0 %v5736
    %6832 = vmatpush.bf16.msra.mxu0 %v5729
    %6833 = vmatpush.bf16.msra.mxu0 %v5722
    %6834 = vmatpush.bf16.msra.mxu0 %v5715
    %6835 = vmatpush.bf16.msra.mxu0 %v5708
    %6836 = vmatpush.bf16.msra.mxu0 %v5701
    %6837 = vmatpush.bf16.msra.mxu0 %v5694
    %6838 = vmatmul.bf16.gmra.mxu0 %v3526
    %v6839 = vpop.f32.mrf.mxu0
    %v6840 = vadd.f32 %v6827, %v6839
    %v6841 = vpop.f32.mrf.mxu0
    %6842 = vdwg.mxu0
    %6843 = vmatpush.bf16.msra.mxu0 %v5799
    %6844 = vmatpush.bf16.msra.mxu0 %v5792
    %6845 = vmatpush.bf16.msra.mxu0 %v5785
    %6846 = vmatpush.bf16.msra.mxu0 %v5778
    %6847 = vmatpush.bf16.msra.mxu0 %v5771
    %6848 = vmatpush.bf16.msra.mxu0 %v5764
    %6849 = vmatpush.bf16.msra.mxu0 %v5757
    %6850 = vmatpush.bf16.msra.mxu0 %v5750
    %6851 = vmatmul.bf16.gmra.mxu0 %v3527
    %v6852 = vpop.f32.mrf.mxu0
    %v6853 = vadd.f32 %v6840, %v6852
    %v6854 = vpop.f32.mrf.mxu0
    %6855 = vdwg.mxu0
    %6856 = vmatpush.bf16.msra.mxu0 %v5855
    %6857 = vmatpush.bf16.msra.mxu0 %v5848
    %6858 = vmatpush.bf16.msra.mxu0 %v5841
    %6859 = vmatpush.bf16.msra.mxu0 %v5834
    %6860 = vmatpush.bf16.msra.mxu0 %v5827
    %6861 = vmatpush.bf16.msra.mxu0 %v5820
    %6862 = vmatpush.bf16.msra.mxu0 %v5813
    %6863 = vmatpush.bf16.msra.mxu0 %v5806
    %6864 = vmatmul.bf16.gmra.mxu0 %v3528
    %v6865 = vpop.f32.mrf.mxu0
    %v6866 = vadd.f32 %v6853, %v6865
    %v6867 = vpop.f32.mrf.mxu0
    %6868 = vdwg.mxu0
    %6869 = vmatpush.bf16.msra.mxu0 %v5911
    %6870 = vmatpush.bf16.msra.mxu0 %v5904
    %6871 = vmatpush.bf16.msra.mxu0 %v5897
    %6872 = vmatpush.bf16.msra.mxu0 %v5890
    %6873 = vmatpush.bf16.msra.mxu0 %v5883
    %6874 = vmatpush.bf16.msra.mxu0 %v5876
    %6875 = vmatpush.bf16.msra.mxu0 %v5869
    %6876 = vmatpush.bf16.msra.mxu0 %v5862
    %6877 = vmatmul.bf16.gmra.mxu0 %v3529
    %v6878 = vpop.f32.mrf.mxu0
    %v6879 = vadd.f32 %v6866, %v6878
    %v6880 = vpop.f32.mrf.mxu0
    %6881 = vdwg.mxu0
    %6882 = vmatpush.bf16.msra.mxu0 %v5520
    %6883 = vmatpush.bf16.msra.mxu0 %v5513
    %6884 = vmatpush.bf16.msra.mxu0 %v5506
    %6885 = vmatpush.bf16.msra.mxu0 %v5499
    %6886 = vmatpush.bf16.msra.mxu0 %v5492
    %6887 = vmatpush.bf16.msra.mxu0 %v5485
    %6888 = vmatpush.bf16.msra.mxu0 %v5478
    %6889 = vmatpush.bf16.msra.mxu0 %v5471
    %6890 = vmatmul.bf16.gmra.mxu0 %v3522
    %v6891 = vpop.f32.mrf.mxu0
    %v6892 = vadd.f32 %v4049, %v6891
    %v6893 = vpop.f32.mrf.mxu0
    %6894 = vdwg.mxu0
    %6895 = vmatpush.bf16.msra.mxu0 %v5576
    %6896 = vmatpush.bf16.msra.mxu0 %v5569
    %6897 = vmatpush.bf16.msra.mxu0 %v5562
    %6898 = vmatpush.bf16.msra.mxu0 %v5555
    %6899 = vmatpush.bf16.msra.mxu0 %v5548
    %6900 = vmatpush.bf16.msra.mxu0 %v5541
    %6901 = vmatpush.bf16.msra.mxu0 %v5534
    %6902 = vmatpush.bf16.msra.mxu0 %v5527
    %6903 = vmatmul.bf16.gmra.mxu0 %v3523
    %v6904 = vpop.f32.mrf.mxu0
    %v6905 = vadd.f32 %v6892, %v6904
    %v6906 = vpop.f32.mrf.mxu0
    %6907 = vdwg.mxu0
    %6908 = vmatpush.bf16.msra.mxu0 %v5632
    %6909 = vmatpush.bf16.msra.mxu0 %v5625
    %6910 = vmatpush.bf16.msra.mxu0 %v5618
    %6911 = vmatpush.bf16.msra.mxu0 %v5611
    %6912 = vmatpush.bf16.msra.mxu0 %v5604
    %6913 = vmatpush.bf16.msra.mxu0 %v5597
    %6914 = vmatpush.bf16.msra.mxu0 %v5590
    %6915 = vmatpush.bf16.msra.mxu0 %v5583
    %6916 = vmatmul.bf16.gmra.mxu0 %v3524
    %v6917 = vpop.f32.mrf.mxu0
    %v6918 = vadd.f32 %v6905, %v6917
    %v6919 = vpop.f32.mrf.mxu0
    %6920 = vdwg.mxu0
    %6921 = vmatpush.bf16.msra.mxu0 %v5688
    %6922 = vmatpush.bf16.msra.mxu0 %v5681
    %6923 = vmatpush.bf16.msra.mxu0 %v5674
    %6924 = vmatpush.bf16.msra.mxu0 %v5667
    %6925 = vmatpush.bf16.msra.mxu0 %v5660
    %6926 = vmatpush.bf16.msra.mxu0 %v5653
    %6927 = vmatpush.bf16.msra.mxu0 %v5646
    %6928 = vmatpush.bf16.msra.mxu0 %v5639
    %6929 = vmatmul.bf16.gmra.mxu0 %v3525
    %v6930 = vpop.f32.mrf.mxu0
    %v6931 = vadd.f32 %v6918, %v6930
    %v6932 = vpop.f32.mrf.mxu0
    %6933 = vdwg.mxu0
    %6934 = vmatpush.bf16.msra.mxu0 %v5744
    %6935 = vmatpush.bf16.msra.mxu0 %v5737
    %6936 = vmatpush.bf16.msra.mxu0 %v5730
    %6937 = vmatpush.bf16.msra.mxu0 %v5723
    %6938 = vmatpush.bf16.msra.mxu0 %v5716
    %6939 = vmatpush.bf16.msra.mxu0 %v5709
    %6940 = vmatpush.bf16.msra.mxu0 %v5702
    %6941 = vmatpush.bf16.msra.mxu0 %v5695
    %6942 = vmatmul.bf16.gmra.mxu0 %v3526
    %v6943 = vpop.f32.mrf.mxu0
    %v6944 = vadd.f32 %v6931, %v6943
    %v6945 = vpop.f32.mrf.mxu0
    %6946 = vdwg.mxu0
    %6947 = vmatpush.bf16.msra.mxu0 %v5800
    %6948 = vmatpush.bf16.msra.mxu0 %v5793
    %6949 = vmatpush.bf16.msra.mxu0 %v5786
    %6950 = vmatpush.bf16.msra.mxu0 %v5779
    %6951 = vmatpush.bf16.msra.mxu0 %v5772
    %6952 = vmatpush.bf16.msra.mxu0 %v5765
    %6953 = vmatpush.bf16.msra.mxu0 %v5758
    %6954 = vmatpush.bf16.msra.mxu0 %v5751
    %6955 = vmatmul.bf16.gmra.mxu0 %v3527
    %v6956 = vpop.f32.mrf.mxu0
    %v6957 = vadd.f32 %v6944, %v6956
    %v6958 = vpop.f32.mrf.mxu0
    %6959 = vdwg.mxu0
    %6960 = vmatpush.bf16.msra.mxu0 %v5856
    %6961 = vmatpush.bf16.msra.mxu0 %v5849
    %6962 = vmatpush.bf16.msra.mxu0 %v5842
    %6963 = vmatpush.bf16.msra.mxu0 %v5835
    %6964 = vmatpush.bf16.msra.mxu0 %v5828
    %6965 = vmatpush.bf16.msra.mxu0 %v5821
    %6966 = vmatpush.bf16.msra.mxu0 %v5814
    %6967 = vmatpush.bf16.msra.mxu0 %v5807
    %6968 = vmatmul.bf16.gmra.mxu0 %v3528
    %v6969 = vpop.f32.mrf.mxu0
    %v6970 = vadd.f32 %v6957, %v6969
    %v6971 = vpop.f32.mrf.mxu0
    %6972 = vdwg.mxu0
    %6973 = vmatpush.bf16.msra.mxu0 %v5912
    %6974 = vmatpush.bf16.msra.mxu0 %v5905
    %6975 = vmatpush.bf16.msra.mxu0 %v5898
    %6976 = vmatpush.bf16.msra.mxu0 %v5891
    %6977 = vmatpush.bf16.msra.mxu0 %v5884
    %6978 = vmatpush.bf16.msra.mxu0 %v5877
    %6979 = vmatpush.bf16.msra.mxu0 %v5870
    %6980 = vmatpush.bf16.msra.mxu0 %v5863
    %6981 = vmatmul.bf16.gmra.mxu0 %v3529
    %v6982 = vpop.f32.mrf.mxu0
    %v6983 = vadd.f32 %v6970, %v6982
    %v6984 = vpop.f32.mrf.mxu0
    %6985 = vdwg.mxu0
    %6986 = vmatpush.bf16.msra.mxu0 %v5521
    %6987 = vmatpush.bf16.msra.mxu0 %v5514
    %6988 = vmatpush.bf16.msra.mxu0 %v5507
    %6989 = vmatpush.bf16.msra.mxu0 %v5500
    %6990 = vmatpush.bf16.msra.mxu0 %v5493
    %6991 = vmatpush.bf16.msra.mxu0 %v5486
    %6992 = vmatpush.bf16.msra.mxu0 %v5479
    %6993 = vmatpush.bf16.msra.mxu0 %v5472
    %6994 = vmatmul.bf16.gmra.mxu0 %v3522
    %v6995 = vpop.f32.mrf.mxu0
    %v6996 = vadd.f32 %v4050, %v6995
    %v6997 = vpop.f32.mrf.mxu0
    %6998 = vdwg.mxu0
    %6999 = vmatpush.bf16.msra.mxu0 %v5577
    %7000 = vmatpush.bf16.msra.mxu0 %v5570
    %7001 = vmatpush.bf16.msra.mxu0 %v5563
    %7002 = vmatpush.bf16.msra.mxu0 %v5556
    %7003 = vmatpush.bf16.msra.mxu0 %v5549
    %7004 = vmatpush.bf16.msra.mxu0 %v5542
    %7005 = vmatpush.bf16.msra.mxu0 %v5535
    %7006 = vmatpush.bf16.msra.mxu0 %v5528
    %7007 = vmatmul.bf16.gmra.mxu0 %v3523
    %v7008 = vpop.f32.mrf.mxu0
    %v7009 = vadd.f32 %v6996, %v7008
    %v7010 = vpop.f32.mrf.mxu0
    %7011 = vdwg.mxu0
    %7012 = vmatpush.bf16.msra.mxu0 %v5633
    %7013 = vmatpush.bf16.msra.mxu0 %v5626
    %7014 = vmatpush.bf16.msra.mxu0 %v5619
    %7015 = vmatpush.bf16.msra.mxu0 %v5612
    %7016 = vmatpush.bf16.msra.mxu0 %v5605
    %7017 = vmatpush.bf16.msra.mxu0 %v5598
    %7018 = vmatpush.bf16.msra.mxu0 %v5591
    %7019 = vmatpush.bf16.msra.mxu0 %v5584
    %7020 = vmatmul.bf16.gmra.mxu0 %v3524
    %v7021 = vpop.f32.mrf.mxu0
    %v7022 = vadd.f32 %v7009, %v7021
    %v7023 = vpop.f32.mrf.mxu0
    %7024 = vdwg.mxu0
    %7025 = vmatpush.bf16.msra.mxu0 %v5689
    %7026 = vmatpush.bf16.msra.mxu0 %v5682
    %7027 = vmatpush.bf16.msra.mxu0 %v5675
    %7028 = vmatpush.bf16.msra.mxu0 %v5668
    %7029 = vmatpush.bf16.msra.mxu0 %v5661
    %7030 = vmatpush.bf16.msra.mxu0 %v5654
    %7031 = vmatpush.bf16.msra.mxu0 %v5647
    %7032 = vmatpush.bf16.msra.mxu0 %v5640
    %7033 = vmatmul.bf16.gmra.mxu0 %v3525
    %v7034 = vpop.f32.mrf.mxu0
    %v7035 = vadd.f32 %v7022, %v7034
    %v7036 = vpop.f32.mrf.mxu0
    %7037 = vdwg.mxu0
    %7038 = vmatpush.bf16.msra.mxu0 %v5745
    %7039 = vmatpush.bf16.msra.mxu0 %v5738
    %7040 = vmatpush.bf16.msra.mxu0 %v5731
    %7041 = vmatpush.bf16.msra.mxu0 %v5724
    %7042 = vmatpush.bf16.msra.mxu0 %v5717
    %7043 = vmatpush.bf16.msra.mxu0 %v5710
    %7044 = vmatpush.bf16.msra.mxu0 %v5703
    %7045 = vmatpush.bf16.msra.mxu0 %v5696
    %7046 = vmatmul.bf16.gmra.mxu0 %v3526
    %v7047 = vpop.f32.mrf.mxu0
    %v7048 = vadd.f32 %v7035, %v7047
    %v7049 = vpop.f32.mrf.mxu0
    %7050 = vdwg.mxu0
    %7051 = vmatpush.bf16.msra.mxu0 %v5801
    %7052 = vmatpush.bf16.msra.mxu0 %v5794
    %7053 = vmatpush.bf16.msra.mxu0 %v5787
    %7054 = vmatpush.bf16.msra.mxu0 %v5780
    %7055 = vmatpush.bf16.msra.mxu0 %v5773
    %7056 = vmatpush.bf16.msra.mxu0 %v5766
    %7057 = vmatpush.bf16.msra.mxu0 %v5759
    %7058 = vmatpush.bf16.msra.mxu0 %v5752
    %7059 = vmatmul.bf16.gmra.mxu0 %v3527
    %v7060 = vpop.f32.mrf.mxu0
    %v7061 = vadd.f32 %v7048, %v7060
    %v7062 = vpop.f32.mrf.mxu0
    %7063 = vdwg.mxu0
    %7064 = vmatpush.bf16.msra.mxu0 %v5857
    %7065 = vmatpush.bf16.msra.mxu0 %v5850
    %7066 = vmatpush.bf16.msra.mxu0 %v5843
    %7067 = vmatpush.bf16.msra.mxu0 %v5836
    %7068 = vmatpush.bf16.msra.mxu0 %v5829
    %7069 = vmatpush.bf16.msra.mxu0 %v5822
    %7070 = vmatpush.bf16.msra.mxu0 %v5815
    %7071 = vmatpush.bf16.msra.mxu0 %v5808
    %7072 = vmatmul.bf16.gmra.mxu0 %v3528
    %v7073 = vpop.f32.mrf.mxu0
    %v7074 = vadd.f32 %v7061, %v7073
    %v7075 = vpop.f32.mrf.mxu0
    %7076 = vdwg.mxu0
    %7077 = vmatpush.bf16.msra.mxu0 %v5913
    %7078 = vmatpush.bf16.msra.mxu0 %v5906
    %7079 = vmatpush.bf16.msra.mxu0 %v5899
    %7080 = vmatpush.bf16.msra.mxu0 %v5892
    %7081 = vmatpush.bf16.msra.mxu0 %v5885
    %7082 = vmatpush.bf16.msra.mxu0 %v5878
    %7083 = vmatpush.bf16.msra.mxu0 %v5871
    %7084 = vmatpush.bf16.msra.mxu0 %v5864
    %7085 = vmatmul.bf16.gmra.mxu0 %v3529
    %v7086 = vpop.f32.mrf.mxu0
    %v7087 = vadd.f32 %v7074, %v7086
    %v7088 = vpop.f32.mrf.mxu0
    %7089 = vdwg.mxu0
    %v7090 = vtanh.pop %v6463
    %v7091 = vtanh.pop %v6567
    %v7092 = vtanh.pop %v6671
    %v7093 = vtanh.pop %v6775
    %v7094 = vtanh.pop %v6879
    %v7095 = vtanh.pop %v6983
    %v7096 = vtanh.pop %v7087
    %7097 = vst [vmem:[#allocation29] sm:$0xff] %v7090
    %7098 = vst [vmem:[#allocation29 + $0x8] sm:$0xff] %v7091
    %7099 = vst [vmem:[#allocation29 + $0x10] sm:$0xff] %v7092
    %7100 = vst [vmem:[#allocation29 + $0x18] sm:$0xff] %v7093
    %7101 = vst [vmem:[#allocation29 + $0x20] sm:$0xff] %v7094
    %7102 = vst [vmem:[#allocation29 + $0x28] sm:$0xff] %v7095
    %7103 = vst [vmem:[#allocation29 + $0x30] sm:$0xff] %v7096
    // Predicated region
    $region138: #{tpu_custom_call.1} parent=1 // pred_check
      _
    $region139: #{tpu_custom_call.1} parent=1 // pred_check_branch
      %7105 = sbr.rel (0) target = $region141
    $region140: #{tpu_custom_call.1} parent=1 // pred_region
      %7107 = vsyncadd [#allocation4], 0
      %s7109 = sshll.u32 [#allocation29], 4
      %s7110 = int_to_ptr.vmem [resolvable:$true] %s7109
      %s7111 = sshll.u32 %s17, 4
      %s7112 = int_to_ptr.hbm [resolvable:$true] %s7111
      %7114 = dma.vmem_to_hbm [thread:$0]  %s7110, 896, %s7112, [#allocation4]
    $region141: #{tpu_custom_call.1} parent=1 // pred_fallthru
      _
    // Predicated region
    $region142: #{tpu_custom_call.1} parent=1 // pred_check
      _
    $region143: #{tpu_custom_call.1} parent=1 // pred_check_branch
      %7116 = sbr.rel (0) target = $region145
    $region144: #{tpu_custom_call.1} parent=1 // pred_region
      %7118 = dma.done [#allocation4], 896
    $region145: #{tpu_custom_call.1} parent=1 // pred_fallthru
      _
    %7119 = vsyncpa [#allocation3], 1
    %7120 = vsyncpa [#allocation6], 1
    %7121 = vsyncpa [#allocation9], 1
    %7122 = vsyncpa [#allocation12], 1
    %7123 = vsyncpa [#allocation15], 1
    %7124 = vsyncpa [#allocation18], 1
    %7125 = vsyncpa [#allocation21], 1
    %7126 = vsyncpa [#allocation24], 1
    %7127 = vsyncpa [#allocation27], 1
    %7128 = vsyncpa [#allocation4], 1

</llo_original>
